<compile_context>
chip_gen: v6e
topology: v6e:2x2x1
jax: 0.10.0
libtpu: 0.0.40
codegen_flags: <defaults>
</compile_context>

<pallas_src>
import functools
import numpy as np
import jax
import jax.numpy as jnp
from jax.experimental import pallas as pl
from jax.experimental.pallas import tpu as pltpu

_BN_EPS = 1e-5


# ---------------------------------------------------------------------------
# padded-slab frame helpers
#   frame: ((N+2), Hp, Wp, C) flattened to ((N+2)*Hp*Wp, C); one all-zero image slot on
#   each side; image n's zero-padded (Hp, Wp) block sits at slot n+1 with real data at
#   local [1:H+1, 1:W+1].  Both conv input and conv output live in this same frame, so
#   convs chain without leaving VMEM->HBM->pad->HBM round trips between them.
# ---------------------------------------------------------------------------
def _to_slab(x):
    N, H, W, C = x.shape
    xp = jnp.pad(x, ((1, 1), (1, 1), (1, 1), (0, 0)))          # single host pad
    return xp.reshape((N + 2) * (H + 2) * (W + 2), C)


def _from_slab(slab, N, H, W):
    C = slab.shape[-1]
    Hp, Wp = H + 2, W + 2
    return slab.reshape(N + 2, Hp, Wp, C)[1:N + 1, 1:H + 1, 1:W + 1, :]


@functools.lru_cache(maxsize=None)
def _valid_mask(N, H, W):
    """(N*Hp*Wp, 1) f32 mask: 1.0 on real pixel rows, 0.0 on halo rows (static)."""
    Hp, Wp = H + 2, W + 2
    yy = (np.arange(Hp) >= 1) & (np.arange(Hp) <= H)
    xx = (np.arange(Wp) >= 1) & (np.arange(Wp) <= W)
    v = np.broadcast_to((yy[:, None] & xx[None, :])[None], (N, Hp, Wp))
    return jnp.asarray(v.reshape(N * Hp * Wp, 1).astype(np.float32))


# ---------------------------------------------------------------------------
# fused 3x3 conv (pad=1) + BatchNorm(train) + ReLU, multi-input (skip concat never
# materialized).  No tap grid: all 9 taps accumulate in one invocation; grid axis is a
# 'parallel' Co-tile split (BN stats are per-channel, so the split is exact).
# ---------------------------------------------------------------------------
def _conv3x3_bn_relu_kernel(*refs, n_in, cis, stacks, Mout, pad_off, Wp, cnt):
    valid_ref = refs[0]
    x_refs = refs[1:1 + n_in]
    w_refs = refs[1 + n_in:1 + 2 * n_in]
    b_ref, gam_ref, bet_ref, o_ref = refs[1 + 2 * n_in:1 + 2 * n_in + 4]
    scratch = refs[1 + 2 * n_in + 4:]
    scr = scratch[0] if scratch else None

    cot = o_ref.shape[1]
    acc = jnp.zeros((Mout, cot), jnp.float32)
    for i in range(n_in):
        ci = cis[i]
        if stacks[i]:
            # stack the 3 dx taps of one kernel row along K (deeper MXU contraction);
            # the staging copy also performs the f32 -> bf16 cast for free.
            for dy in range(3):
                for dx in range(3):
                    start = pad_off + (dy - 1) * Wp + (dx - 1)
                    scr[:, dx * ci:(dx + 1) * ci] = (
                        x_refs[i][pl.ds(start, Mout), :].astype(jnp.bfloat16))
                acc = acc + jnp.dot(scr[:, :3 * ci], w_refs[i][dy],
                                    preferred_element_type=jnp.float32)
        else:
            for dy in range(3):
                for dx in range(3):
                    start = pad_off + (dy - 1) * Wp + (dx - 1)
                    win = x_refs[i][pl.ds(start, Mout), :].astype(jnp.bfloat16)
                    acc = acc + jnp.dot(win, w_refs[i][3 * dy + dx],
                                        preferred_element_type=jnp.float32)

    # bias + train-mode BatchNorm (biased variance over the N*H*W valid rows) + ReLU.
    valid = valid_ref[...]                                    # (Mout, 1)
    y = acc + b_ref[...]
    inv_cnt = 1.0 / cnt
    mean = jnp.sum(y * valid, axis=0, keepdims=True) * inv_cnt
    diff = (y - mean) * valid
    var = jnp.sum(diff * diff, axis=0, keepdims=True) * inv_cnt
    yn = (y - mean) * jax.lax.rsqrt(var + _BN_EPS)
    out = jnp.maximum(yn * gam_ref[...] + bet_ref[...], 0.0) * valid   # halo rows -> 0

    # keep the output in the padded-slab frame: zero the (small) slack the *next* conv's
    # shifted windows can touch outside the middle region, then write the middle once.
    slack = 2 * Wp
    zrow = jnp.zeros((slack, cot), o_ref.dtype)
    o_ref[pl.ds(pad_off - slack, slack), :] = zrow
    o_ref[pl.ds(pad_off + Mout, slack), :] = zrow
    o_ref[pl.ds(pad_off, Mout), :] = out


def conv3x3_bn_relu_slab(slabs, geom, p):
    """slabs: list of ((N+2)*Hp*Wp, Ci_i) f32 slabs (channel-concat order);
    returns the output slab ((N+2)*Hp*Wp, Co) f32 in the same frame."""
    N, H, W = geom
    Hp, Wp = H + 2, W + 2
    HpWp = Hp * Wp
    Mout = N * HpWp
    pad_off = HpWp
    M_slab = (N + 2) * HpWp
    w9, b, gamma, beta = p['w'], p['b'], p['gamma'], p['beta']
    Co = int(w9.shape[-1])
    cis = tuple(int(s.shape[-1]) for s in slabs)
    assert sum(cis) == w9.shape[1]
    for s in slabs:
        assert s.shape[0] == M_slab

    # dx-stack where three separate taps would underfill the MXU contraction depth.
    stacks = tuple(ci in (64, 128) for ci in cis)

    w_parts = []
    off = 0
    for ci, stk in zip(cis, stacks):
        wp_ = w9[:, off:off + ci, :]
        off += ci
        wp_ = wp_.reshape(3, 3 * ci, Co) if stk else wp_
        w_parts.append(wp_.astype(jnp.bfloat16))               # bf16 weights for the MXU

    co_tile = 128 if Co >= 256 else Co                          # 'parallel' split (megacore)
    n_tiles = Co // co_tile
    valid = _valid_mask(N, H, W)

    in_specs = [pl.BlockSpec((Mout, 1), lambda j: (0, 0))]
    in_specs += [pl.BlockSpec((M_slab, ci), lambda j: (0, 0)) for ci in cis]
    for ci, stk in zip(cis, stacks):
        if stk:
            in_specs.append(pl.BlockSpec((3, 3 * ci, co_tile), lambda j: (0, 0, j)))
        else:
            in_specs.append(pl.BlockSpec((9, ci, co_tile), lambda j: (0, 0, j)))
    in_specs += [pl.BlockSpec((1, co_tile), lambda j: (0, j))] * 3

    scratch_shapes = []
    if any(stacks):
        max_ci = max(ci for ci, stk in zip(cis, stacks) if stk)
        scratch_shapes.append(pltpu.VMEM((Mout, 3 * max_ci), jnp.bfloat16))  # shared staging

    kernel = functools.partial(
        _conv3x3_bn_relu_kernel, n_in=len(slabs), cis=cis, stacks=stacks,
        Mout=Mout, pad_off=pad_off, Wp=Wp, cnt=float(N * H * W))

    return pl.pallas_call(
        kernel,
        grid=(n_tiles,),
        in_specs=in_specs,
        out_specs=pl.BlockSpec((M_slab, co_tile), lambda j: (0, j)),
        out_shape=jax.ShapeDtypeStruct((M_slab, Co), jnp.float32),
        scratch_shapes=scratch_shapes,
        compiler_params=pltpu.CompilerParams(
            dimension_semantics=("parallel",),
            vmem_limit_bytes=48 * 1024 * 1024),
    )(valid, *slabs, *w_parts, b, gamma, beta)


def conv3x3_bn_relu(xs, w9, b, gamma, beta):
    """Standalone (un-chained) conv: NHWC in -> NHWC out.  Used by the self-checks."""
    xs = tuple(xs)
    N, H, W = xs[0].shape[:3]
    p = dict(w=w9, b=b, gamma=gamma, beta=beta)
    s = conv3x3_bn_relu_slab([_to_slab(x) for x in xs], (N, H, W), p)
    return _from_slab(s, N, H, W)


# ---------------------------------------------------------------------------
# MaxPool2d(2): free host reshape to (N*H2, 2, W2, 2, C); the kernel maxes the two
# sublane-adjacent size-2 window axes (no 128-lane splits).
# ---------------------------------------------------------------------------
def _maxpool_kernel(x_ref, o_ref):
    v = jnp.maximum(x_ref[:, 0, :, :, :], x_ref[:, 1, :, :, :])   # (H2, W2, 2, C)
    o_ref[...] = jnp.maximum(v[:, :, 0, :], v[:, :, 1, :])


def maxpool2x2(x):
    N, H, W, C = x.shape
    H2, W2 = H // 2, W // 2
    xr = x.reshape(N * H2, 2, W2, 2, C)                 # pure metadata reshape
    out = pl.pallas_call(
        _maxpool_kernel,
        grid=(N,),
        in_specs=[pl.BlockSpec((H2, 2, W2, 2, C), lambda n: (n, 0, 0, 0, 0))],
        out_specs=pl.BlockSpec((H2, W2, C), lambda n: (n, 0, 0)),
        out_shape=jax.ShapeDtypeStruct((N * H2, W2, C), x.dtype),
        compiler_params=pltpu.CompilerParams(dimension_semantics=("parallel",)),
    )(xr)
    return out.reshape(N, H2, W2, C)


# ---------------------------------------------------------------------------
# nn.Upsample(scale_factor=2, mode='bilinear', align_corners=True):
# one MXU matmul per image with a host-precomputed kron(A_h, A_w) interpolation matrix
# (lane-dense output; no per-row / per-column sublane-at-a-time stores).
# ---------------------------------------------------------------------------
def _interp_weights(n_in, n_out):
    if n_in == 1:
        return [(0, 0, 1.0, 0.0)] * n_out
    scale = (n_in - 1) / (n_out - 1)
    out = []
    for i in range(n_out):
        s = i * scale
        i0 = min(int(np.floor(s)), n_in - 2)
        w1 = s - i0
        out.append((i0, i0 + 1, float(1.0 - w1), float(w1)))
    return out


def _interp_matrix(n_in, n_out):
    A = np.zeros((n_out, n_in), np.float32)
    for i, (i0, i1, w0, w1) in enumerate(_interp_weights(n_in, n_out)):
        A[i, i0] += w0
        A[i, i1] += w1
    return A


def _upsample_kernel(a_ref, x_ref, o_ref):
    o_ref[0] = jnp.dot(a_ref[...], x_ref[0],
                       preferred_element_type=jnp.float32).astype(o_ref.dtype)


def upsample_bilinear_2x(x):
    N, H, W, C = x.shape
    H2, W2 = 2 * H, 2 * W
    A2 = np.kron(_interp_matrix(H, H2), _interp_matrix(W, W2))   # (H2*W2, H*W), static
    a2 = jnp.asarray(A2, dtype=x.dtype)
    xf = x.reshape(N, H * W, C)
    out = pl.pallas_call(
        _upsample_kernel,
        grid=(N,),
        in_specs=[pl.BlockSpec((H2 * W2, H * W), lambda n: (0, 0)),
                  pl.BlockSpec((1, H * W, C), lambda n: (n, 0, 0))],
        out_specs=pl.BlockSpec((1, H2 * W2, C), lambda n: (n, 0, 0)),
        out_shape=jax.ShapeDtypeStruct((N, H2 * W2, C), x.dtype),
        compiler_params=pltpu.CompilerParams(dimension_semantics=("parallel",)),
    )(a2, xf)
    return out.reshape(N, H2, W2, C)


# ---------------------------------------------------------------------------
# outconv: 1x1 conv = single matmul with batch folded into M
# ---------------------------------------------------------------------------
def _conv1x1_kernel(x_ref, w_ref, b_ref, o_ref):
    o_ref[...] = jnp.dot(x_ref[...], w_ref[...],
                         preferred_element_type=jnp.float32) + b_ref[...]


def conv1x1(x, w, b):
    N, H, W, Ci = x.shape
    Co = w.shape[-1]
    xf = x.reshape(N * H * W, Ci)
    out = pl.pallas_call(
        _conv1x1_kernel,
        grid=(1,),
        in_specs=[pl.BlockSpec((N * H * W, Ci), lambda i: (0, 0)),
                  pl.BlockSpec((Ci, Co), lambda i: (0, 0)),
                  pl.BlockSpec((1, Co), lambda i: (0, 0))],
        out_specs=pl.BlockSpec((N * H * W, Co), lambda i: (0, 0)),
        out_shape=jax.ShapeDtypeStruct((N * H * W, Co), jnp.float32),
    )(xf, w, b)
    return out.reshape(N, H, W, Co)


# ---------------------------------------------------------------------------
# module blocks (inconv / down / up / outconv) and parameter init
# ---------------------------------------------------------------------------
def double_conv(xs, params):
    p1, p2 = params
    xs = tuple(xs)
    N, H, W = xs[0].shape[:3]
    slabs = [_to_slab(x) for x in xs]
    s = conv3x3_bn_relu_slab(slabs, (N, H, W), p1)
    s = conv3x3_bn_relu_slab([s], (N, H, W), p2)     # chained: no un-pad / re-pad round trip
    return _from_slab(s, N, H, W)


def down_block(x, params):
    return double_conv((maxpool2x2(x),), params)


def up_block(x1, x2, params):
    x1u = upsample_bilinear_2x(x1)
    dh = x2.shape[1] - x1u.shape[1]
    dw = x2.shape[2] - x1u.shape[2]
    if dh or dw:  # F.pad(x1, ...) ; always 0 for power-of-two sizes
        x1u = jnp.pad(x1u, ((0, 0), (dh // 2, dh - dh // 2),
                            (dw // 2, dw - dw // 2), (0, 0)))
    # torch.cat([x2, x1], dim=1) is NOT materialized: the conv takes both inputs
    return double_conv((x2, x1u), params)


def _conv_params(key, ci, co):
    k1, k2, k3, k4 = jax.random.split(key, 4)
    w = jax.random.normal(k1, (3, 3, ci, co), jnp.float32) * (1.0 / np.sqrt(9.0 * ci))
    return dict(
        w=w.reshape(9, ci, co),
        b=jax.random.normal(k2, (1, co), jnp.float32) * 0.01,
        gamma=1.0 + 0.1 * jax.random.normal(k3, (1, co), jnp.float32),
        beta=0.05 * jax.random.normal(k4, (1, co), jnp.float32),
    )


def _double_conv_params(key, ci, co):
    k1, k2 = jax.random.split(key)
    return (_conv_params(k1, ci, co), _conv_params(k2, co, co))


def init_params(key, n_channels, n_classes):
    ks = jax.random.split(key, 11)
    p = {
        'inc':     _double_conv_params(ks[0], n_channels, 64),
        'down1_1': _double_conv_params(ks[1], 64, 128),
        'down1_2': _double_conv_params(ks[2], 128, 256),
        'down1_3': _double_conv_params(ks[3], 256, 512),
        'down1_4': _double_conv_params(ks[4], 512, 512),
        'up1':     _double_conv_params(ks[5], 1024, 256),
        'up2':     _double_conv_params(ks[6], 512, 128),
        'up3':     _double_conv_params(ks[7], 256, 64),
        'up4':     _double_conv_params(ks[8], 128, 64),
        'down1_5': _double_conv_params(ks[9], 512, 64),
    }
    kw, kb = jax.random.split(ks[10])
    p['outc'] = dict(w=jax.random.normal(kw, (64, n_classes), jnp.float32) / 8.0,
                     b=jax.random.normal(kb, (1, n_classes), jnp.float32) * 0.01)
    return p


def butd_stream_forward(params, x_nchw):
    x = jnp.transpose(x_nchw, (0, 2, 3, 1)).astype(jnp.float32)   # NCHW -> NHWC
    x1 = double_conv((x,), params['inc'])
    x2 = down_block(x1, params['down1_1'])
    x3 = down_block(x2, params['down1_2'])
    x4 = down_block(x3, params['down1_3'])
    x5 = down_block(x4, params['down1_4'])
    u = up_block(x5, x4, params['up1'])
    u = up_block(u, x3, params['up2'])
    u = up_block(u, x2, params['up3'])
    u = up_block(u, x1, params['up4'])
    interp = conv1x1(u, params['outc']['w'], params['outc']['b'])
    interp_out = jnp.transpose(interp, (0, 3, 1, 2))              # back to NCHW, f32
    x6 = down_block(x5, params['down1_5'])                        # (N, 1, 1, 64)
    # torch.flatten(x6, 1) in NCHW order (C major, then H, W)
    featuresBU = jnp.transpose(x6, (0, 3, 1, 2)).reshape(x6.shape[0], -1)
    return interp_out, featuresBU.astype(jnp.float32)


# ---------------------------------------------------------------------------
# lightweight self-checks against pure-JAX references
# (tolerances are loose because the conv matmuls now run bf16 on the MXU)
# ---------------------------------------------------------------------------
def _ref_conv_bn_relu(xs, w9, b, gamma, beta):
    x = jnp.concatenate(xs, axis=-1) if len(xs) > 1 else xs[0]
    ci = x.shape[-1]
    co = w9.shape[-1]
    w = w9.reshape(3, 3, ci, co)
    y = jax.lax.conv_general_dilated(
        x, w, (1, 1), 'SAME', dimension_numbers=('NHWC', 'HWIO', 'NHWC'),
        precision=jax.lax.Precision.HIGHEST) + b.reshape(1, 1, 1, co)
    mean = y.mean(axis=(0, 1, 2), keepdims=True)
    var = jnp.mean((y - mean) ** 2, axis=(0, 1, 2), keepdims=True)
    yn = (y - mean) * jax.lax.rsqrt(var + _BN_EPS)
    return jnp.maximum(yn * gamma.reshape(1, 1, 1, co) + beta.reshape(1, 1, 1, co), 0.0)


def _self_check():
    ck = jax.random.split(jax.random.PRNGKey(1), 10)
    # dual-input (skip concat) + dx-stacked path (Ci = 64 + 64)
    a = jax.random.normal(ck[0], (2, 8, 8, 64), jnp.float32)
    b = jax.random.normal(ck[1], (2, 8, 8, 64), jnp.float32)
    p = _conv_params(ck[2], 128, 32)
    got = conv3x3_bn_relu((a, b), p['w'], p['b'], p['gamma'], p['beta'])
    want = _ref_conv_bn_relu((a, b), p['w'], p['b'], p['gamma'], p['beta'])
    assert jnp.allclose(got, want, atol=1e-1, rtol=1e-1), float(jnp.max(jnp.abs(got - want)))
    # single-input, unstacked tiny-channel path (Ci = 3)
    a3 = jax.random.normal(ck[3], (2, 8, 8, 3), jnp.float32)
    p3 = _conv_params(ck[4], 3, 16)
    got = conv3x3_bn_relu((a3,), p3['w'], p3['b'], p3['gamma'], p3['beta'])
    want = _ref_conv_bn_relu((a3,), p3['w'], p3['b'], p3['gamma'], p3['beta'])
    assert jnp.allclose(got, want, atol=1e-1, rtol=1e-1), float(jnp.max(jnp.abs(got - want)))
    # unstacked deep-channel path + Co 'parallel' tile split (Ci = 256 -> Co = 256)
    a256 = jax.random.normal(ck[5], (2, 4, 4, 256), jnp.float32)
    p256 = _conv_params(ck[6], 256, 256)
    got = conv3x3_bn_relu((a256,), p256['w'], p256['b'], p256['gamma'], p256['beta'])
    want = _ref_conv_bn_relu((a256,), p256['w'], p256['b'], p256['gamma'], p256['beta'])
    assert jnp.allclose(got, want, atol=1e-1, rtol=1e-1), float(jnp.max(jnp.abs(got - want)))
    # chained double_conv (the padded-frame hand-off between the two convs)
    pd = (_conv_params(ck[7], 128, 32), _conv_params(ck[8], 32, 32))
    got = double_conv((a, b), pd)
    y1 = _ref_conv_bn_relu((a, b), pd[0]['w'], pd[0]['b'], pd[0]['gamma'], pd[0]['beta'])
    want = _ref_conv_bn_relu((y1,), pd[1]['w'], pd[1]['b'], pd[1]['gamma'], pd[1]['beta'])
    assert jnp.allclose(got, want, atol=2e-1, rtol=2e-1), float(jnp.max(jnp.abs(got - want)))
    # maxpool
    mp = jax.random.normal(ck[9], (2, 8, 8, 64), jnp.float32)
    got = maxpool2x2(mp)
    want = mp.reshape(2, 4, 2, 4, 2, 64).max(axis=(2, 4))
    assert jnp.allclose(got, want), "maxpool mismatch"
    # bilinear 2x upsample (align_corners=True)
    us = jax.random.normal(ck[0], (2, 4, 4, 64), jnp.float32)
    got = upsample_bilinear_2x(us)
    A = jnp.asarray(_interp_matrix(4, 8))
    want = jnp.einsum('ih,nhwc->niwc', A, us, precision=jax.lax.Precision.HIGHEST)
    want = jnp.einsum('jw,niwc->nijc', A, want, precision=jax.lax.Precision.HIGHEST)
    assert jnp.allclose(got, want, atol=1e-4, rtol=1e-4), float(jnp.max(jnp.abs(got - want)))


if __name__ == "__main__":
    _self_check()

    key = jax.random.PRNGKey(0)
    pkey, xkey = jax.random.split(key)
    n_channels, n_classes = 3, 4
    batch, spatial = 2, 32          # spatial >= 32 so down1_5's MaxPool2d(2) is valid

    params = init_params(pkey, n_channels, n_classes)
    x = jax.random.normal(xkey, (batch, n_channels, spatial, spatial), jnp.float32)

    fwd = jax.jit(butd_stream_forward)
    interp_out, featuresBU = fwd(params, x)
    jax.block_until_ready((interp_out, featuresBU))

    assert interp_out.shape == (batch, n_classes, spatial, spatial)
    assert featuresBU.shape == (batch, 64)
    assert bool(jnp.all(jnp.isfinite(interp_out))) and bool(jnp.all(jnp.isfinite(featuresBU)))
    print("KERNEL_OK")
</pallas_src>

<mosaic_0001>
module attributes {stable_mosaic.version = 11 : i64} {
  func.func @_conv3x3_bn_relu_kernel(%arg0: i32, %arg1: memref<200x1xf32, #tpu.memory_space<vmem>>, %arg2: memref<400x64xf32, #tpu.memory_space<vmem>>, %arg3: memref<400x64xf32, #tpu.memory_space<vmem>>, %arg4: memref<3x192x32xbf16, #tpu.memory_space<vmem>>, %arg5: memref<3x192x32xbf16, #tpu.memory_space<vmem>>, %arg6: memref<1x32xf32, #tpu.memory_space<vmem>>, %arg7: memref<1x32xf32, #tpu.memory_space<vmem>>, %arg8: memref<1x32xf32, #tpu.memory_space<vmem>>, %arg9: memref<400x32xf32, #tpu.memory_space<vmem>>, %arg10: memref<200x192xbf16, #tpu.memory_space<vmem>>) attributes {dimension_semantics = [#tpu.dimension_semantics<parallel>], iteration_bounds = array<i64: 1>, scalar_prefetch = 0 : i64, scratch_operands = 1 : i64, tpu.core_type = #tpu.core_type<tc>, window_params = [{pipeline_mode = #tpu.pipeline_mode<synchronous>, transform_indices = @transform_0, window_bounds = array<i64: 200, 1>}, {pipeline_mode = #tpu.pipeline_mode<synchronous>, transform_indices = @transform_1, window_bounds = array<i64: 400, 64>}, {pipeline_mode = #tpu.pipeline_mode<synchronous>, transform_indices = @transform_2, window_bounds = array<i64: 400, 64>}, {transform_indices = @transform_3, window_bounds = array<i64: 3, 192, 32>}, {transform_indices = @transform_4, window_bounds = array<i64: 3, 192, 32>}, {transform_indices = @transform_5, window_bounds = array<i64: 1, 32>}, {transform_indices = @transform_6, window_bounds = array<i64: 1, 32>}, {transform_indices = @transform_7, window_bounds = array<i64: 1, 32>}, {transform_indices = @transform_8, window_bounds = array<i64: 400, 32>}]} {
    %cst = arith.constant 0.000000e+00 : f32
    %0 = vector.broadcast %cst : f32 to vector<200x32xf32>
    %c89 = arith.constant 89 : index
    %c0 = arith.constant 0 : index
    %1 = vector.load %arg2[%c89, %c0] : memref<400x64xf32, #tpu.memory_space<vmem>>, vector<200x64xf32>
    %2 = arith.truncf %1 : vector<200x64xf32> to vector<200x64xbf16>
    %c0_0 = arith.constant 0 : index
    %c0_1 = arith.constant 0 : index
    %3 = vector.load %arg10[%c0_0, %c0_1] : memref<200x192xbf16, #tpu.memory_space<vmem>>, vector<200x64xbf16>
    tpu.vector_store %arg10[%c0_0, %c0_1], %2 {strides = array<i32>} : memref<200x192xbf16, #tpu.memory_space<vmem>>, vector<200x64xbf16>,
    %c90 = arith.constant 90 : index
    %c0_2 = arith.constant 0 : index
    %4 = vector.load %arg2[%c90, %c0_2] : memref<400x64xf32, #tpu.memory_space<vmem>>, vector<200x64xf32>
    %5 = arith.truncf %4 : vector<200x64xf32> to vector<200x64xbf16>
    %c0_3 = arith.constant 0 : index
    %c64 = arith.constant 64 : index
    %6 = vector.load %arg10[%c0_3, %c64] : memref<200x192xbf16, #tpu.memory_space<vmem>>, vector<200x64xbf16>
    tpu.vector_store %arg10[%c0_3, %c64], %5 {strides = array<i32>} : memref<200x192xbf16, #tpu.memory_space<vmem>>, vector<200x64xbf16>,
    %c91 = arith.constant 91 : index
    %c0_4 = arith.constant 0 : index
    %7 = vector.load %arg2[%c91, %c0_4] : memref<400x64xf32, #tpu.memory_space<vmem>>, vector<200x64xf32>
    %8 = arith.truncf %7 : vector<200x64xf32> to vector<200x64xbf16>
    %c0_5 = arith.constant 0 : index
    %c128 = arith.constant 128 : index
    %9 = vector.load %arg10[%c0_5, %c128] : memref<200x192xbf16, #tpu.memory_space<vmem>>, vector<200x64xbf16>
    tpu.vector_store %arg10[%c0_5, %c128], %8 {strides = array<i32>} : memref<200x192xbf16, #tpu.memory_space<vmem>>, vector<200x64xbf16>,
    %c0_6 = arith.constant 0 : index
    %c0_7 = arith.constant 0 : index
    %10 = vector.load %arg10[%c0_6, %c0_7] : memref<200x192xbf16, #tpu.memory_space<vmem>>, vector<200x192xbf16>
    %c0_8 = arith.constant 0 : index
    %c0_9 = arith.constant 0 : index
    %c0_10 = arith.constant 0 : index
    %11 = vector.load %arg4[%c0_8, %c0_9, %c0_10] : memref<3x192x32xbf16, #tpu.memory_space<vmem>>, vector<1x192x32xbf16>
    %12 = vector.shape_cast %11 : vector<1x192x32xbf16> to vector<192x32xbf16>
    %cst_11 = arith.constant dense<0.000000e+00> : vector<200x32xf32>
    %13 = tpu.matmul %10, %12, %cst_11 {dimension_numbers = #tpu.dot_dimension_numbers<[1], [0], [0], [1], [0, 0, 1, 1], [], []>} : vector<200x192xbf16>, vector<192x32xbf16>, vector<200x32xf32> -> vector<200x32xf32>
    %14 = arith.addf %0, %13 : vector<200x32xf32>
    %c99 = arith.constant 99 : index
    %c0_12 = arith.constant 0 : index
    %15 = vector.load %arg2[%c99, %c0_12] : memref<400x64xf32, #tpu.memory_space<vmem>>, vector<200x64xf32>
    %16 = arith.truncf %15 : vector<200x64xf32> to vector<200x64xbf16>
    %c0_13 = arith.constant 0 : index
    %c0_14 = arith.constant 0 : index
    %17 = vector.load %arg10[%c0_13, %c0_14] : memref<200x192xbf16, #tpu.memory_space<vmem>>, vector<200x64xbf16>
    tpu.vector_store %arg10[%c0_13, %c0_14], %16 {strides = array<i32>} : memref<200x192xbf16, #tpu.memory_space<vmem>>, vector<200x64xbf16>,
    %c100 = arith.constant 100 : index
    %c0_15 = arith.constant 0 : index
    %18 = vector.load %arg2[%c100, %c0_15] : memref<400x64xf32, #tpu.memory_space<vmem>>, vector<200x64xf32>
    %19 = arith.truncf %18 : vector<200x64xf32> to vector<200x64xbf16>
    %c0_16 = arith.constant 0 : index
    %c64_17 = arith.constant 64 : index
    %20 = vector.load %arg10[%c0_16, %c64_17] : memref<200x192xbf16, #tpu.memory_space<vmem>>, vector<200x64xbf16>
    tpu.vector_store %arg10[%c0_16, %c64_17], %19 {strides = array<i32>} : memref<200x192xbf16, #tpu.memory_space<vmem>>, vector<200x64xbf16>,
    %c101 = arith.constant 101 : index
    %c0_18 = arith.constant 0 : index
    %21 = vector.load %arg2[%c101, %c0_18] : memref<400x64xf32, #tpu.memory_space<vmem>>, vector<200x64xf32>
    %22 = arith.truncf %21 : vector<200x64xf32> to vector<200x64xbf16>
    %c0_19 = arith.constant 0 : index
    %c128_20 = arith.constant 128 : index
    %23 = vector.load %arg10[%c0_19, %c128_20] : memref<200x192xbf16, #tpu.memory_space<vmem>>, vector<200x64xbf16>
    tpu.vector_store %arg10[%c0_19, %c128_20], %22 {strides = array<i32>} : memref<200x192xbf16, #tpu.memory_space<vmem>>, vector<200x64xbf16>,
    %c0_21 = arith.constant 0 : index
    %c0_22 = arith.constant 0 : index
    %24 = vector.load %arg10[%c0_21, %c0_22] : memref<200x192xbf16, #tpu.memory_space<vmem>>, vector<200x192xbf16>
    %c1 = arith.constant 1 : index
    %c0_23 = arith.constant 0 : index
    %c0_24 = arith.constant 0 : index
    %25 = vector.load %arg4[%c1, %c0_23, %c0_24] : memref<3x192x32xbf16, #tpu.memory_space<vmem>>, vector<1x192x32xbf16>
    %26 = vector.shape_cast %25 : vector<1x192x32xbf16> to vector<192x32xbf16>
    %cst_25 = arith.constant dense<0.000000e+00> : vector<200x32xf32>
    %27 = tpu.matmul %24, %26, %cst_25 {dimension_numbers = #tpu.dot_dimension_numbers<[1], [0], [0], [1], [0, 0, 1, 1], [], []>} : vector<200x192xbf16>, vector<192x32xbf16>, vector<200x32xf32> -> vector<200x32xf32>
    %28 = arith.addf %14, %27 : vector<200x32xf32>
    %c109 = arith.constant 109 : index
    %c0_26 = arith.constant 0 : index
    %29 = vector.load %arg2[%c109, %c0_26] : memref<400x64xf32, #tpu.memory_space<vmem>>, vector<200x64xf32>
    %30 = arith.truncf %29 : vector<200x64xf32> to vector<200x64xbf16>
    %c0_27 = arith.constant 0 : index
    %c0_28 = arith.constant 0 : index
    %31 = vector.load %arg10[%c0_27, %c0_28] : memref<200x192xbf16, #tpu.memory_space<vmem>>, vector<200x64xbf16>
    tpu.vector_store %arg10[%c0_27, %c0_28], %30 {strides = array<i32>} : memref<200x192xbf16, #tpu.memory_space<vmem>>, vector<200x64xbf16>,
    %c110 = arith.constant 110 : index
    %c0_29 = arith.constant 0 : index
    %32 = vector.load %arg2[%c110, %c0_29] : memref<400x64xf32, #tpu.memory_space<vmem>>, vector<200x64xf32>
    %33 = arith.truncf %32 : vector<200x64xf32> to vector<200x64xbf16>
    %c0_30 = arith.constant 0 : index
    %c64_31 = arith.constant 64 : index
    %34 = vector.load %arg10[%c0_30, %c64_31] : memref<200x192xbf16, #tpu.memory_space<vmem>>, vector<200x64xbf16>
    tpu.vector_store %arg10[%c0_30, %c64_31], %33 {strides = array<i32>} : memref<200x192xbf16, #tpu.memory_space<vmem>>, vector<200x64xbf16>,
    %c111 = arith.constant 111 : index
    %c0_32 = arith.constant 0 : index
    %35 = vector.load %arg2[%c111, %c0_32] : memref<400x64xf32, #tpu.memory_space<vmem>>, vector<200x64xf32>
    %36 = arith.truncf %35 : vector<200x64xf32> to vector<200x64xbf16>
    %c0_33 = arith.constant 0 : index
    %c128_34 = arith.constant 128 : index
    %37 = vector.load %arg10[%c0_33, %c128_34] : memref<200x192xbf16, #tpu.memory_space<vmem>>, vector<200x64xbf16>
    tpu.vector_store %arg10[%c0_33, %c128_34], %36 {strides = array<i32>} : memref<200x192xbf16, #tpu.memory_space<vmem>>, vector<200x64xbf16>,
    %c0_35 = arith.constant 0 : index
    %c0_36 = arith.constant 0 : index
    %38 = vector.load %arg10[%c0_35, %c0_36] : memref<200x192xbf16, #tpu.memory_space<vmem>>, vector<200x192xbf16>
    %c2 = arith.constant 2 : index
    %c0_37 = arith.constant 0 : index
    %c0_38 = arith.constant 0 : index
    %39 = vector.load %arg4[%c2, %c0_37, %c0_38] : memref<3x192x32xbf16, #tpu.memory_space<vmem>>, vector<1x192x32xbf16>
    %40 = vector.shape_cast %39 : vector<1x192x32xbf16> to vector<192x32xbf16>
    %cst_39 = arith.constant dense<0.000000e+00> : vector<200x32xf32>
    %41 = tpu.matmul %38, %40, %cst_39 {dimension_numbers = #tpu.dot_dimension_numbers<[1], [0], [0], [1], [0, 0, 1, 1], [], []>} : vector<200x192xbf16>, vector<192x32xbf16>, vector<200x32xf32> -> vector<200x32xf32>
    %42 = arith.addf %28, %41 : vector<200x32xf32>
    %c89_40 = arith.constant 89 : index
    %c0_41 = arith.constant 0 : index
    %43 = vector.load %arg3[%c89_40, %c0_41] : memref<400x64xf32, #tpu.memory_space<vmem>>, vector<200x64xf32>
    %44 = arith.truncf %43 : vector<200x64xf32> to vector<200x64xbf16>
    %c0_42 = arith.constant 0 : index
    %c0_43 = arith.constant 0 : index
    %45 = vector.load %arg10[%c0_42, %c0_43] : memref<200x192xbf16, #tpu.memory_space<vmem>>, vector<200x64xbf16>
    tpu.vector_store %arg10[%c0_42, %c0_43], %44 {strides = array<i32>} : memref<200x192xbf16, #tpu.memory_space<vmem>>, vector<200x64xbf16>,
    %c90_44 = arith.constant 90 : index
    %c0_45 = arith.constant 0 : index
    %46 = vector.load %arg3[%c90_44, %c0_45] : memref<400x64xf32, #tpu.memory_space<vmem>>, vector<200x64xf32>
    %47 = arith.truncf %46 : vector<200x64xf32> to vector<200x64xbf16>
    %c0_46 = arith.constant 0 : index
    %c64_47 = arith.constant 64 : index
    %48 = vector.load %arg10[%c0_46, %c64_47] : memref<200x192xbf16, #tpu.memory_space<vmem>>, vector<200x64xbf16>
    tpu.vector_store %arg10[%c0_46, %c64_47], %47 {strides = array<i32>} : memref<200x192xbf16, #tpu.memory_space<vmem>>, vector<200x64xbf16>,
    %c91_48 = arith.constant 91 : index
    %c0_49 = arith.constant 0 : index
    %49 = vector.load %arg3[%c91_48, %c0_49] : memref<400x64xf32, #tpu.memory_space<vmem>>, vector<200x64xf32>
    %50 = arith.truncf %49 : vector<200x64xf32> to vector<200x64xbf16>
    %c0_50 = arith.constant 0 : index
    %c128_51 = arith.constant 128 : index
    %51 = vector.load %arg10[%c0_50, %c128_51] : memref<200x192xbf16, #tpu.memory_space<vmem>>, vector<200x64xbf16>
    tpu.vector_store %arg10[%c0_50, %c128_51], %50 {strides = array<i32>} : memref<200x192xbf16, #tpu.memory_space<vmem>>, vector<200x64xbf16>,
    %c0_52 = arith.constant 0 : index
    %c0_53 = arith.constant 0 : index
    %52 = vector.load %arg10[%c0_52, %c0_53] : memref<200x192xbf16, #tpu.memory_space<vmem>>, vector<200x192xbf16>
    %c0_54 = arith.constant 0 : index
    %c0_55 = arith.constant 0 : index
    %c0_56 = arith.constant 0 : index
    %53 = vector.load %arg5[%c0_54, %c0_55, %c0_56] : memref<3x192x32xbf16, #tpu.memory_space<vmem>>, vector<1x192x32xbf16>
    %54 = vector.shape_cast %53 : vector<1x192x32xbf16> to vector<192x32xbf16>
    %cst_57 = arith.constant dense<0.000000e+00> : vector<200x32xf32>
    %55 = tpu.matmul %52, %54, %cst_57 {dimension_numbers = #tpu.dot_dimension_numbers<[1], [0], [0], [1], [0, 0, 1, 1], [], []>} : vector<200x192xbf16>, vector<192x32xbf16>, vector<200x32xf32> -> vector<200x32xf32>
    %56 = arith.addf %42, %55 : vector<200x32xf32>
    %c99_58 = arith.constant 99 : index
    %c0_59 = arith.constant 0 : index
    %57 = vector.load %arg3[%c99_58, %c0_59] : memref<400x64xf32, #tpu.memory_space<vmem>>, vector<200x64xf32>
    %58 = arith.truncf %57 : vector<200x64xf32> to vector<200x64xbf16>
    %c0_60 = arith.constant 0 : index
    %c0_61 = arith.constant 0 : index
    %59 = vector.load %arg10[%c0_60, %c0_61] : memref<200x192xbf16, #tpu.memory_space<vmem>>, vector<200x64xbf16>
    tpu.vector_store %arg10[%c0_60, %c0_61], %58 {strides = array<i32>} : memref<200x192xbf16, #tpu.memory_space<vmem>>, vector<200x64xbf16>,
    %c100_62 = arith.constant 100 : index
    %c0_63 = arith.constant 0 : index
    %60 = vector.load %arg3[%c100_62, %c0_63] : memref<400x64xf32, #tpu.memory_space<vmem>>, vector<200x64xf32>
    %61 = arith.truncf %60 : vector<200x64xf32> to vector<200x64xbf16>
    %c0_64 = arith.constant 0 : index
    %c64_65 = arith.constant 64 : index
    %62 = vector.load %arg10[%c0_64, %c64_65] : memref<200x192xbf16, #tpu.memory_space<vmem>>, vector<200x64xbf16>
    tpu.vector_store %arg10[%c0_64, %c64_65], %61 {strides = array<i32>} : memref<200x192xbf16, #tpu.memory_space<vmem>>, vector<200x64xbf16>,
    %c101_66 = arith.constant 101 : index
    %c0_67 = arith.constant 0 : index
    %63 = vector.load %arg3[%c101_66, %c0_67] : memref<400x64xf32, #tpu.memory_space<vmem>>, vector<200x64xf32>
    %64 = arith.truncf %63 : vector<200x64xf32> to vector<200x64xbf16>
    %c0_68 = arith.constant 0 : index
    %c128_69 = arith.constant 128 : index
    %65 = vector.load %arg10[%c0_68, %c128_69] : memref<200x192xbf16, #tpu.memory_space<vmem>>, vector<200x64xbf16>
    tpu.vector_store %arg10[%c0_68, %c128_69], %64 {strides = array<i32>} : memref<200x192xbf16, #tpu.memory_space<vmem>>, vector<200x64xbf16>,
    %c0_70 = arith.constant 0 : index
    %c0_71 = arith.constant 0 : index
    %66 = vector.load %arg10[%c0_70, %c0_71] : memref<200x192xbf16, #tpu.memory_space<vmem>>, vector<200x192xbf16>
    %c1_72 = arith.constant 1 : index
    %c0_73 = arith.constant 0 : index
    %c0_74 = arith.constant 0 : index
    %67 = vector.load %arg5[%c1_72, %c0_73, %c0_74] : memref<3x192x32xbf16, #tpu.memory_space<vmem>>, vector<1x192x32xbf16>
    %68 = vector.shape_cast %67 : vector<1x192x32xbf16> to vector<192x32xbf16>
    %cst_75 = arith.constant dense<0.000000e+00> : vector<200x32xf32>
    %69 = tpu.matmul %66, %68, %cst_75 {dimension_numbers = #tpu.dot_dimension_numbers<[1], [0], [0], [1], [0, 0, 1, 1], [], []>} : vector<200x192xbf16>, vector<192x32xbf16>, vector<200x32xf32> -> vector<200x32xf32>
    %70 = arith.addf %56, %69 : vector<200x32xf32>
    %c109_76 = arith.constant 109 : index
    %c0_77 = arith.constant 0 : index
    %71 = vector.load %arg3[%c109_76, %c0_77] : memref<400x64xf32, #tpu.memory_space<vmem>>, vector<200x64xf32>
    %72 = arith.truncf %71 : vector<200x64xf32> to vector<200x64xbf16>
    %c0_78 = arith.constant 0 : index
    %c0_79 = arith.constant 0 : index
    %73 = vector.load %arg10[%c0_78, %c0_79] : memref<200x192xbf16, #tpu.memory_space<vmem>>, vector<200x64xbf16>
    tpu.vector_store %arg10[%c0_78, %c0_79], %72 {strides = array<i32>} : memref<200x192xbf16, #tpu.memory_space<vmem>>, vector<200x64xbf16>,
    %c110_80 = arith.constant 110 : index
    %c0_81 = arith.constant 0 : index
    %74 = vector.load %arg3[%c110_80, %c0_81] : memref<400x64xf32, #tpu.memory_space<vmem>>, vector<200x64xf32>
    %75 = arith.truncf %74 : vector<200x64xf32> to vector<200x64xbf16>
    %c0_82 = arith.constant 0 : index
    %c64_83 = arith.constant 64 : index
    %76 = vector.load %arg10[%c0_82, %c64_83] : memref<200x192xbf16, #tpu.memory_space<vmem>>, vector<200x64xbf16>
    tpu.vector_store %arg10[%c0_82, %c64_83], %75 {strides = array<i32>} : memref<200x192xbf16, #tpu.memory_space<vmem>>, vector<200x64xbf16>,
    %c111_84 = arith.constant 111 : index
    %c0_85 = arith.constant 0 : index
    %77 = vector.load %arg3[%c111_84, %c0_85] : memref<400x64xf32, #tpu.memory_space<vmem>>, vector<200x64xf32>
    %78 = arith.truncf %77 : vector<200x64xf32> to vector<200x64xbf16>
    %c0_86 = arith.constant 0 : index
    %c128_87 = arith.constant 128 : index
    %79 = vector.load %arg10[%c0_86, %c128_87] : memref<200x192xbf16, #tpu.memory_space<vmem>>, vector<200x64xbf16>
    tpu.vector_store %arg10[%c0_86, %c128_87], %78 {strides = array<i32>} : memref<200x192xbf16, #tpu.memory_space<vmem>>, vector<200x64xbf16>,
    %c0_88 = arith.constant 0 : index
    %c0_89 = arith.constant 0 : index
    %80 = vector.load %arg10[%c0_88, %c0_89] : memref<200x192xbf16, #tpu.memory_space<vmem>>, vector<200x192xbf16>
    %c2_90 = arith.constant 2 : index
    %c0_91 = arith.constant 0 : index
    %c0_92 = arith.constant 0 : index
    %81 = vector.load %arg5[%c2_90, %c0_91, %c0_92] : memref<3x192x32xbf16, #tpu.memory_space<vmem>>, vector<1x192x32xbf16>
    %82 = vector.shape_cast %81 : vector<1x192x32xbf16> to vector<192x32xbf16>
    %cst_93 = arith.constant dense<0.000000e+00> : vector<200x32xf32>
    %83 = tpu.matmul %80, %82, %cst_93 {dimension_numbers = #tpu.dot_dimension_numbers<[1], [0], [0], [1], [0, 0, 1, 1], [], []>} : vector<200x192xbf16>, vector<192x32xbf16>, vector<200x32xf32> -> vector<200x32xf32>
    %84 = arith.addf %70, %83 : vector<200x32xf32>
    %c0_94 = arith.constant 0 : index
    %c0_95 = arith.constant 0 : index
    %85 = vector.load %arg1[%c0_94, %c0_95] : memref<200x1xf32, #tpu.memory_space<vmem>>, vector<200x1xf32>
    %c0_96 = arith.constant 0 : index
    %c0_97 = arith.constant 0 : index
    %86 = vector.load %arg6[%c0_96, %c0_97] : memref<1x32xf32, #tpu.memory_space<vmem>>, vector<1x32xf32>
    %87 = vector.broadcast %86 : vector<1x32xf32> to vector<200x32xf32>
    %88 = arith.addf %84, %87 : vector<200x32xf32>
    %89 = vector.broadcast %85 : vector<200x1xf32> to vector<200x32xf32>
    %90 = arith.mulf %88, %89 : vector<200x32xf32>
    %cst_98 = arith.constant dense<0.000000e+00> : vector<32xf32>
    %91 = vector.multi_reduction <add>, %90, %cst_98 [0] : vector<200x32xf32> to vector<32xf32>
    %92 = vector.shape_cast %91 : vector<32xf32> to vector<1x32xf32>
    %cst_99 = arith.constant 7.812500e-03 : f32
    %93 = vector.broadcast %cst_99 : f32 to vector<1x32xf32>
    %94 = arith.mulf %92, %93 : vector<1x32xf32>
    %95 = vector.broadcast %94 : vector<1x32xf32> to vector<200x32xf32>
    %96 = arith.subf %88, %95 : vector<200x32xf32>
    %97 = vector.broadcast %85 : vector<200x1xf32> to vector<200x32xf32>
    %98 = arith.mulf %96, %97 : vector<200x32xf32>
    %99 = arith.mulf %98, %98 : vector<200x32xf32>
    %cst_100 = arith.constant dense<0.000000e+00> : vector<32xf32>
    %100 = vector.multi_reduction <add>, %99, %cst_100 [0] : vector<200x32xf32> to vector<32xf32>
    %101 = vector.shape_cast %100 : vector<32xf32> to vector<1x32xf32>
    %cst_101 = arith.constant 7.812500e-03 : f32
    %102 = vector.broadcast %cst_101 : f32 to vector<1x32xf32>
    %103 = arith.mulf %101, %102 : vector<1x32xf32>
    %104 = vector.broadcast %94 : vector<1x32xf32> to vector<200x32xf32>
    %105 = arith.subf %88, %104 : vector<200x32xf32>
    %cst_102 = arith.constant 9.99999974E-6 : f32
    %106 = vector.broadcast %cst_102 : f32 to vector<1x32xf32>
    %107 = arith.addf %103, %106 : vector<1x32xf32>
    %108 = math.rsqrt %107 : vector<1x32xf32>
    %109 = vector.broadcast %108 : vector<1x32xf32> to vector<200x32xf32>
    %110 = arith.mulf %105, %109 : vector<200x32xf32>
    %c0_103 = arith.constant 0 : index
    %c0_104 = arith.constant 0 : index
    %111 = vector.load %arg7[%c0_103, %c0_104] : memref<1x32xf32, #tpu.memory_space<vmem>>, vector<1x32xf32>
    %112 = vector.broadcast %111 : vector<1x32xf32> to vector<200x32xf32>
    %113 = arith.mulf %110, %112 : vector<200x32xf32>
    %c0_105 = arith.constant 0 : index
    %c0_106 = arith.constant 0 : index
    %114 = vector.load %arg8[%c0_105, %c0_106] : memref<1x32xf32, #tpu.memory_space<vmem>>, vector<1x32xf32>
    %115 = vector.broadcast %114 : vector<1x32xf32> to vector<200x32xf32>
    %116 = arith.addf %113, %115 : vector<200x32xf32>
    %cst_107 = arith.constant 0.000000e+00 : f32
    %117 = vector.broadcast %cst_107 : f32 to vector<200x32xf32>
    %118 = arith.maximumf %116, %117 : vector<200x32xf32>
    %119 = vector.broadcast %85 : vector<200x1xf32> to vector<200x32xf32>
    %120 = arith.mulf %118, %119 : vector<200x32xf32>
    %cst_108 = arith.constant 0.000000e+00 : f32
    %121 = vector.broadcast %cst_108 : f32 to vector<20x32xf32>
    %c80 = arith.constant 80 : index
    %c0_109 = arith.constant 0 : index
    %122 = vector.load %arg9[%c80, %c0_109] : memref<400x32xf32, #tpu.memory_space<vmem>>, vector<20x32xf32>
    tpu.vector_store %arg9[%c80, %c0_109], %121 {strides = array<i32>} : memref<400x32xf32, #tpu.memory_space<vmem>>, vector<20x32xf32>,
    %c300 = arith.constant 300 : index
    %c0_110 = arith.constant 0 : index
    %123 = vector.load %arg9[%c300, %c0_110] : memref<400x32xf32, #tpu.memory_space<vmem>>, vector<20x32xf32>
    tpu.vector_store %arg9[%c300, %c0_110], %121 {strides = array<i32>} : memref<400x32xf32, #tpu.memory_space<vmem>>, vector<20x32xf32>,
    %c100_111 = arith.constant 100 : index
    %c0_112 = arith.constant 0 : index
    %124 = vector.load %arg9[%c100_111, %c0_112] : memref<400x32xf32, #tpu.memory_space<vmem>>, vector<200x32xf32>
    tpu.vector_store %arg9[%c100_111, %c0_112], %120 {strides = array<i32>} : memref<400x32xf32, #tpu.memory_space<vmem>>, vector<200x32xf32>,
    return
  }
  func.func @transform_0(%arg0: i32) -> (i32, i32) {
    %c0_i32 = arith.constant 0 : i32
    %c0_i32_0 = arith.constant 0 : i32
    %c0_i32_1 = arith.constant 0 : i32
    return %c0_i32, %c0_i32_0 : i32, i32
  }
  func.func @transform_1(%arg0: i32) -> (i32, i32) {
    %c0_i32 = arith.constant 0 : i32
    %c0_i32_0 = arith.constant 0 : i32
    %c0_i32_1 = arith.constant 0 : i32
    return %c0_i32, %c0_i32_0 : i32, i32
  }
  func.func @transform_2(%arg0: i32) -> (i32, i32) {
    %c0_i32 = arith.constant 0 : i32
    %c0_i32_0 = arith.constant 0 : i32
    %c0_i32_1 = arith.constant 0 : i32
    return %c0_i32, %c0_i32_0 : i32, i32
  }
  func.func @transform_3(%arg0: i32) -> (i32, i32, i32) {
    %c0_i32 = arith.constant 0 : i32
    %c0_i32_0 = arith.constant 0 : i32
    %c0_i32_1 = arith.constant 0 : i32
    return %c0_i32, %c0_i32_0, %arg0 : i32, i32, i32
  }
  func.func @transform_4(%arg0: i32) -> (i32, i32, i32) {
    %c0_i32 = arith.constant 0 : i32
    %c0_i32_0 = arith.constant 0 : i32
    %c0_i32_1 = arith.constant 0 : i32
    return %c0_i32, %c0_i32_0, %arg0 : i32, i32, i32
  }
  func.func @transform_5(%arg0: i32) -> (i32, i32) {
    %c0_i32 = arith.constant 0 : i32
    %c0_i32_0 = arith.constant 0 : i32
    return %c0_i32, %arg0 : i32, i32
  }
  func.func @transform_6(%arg0: i32) -> (i32, i32) {
    %c0_i32 = arith.constant 0 : i32
    %c0_i32_0 = arith.constant 0 : i32
    return %c0_i32, %arg0 : i32, i32
  }
  func.func @transform_7(%arg0: i32) -> (i32, i32) {
    %c0_i32 = arith.constant 0 : i32
    %c0_i32_0 = arith.constant 0 : i32
    return %c0_i32, %arg0 : i32, i32
  }
  func.func @transform_8(%arg0: i32) -> (i32, i32) {
    %c0_i32 = arith.constant 0 : i32
    %c0_i32_0 = arith.constant 0 : i32
    return %c0_i32, %arg0 : i32, i32
  }
}

</mosaic_0001>

<llo_original>
// kernel: tpu_custom_call.1
$region0: #{tpu_custom_call.1}
  #allocation0 [shape = 'u32[]', space=smem, size = 0x4, offset = 0x4, fixed_abs, tag = 'smem constant byte address 0x4 - core index']
  #allocation1 [shape = 'u32[144,128]{1,0:T(1,128)}', space=vmem, size = 0x12000, scoped, tag = 'internal scratch']
  #allocation2 [shape = 'bf16[200,192]{1,0:T(8,128)(2,1)}', space=vmem, size = 0x19000, scoped, tag = 'scratch operand']
  %s0 = inlined_call_operand.vmem [shape: f32[200,1], index: 0, kind: input, shape index: {}]
  %s1 = inlined_call_operand.vmem [shape: f32[400,64], index: 1, kind: input, shape index: {}]
  %s2 = inlined_call_operand.vmem [shape: f32[400,64], index: 2, kind: input, shape index: {}]
  %s3 = inlined_call_operand.vmem [shape: bf16[3,192,32], index: 3, kind: input, shape index: {}]
  %s4 = inlined_call_operand.vmem [shape: bf16[3,192,32], index: 4, kind: input, shape index: {}]
  %s5 = inlined_call_operand.vmem [shape: f32[1,32], index: 5, kind: input, shape index: {}]
  %s6 = inlined_call_operand.vmem [shape: f32[1,32], index: 6, kind: input, shape index: {}]
  %s7 = inlined_call_operand.vmem [shape: f32[1,32], index: 7, kind: input, shape index: {}]
  %s8 = inlined_call_operand.vmem [shape: f32[400,32], index: 8, kind: output, shape index: {}]
  %s9 = sld [smem:[#allocation0]]
  $region42: #{tpu_custom_call.1} parent=0
    _
  %s11 = ssub.s32 1, %s9
  %s12 = scalar_select 0, %s11, %s9
  // Predicated region
  $region2: #{tpu_custom_call.1} parent=0 // pred_check
    _
  $region3: #{tpu_custom_call.1} parent=0 // pred_check_branch
    %14 = sbr.rel (0) target = $region5
  $region4: #{tpu_custom_call.1} parent=0 // pred_region
    _
  $region5: #{tpu_custom_call.1} parent=0 // pred_fallthru
    _
  // Predicated region
  $region6: #{tpu_custom_call.1} parent=0 // pred_check
    _
  $region7: #{tpu_custom_call.1} parent=0 // pred_check_branch
    %16 = sbr.rel (0) target = $region9
  $region8: #{tpu_custom_call.1} parent=0 // pred_region
    _
  $region9: #{tpu_custom_call.1} parent=0 // pred_fallthru
    _
  // Predicated region
  $region10: #{tpu_custom_call.1} parent=0 // pred_check
    _
  $region11: #{tpu_custom_call.1} parent=0 // pred_check_branch
    %18 = sbr.rel (0) target = $region13
  $region12: #{tpu_custom_call.1} parent=0 // pred_region
    _
  $region13: #{tpu_custom_call.1} parent=0 // pred_fallthru
    _
  // Predicated region
  $region14: #{tpu_custom_call.1} parent=0 // pred_check
    _
  $region15: #{tpu_custom_call.1} parent=0 // pred_check_branch
    %20 = sbr.rel (0) target = $region17
  $region16: #{tpu_custom_call.1} parent=0 // pred_region
    _
  $region17: #{tpu_custom_call.1} parent=0 // pred_fallthru
    _
  // Predicated region
  $region18: #{tpu_custom_call.1} parent=0 // pred_check
    _
  $region19: #{tpu_custom_call.1} parent=0 // pred_check_branch
    %22 = sbr.rel (0) target = $region21
  $region20: #{tpu_custom_call.1} parent=0 // pred_region
    _
  $region21: #{tpu_custom_call.1} parent=0 // pred_fallthru
    _
  // Predicated region
  $region22: #{tpu_custom_call.1} parent=0 // pred_check
    _
  $region23: #{tpu_custom_call.1} parent=0 // pred_check_branch
    %24 = sbr.rel (0) target = $region25
  $region24: #{tpu_custom_call.1} parent=0 // pred_region
    _
  $region25: #{tpu_custom_call.1} parent=0 // pred_fallthru
    _
  // Predicated region
  $region26: #{tpu_custom_call.1} parent=0 // pred_check
    _
  $region27: #{tpu_custom_call.1} parent=0 // pred_check_branch
    %26 = sbr.rel (0) target = $region29
  $region28: #{tpu_custom_call.1} parent=0 // pred_region
    _
  $region29: #{tpu_custom_call.1} parent=0 // pred_fallthru
    _
  // Predicated region
  $region30: #{tpu_custom_call.1} parent=0 // pred_check
    _
  $region31: #{tpu_custom_call.1} parent=0 // pred_check_branch
    %28 = sbr.rel (0) target = $region33
  $region32: #{tpu_custom_call.1} parent=0 // pred_region
    _
  $region33: #{tpu_custom_call.1} parent=0 // pred_fallthru
    _
  %v30 = vld [vmem:[%s1 + $0x59] sm:$0xff]
  %v31 = vld [vmem:[%s1 + $0x61] sm:$0xff]
  %v32 = vld [vmem:[%s1 + $0x69] sm:$0xff]
  %v33 = vld [vmem:[%s1 + $0x71] sm:$0xff]
  %v34 = vld [vmem:[%s1 + $0x79] sm:$0xff]
  %v35 = vld [vmem:[%s1 + $0x81] sm:$0xff]
  %v36 = vld [vmem:[%s1 + $0x89] sm:$0xff]
  %v37 = vld [vmem:[%s1 + $0x91] sm:$0xff]
  %v38 = vld [vmem:[%s1 + $0x99] sm:$0xff]
  %v39 = vld [vmem:[%s1 + $0xa1] sm:$0xff]
  %v40 = vld [vmem:[%s1 + $0xa9] sm:$0xff]
  %v41 = vld [vmem:[%s1 + $0xb1] sm:$0xff]
  %v42 = vld [vmem:[%s1 + $0xb9] sm:$0xff]
  %v43 = vld [vmem:[%s1 + $0xc1] sm:$0xff]
  %v44 = vld [vmem:[%s1 + $0xc9] sm:$0xff]
  %v45 = vld [vmem:[%s1 + $0xd1] sm:$0xff]
  %v46 = vld [vmem:[%s1 + $0xd9] sm:$0xff]
  %v47 = vld [vmem:[%s1 + $0xe1] sm:$0xff]
  %v48 = vld [vmem:[%s1 + $0xe9] sm:$0xff]
  %v49 = vld [vmem:[%s1 + $0xf1] sm:$0xff]
  %v50 = vld [vmem:[%s1 + $0xf9] sm:$0xff]
  %v51 = vld [vmem:[%s1 + $0x101] sm:$0xff]
  %v52 = vld [vmem:[%s1 + $0x109] sm:$0xff]
  %v53 = vld [vmem:[%s1 + $0x111] sm:$0xff]
  %v54 = vld [vmem:[%s1 + $0x119] sm:$0xff]
  %v55 = vpack.c.bf16 %v31, %v30
  %v56 = vpack.c.bf16 %v33, %v32
  %v57 = vpack.c.bf16 %v35, %v34
  %v58 = vpack.c.bf16 %v37, %v36
  %v59 = vpack.c.bf16 %v39, %v38
  %v60 = vpack.c.bf16 %v41, %v40
  %v61 = vpack.c.bf16 %v43, %v42
  %v62 = vpack.c.bf16 %v45, %v44
  %v63 = vpack.c.bf16 %v47, %v46
  %v64 = vpack.c.bf16 %v49, %v48
  %v65 = vpack.c.bf16 %v51, %v50
  %v66 = vpack.c.bf16 %v53, %v52
  %v67 = vpack.c.bf16 %v54, %v54
  %v81 = vunpack.c.l.b16 %v55
  %v82 = vunpack.c.h.b16 %v55
  %v83 = vunpack.c.l.b16 %v56
  %v84 = vunpack.c.h.b16 %v56
  %v85 = vunpack.c.l.b16 %v57
  %v86 = vunpack.c.h.b16 %v57
  %v87 = vunpack.c.l.b16 %v58
  %v88 = vunpack.c.h.b16 %v58
  %v89 = vunpack.c.l.b16 %v59
  %v90 = vunpack.c.h.b16 %v59
  %v91 = vunpack.c.l.b16 %v60
  %v92 = vunpack.c.h.b16 %v60
  %v93 = vunpack.c.l.b16 %v61
  %v94 = vunpack.c.h.b16 %v61
  %v95 = vunpack.c.l.b16 %v62
  %v96 = vunpack.c.h.b16 %v62
  %v97 = vunpack.c.l.b16 %v63
  %v98 = vunpack.c.h.b16 %v63
  %v99 = vunpack.c.l.b16 %v64
  %v100 = vunpack.c.h.b16 %v64
  %v101 = vunpack.c.l.b16 %v65
  %v102 = vunpack.c.h.b16 %v65
  %v103 = vunpack.c.l.b16 %v66
  %v104 = vunpack.c.h.b16 %v66
  %v105 = vunpack.c.l.b16 %v67
  %v106 = vpack.c.b16 %v81, %v81
  %v107 = vpack.c.b16 %v82, %v82
  %v108 = vpack.c.b16 %v83, %v83
  %v109 = vpack.c.b16 %v84, %v84
  %v110 = vpack.c.b16 %v85, %v85
  %v111 = vpack.c.b16 %v86, %v86
  %v112 = vpack.c.b16 %v87, %v87
  %v113 = vpack.c.b16 %v88, %v88
  %v114 = vpack.c.b16 %v89, %v89
  %v115 = vpack.c.b16 %v90, %v90
  %v116 = vpack.c.b16 %v91, %v91
  %v117 = vpack.c.b16 %v92, %v92
  %v118 = vpack.c.b16 %v93, %v93
  %v119 = vpack.c.b16 %v94, %v94
  %v120 = vpack.c.b16 %v95, %v95
  %v121 = vpack.c.b16 %v96, %v96
  %v122 = vpack.c.b16 %v97, %v97
  %v123 = vpack.c.b16 %v98, %v98
  %v124 = vpack.c.b16 %v99, %v99
  %v125 = vpack.c.b16 %v100, %v100
  %v126 = vpack.c.b16 %v101, %v101
  %v127 = vpack.c.b16 %v102, %v102
  %v128 = vpack.c.b16 %v103, %v103
  %v129 = vpack.c.b16 %v104, %v104
  %v130 = vpack.c.b16 %v105, %v105
  %vm156 = vcmask 519168
  %157 = vst.msk [vmem:[#allocation2] sm:$0xf] %vm156, %v106
  %158 = vst.msk [vmem:[#allocation2 + $0x8] sm:$0xf] %vm156, %v107
  %159 = vst.msk [vmem:[#allocation2 + $0x10] sm:$0xf] %vm156, %v108
  %160 = vst.msk [vmem:[#allocation2 + $0x18] sm:$0xf] %vm156, %v109
  %161 = vst.msk [vmem:[#allocation2 + $0x20] sm:$0xf] %vm156, %v110
  %162 = vst.msk [vmem:[#allocation2 + $0x28] sm:$0xf] %vm156, %v111
  %163 = vst.msk [vmem:[#allocation2 + $0x30] sm:$0xf] %vm156, %v112
  %164 = vst.msk [vmem:[#allocation2 + $0x38] sm:$0xf] %vm156, %v113
  %165 = vst.msk [vmem:[#allocation2 + $0x40] sm:$0xf] %vm156, %v114
  %166 = vst.msk [vmem:[#allocation2 + $0x48] sm:$0xf] %vm156, %v115
  %167 = vst.msk [vmem:[#allocation2 + $0x50] sm:$0xf] %vm156, %v116
  %168 = vst.msk [vmem:[#allocation2 + $0x58] sm:$0xf] %vm156, %v117
  %169 = vst.msk [vmem:[#allocation2 + $0x60] sm:$0xf] %vm156, %v118
  %170 = vst.msk [vmem:[#allocation2 + $0x68] sm:$0xf] %vm156, %v119
  %171 = vst.msk [vmem:[#allocation2 + $0x70] sm:$0xf] %vm156, %v120
  %172 = vst.msk [vmem:[#allocation2 + $0x78] sm:$0xf] %vm156, %v121
  %173 = vst.msk [vmem:[#allocation2 + $0x80] sm:$0xf] %vm156, %v122
  %174 = vst.msk [vmem:[#allocation2 + $0x88] sm:$0xf] %vm156, %v123
  %175 = vst.msk [vmem:[#allocation2 + $0x90] sm:$0xf] %vm156, %v124
  %176 = vst.msk [vmem:[#allocation2 + $0x98] sm:$0xf] %vm156, %v125
  %177 = vst.msk [vmem:[#allocation2 + $0xa0] sm:$0xf] %vm156, %v126
  %178 = vst.msk [vmem:[#allocation2 + $0xa8] sm:$0xf] %vm156, %v127
  %179 = vst.msk [vmem:[#allocation2 + $0xb0] sm:$0xf] %vm156, %v128
  %180 = vst.msk [vmem:[#allocation2 + $0xb8] sm:$0xf] %vm156, %v129
  %181 = vst.msk [vmem:[#allocation2 + $0xc0] sm:$0xf] %vm156, %v130
  %v182 = vld [vmem:[%s1 + $0x5a] sm:$0xff]
  %v183 = vld [vmem:[%s1 + $0x62] sm:$0xff]
  %v184 = vld [vmem:[%s1 + $0x6a] sm:$0xff]
  %v185 = vld [vmem:[%s1 + $0x72] sm:$0xff]
  %v186 = vld [vmem:[%s1 + $0x7a] sm:$0xff]
  %v187 = vld [vmem:[%s1 + $0x82] sm:$0xff]
  %v188 = vld [vmem:[%s1 + $0x8a] sm:$0xff]
  %v189 = vld [vmem:[%s1 + $0x92] sm:$0xff]
  %v190 = vld [vmem:[%s1 + $0x9a] sm:$0xff]
  %v191 = vld [vmem:[%s1 + $0xa2] sm:$0xff]
  %v192 = vld [vmem:[%s1 + $0xaa] sm:$0xff]
  %v193 = vld [vmem:[%s1 + $0xb2] sm:$0xff]
  %v194 = vld [vmem:[%s1 + $0xba] sm:$0xff]
  %v195 = vld [vmem:[%s1 + $0xc2] sm:$0xff]
  %v196 = vld [vmem:[%s1 + $0xca] sm:$0xff]
  %v197 = vld [vmem:[%s1 + $0xd2] sm:$0xff]
  %v198 = vld [vmem:[%s1 + $0xda] sm:$0xff]
  %v199 = vld [vmem:[%s1 + $0xe2] sm:$0xff]
  %v200 = vld [vmem:[%s1 + $0xea] sm:$0xff]
  %v201 = vld [vmem:[%s1 + $0xf2] sm:$0xff]
  %v202 = vld [vmem:[%s1 + $0xfa] sm:$0xff]
  %v203 = vld [vmem:[%s1 + $0x102] sm:$0xff]
  %v204 = vld [vmem:[%s1 + $0x10a] sm:$0xff]
  %v205 = vld [vmem:[%s1 + $0x112] sm:$0xff]
  %v206 = vld [vmem:[%s1 + $0x11a] sm:$0xff]
  %v207 = vpack.c.bf16 %v183, %v182
  %v208 = vpack.c.bf16 %v185, %v184
  %v209 = vpack.c.bf16 %v187, %v186
  %v210 = vpack.c.bf16 %v189, %v188
  %v211 = vpack.c.bf16 %v191, %v190
  %v212 = vpack.c.bf16 %v193, %v192
  %v213 = vpack.c.bf16 %v195, %v194
  %v214 = vpack.c.bf16 %v197, %v196
  %v215 = vpack.c.bf16 %v199, %v198
  %v216 = vpack.c.bf16 %v201, %v200
  %v217 = vpack.c.bf16 %v203, %v202
  %v218 = vpack.c.bf16 %v205, %v204
  %v219 = vpack.c.bf16 %v206, %v206
  %v233 = vunpack.c.l.b16 %v207
  %v234 = vunpack.c.h.b16 %v207
  %v235 = vunpack.c.l.b16 %v208
  %v236 = vunpack.c.h.b16 %v208
  %v237 = vunpack.c.l.b16 %v209
  %v238 = vunpack.c.h.b16 %v209
  %v239 = vunpack.c.l.b16 %v210
  %v240 = vunpack.c.h.b16 %v210
  %v241 = vunpack.c.l.b16 %v211
  %v242 = vunpack.c.h.b16 %v211
  %v243 = vunpack.c.l.b16 %v212
  %v244 = vunpack.c.h.b16 %v212
  %v245 = vunpack.c.l.b16 %v213
  %v246 = vunpack.c.h.b16 %v213
  %v247 = vunpack.c.l.b16 %v214
  %v248 = vunpack.c.h.b16 %v214
  %v249 = vunpack.c.l.b16 %v215
  %v250 = vunpack.c.h.b16 %v215
  %v251 = vunpack.c.l.b16 %v216
  %v252 = vunpack.c.h.b16 %v216
  %v253 = vunpack.c.l.b16 %v217
  %v254 = vunpack.c.h.b16 %v217
  %v255 = vunpack.c.l.b16 %v218
  %v256 = vunpack.c.h.b16 %v218
  %v257 = vunpack.c.l.b16 %v219
  %v258 = vpack.c.b16 %v233, %v233
  %v259 = vpack.c.b16 %v234, %v234
  %v260 = vpack.c.b16 %v235, %v235
  %v261 = vpack.c.b16 %v236, %v236
  %v262 = vpack.c.b16 %v237, %v237
  %v263 = vpack.c.b16 %v238, %v238
  %v264 = vpack.c.b16 %v239, %v239
  %v265 = vpack.c.b16 %v240, %v240
  %v266 = vpack.c.b16 %v241, %v241
  %v267 = vpack.c.b16 %v242, %v242
  %v268 = vpack.c.b16 %v243, %v243
  %v269 = vpack.c.b16 %v244, %v244
  %v270 = vpack.c.b16 %v245, %v245
  %v271 = vpack.c.b16 %v246, %v246
  %v272 = vpack.c.b16 %v247, %v247
  %v273 = vpack.c.b16 %v248, %v248
  %v274 = vpack.c.b16 %v249, %v249
  %v275 = vpack.c.b16 %v250, %v250
  %v276 = vpack.c.b16 %v251, %v251
  %v277 = vpack.c.b16 %v252, %v252
  %v278 = vpack.c.b16 %v253, %v253
  %v279 = vpack.c.b16 %v254, %v254
  %v280 = vpack.c.b16 %v255, %v255
  %v281 = vpack.c.b16 %v256, %v256
  %v282 = vpack.c.b16 %v257, %v257
  %283 = vrot.lane.b32.xlu0 %v258, 64
  %v284 = vpop.permute.xlu0 %283
  %285 = vrot.lane.b32.xlu0 %v259, 64
  %v286 = vpop.permute.xlu0 %285
  %287 = vrot.lane.b32.xlu0 %v260, 64
  %v288 = vpop.permute.xlu0 %287
  %289 = vrot.lane.b32.xlu0 %v261, 64
  %v290 = vpop.permute.xlu0 %289
  %291 = vrot.lane.b32.xlu0 %v262, 64
  %v292 = vpop.permute.xlu0 %291
  %293 = vrot.lane.b32.xlu0 %v263, 64
  %v294 = vpop.permute.xlu0 %293
  %295 = vrot.lane.b32.xlu0 %v264, 64
  %v296 = vpop.permute.xlu0 %295
  %297 = vrot.lane.b32.xlu0 %v265, 64
  %v298 = vpop.permute.xlu0 %297
  %299 = vrot.lane.b32.xlu0 %v266, 64
  %v300 = vpop.permute.xlu0 %299
  %301 = vrot.lane.b32.xlu0 %v267, 64
  %v302 = vpop.permute.xlu0 %301
  %303 = vrot.lane.b32.xlu0 %v268, 64
  %v304 = vpop.permute.xlu0 %303
  %305 = vrot.lane.b32.xlu0 %v269, 64
  %v306 = vpop.permute.xlu0 %305
  %307 = vrot.lane.b32.xlu0 %v270, 64
  %v308 = vpop.permute.xlu0 %307
  %309 = vrot.lane.b32.xlu0 %v271, 64
  %v310 = vpop.permute.xlu0 %309
  %311 = vrot.lane.b32.xlu0 %v272, 64
  %v312 = vpop.permute.xlu0 %311
  %313 = vrot.lane.b32.xlu0 %v273, 64
  %v314 = vpop.permute.xlu0 %313
  %315 = vrot.lane.b32.xlu0 %v274, 64
  %v316 = vpop.permute.xlu0 %315
  %317 = vrot.lane.b32.xlu0 %v275, 64
  %v318 = vpop.permute.xlu0 %317
  %319 = vrot.lane.b32.xlu0 %v276, 64
  %v320 = vpop.permute.xlu0 %319
  %321 = vrot.lane.b32.xlu0 %v277, 64
  %v322 = vpop.permute.xlu0 %321
  %323 = vrot.lane.b32.xlu0 %v278, 64
  %v324 = vpop.permute.xlu0 %323
  %325 = vrot.lane.b32.xlu0 %v279, 64
  %v326 = vpop.permute.xlu0 %325
  %327 = vrot.lane.b32.xlu0 %v280, 64
  %v328 = vpop.permute.xlu0 %327
  %329 = vrot.lane.b32.xlu0 %v281, 64
  %v330 = vpop.permute.xlu0 %329
  %331 = vrot.lane.b32.xlu0 %v282, 64
  %v332 = vpop.permute.xlu0 %331
  %vm358 = vcmask 1043968
  %359 = vst.msk [vmem:[#allocation2] sm:$0xf] %vm358, %v284
  %360 = vst.msk [vmem:[#allocation2 + $0x8] sm:$0xf] %vm358, %v286
  %361 = vst.msk [vmem:[#allocation2 + $0x10] sm:$0xf] %vm358, %v288
  %362 = vst.msk [vmem:[#allocation2 + $0x18] sm:$0xf] %vm358, %v290
  %363 = vst.msk [vmem:[#allocation2 + $0x20] sm:$0xf] %vm358, %v292
  %364 = vst.msk [vmem:[#allocation2 + $0x28] sm:$0xf] %vm358, %v294
  %365 = vst.msk [vmem:[#allocation2 + $0x30] sm:$0xf] %vm358, %v296
  %366 = vst.msk [vmem:[#allocation2 + $0x38] sm:$0xf] %vm358, %v298
  %367 = vst.msk [vmem:[#allocation2 + $0x40] sm:$0xf] %vm358, %v300
  %368 = vst.msk [vmem:[#allocation2 + $0x48] sm:$0xf] %vm358, %v302
  %369 = vst.msk [vmem:[#allocation2 + $0x50] sm:$0xf] %vm358, %v304
  %370 = vst.msk [vmem:[#allocation2 + $0x58] sm:$0xf] %vm358, %v306
  %371 = vst.msk [vmem:[#allocation2 + $0x60] sm:$0xf] %vm358, %v308
  %372 = vst.msk [vmem:[#allocation2 + $0x68] sm:$0xf] %vm358, %v310
  %373 = vst.msk [vmem:[#allocation2 + $0x70] sm:$0xf] %vm358, %v312
  %374 = vst.msk [vmem:[#allocation2 + $0x78] sm:$0xf] %vm358, %v314
  %375 = vst.msk [vmem:[#allocation2 + $0x80] sm:$0xf] %vm358, %v316
  %376 = vst.msk [vmem:[#allocation2 + $0x88] sm:$0xf] %vm358, %v318
  %377 = vst.msk [vmem:[#allocation2 + $0x90] sm:$0xf] %vm358, %v320
  %378 = vst.msk [vmem:[#allocation2 + $0x98] sm:$0xf] %vm358, %v322
  %379 = vst.msk [vmem:[#allocation2 + $0xa0] sm:$0xf] %vm358, %v324
  %380 = vst.msk [vmem:[#allocation2 + $0xa8] sm:$0xf] %vm358, %v326
  %381 = vst.msk [vmem:[#allocation2 + $0xb0] sm:$0xf] %vm358, %v328
  %382 = vst.msk [vmem:[#allocation2 + $0xb8] sm:$0xf] %vm358, %v330
  %383 = vst.msk [vmem:[#allocation2 + $0xc0] sm:$0xf] %vm358, %v332
  %v384 = vld [vmem:[%s1 + $0x5b] sm:$0xff]
  %v385 = vld [vmem:[%s1 + $0x63] sm:$0xff]
  %v386 = vld [vmem:[%s1 + $0x6b] sm:$0xff]
  %v387 = vld [vmem:[%s1 + $0x73] sm:$0xff]
  %v388 = vld [vmem:[%s1 + $0x7b] sm:$0xff]
  %v389 = vld [vmem:[%s1 + $0x83] sm:$0xff]
  %v390 = vld [vmem:[%s1 + $0x8b] sm:$0xff]
  %v391 = vld [vmem:[%s1 + $0x93] sm:$0xff]
  %v392 = vld [vmem:[%s1 + $0x9b] sm:$0xff]
  %v393 = vld [vmem:[%s1 + $0xa3] sm:$0xff]
  %v394 = vld [vmem:[%s1 + $0xab] sm:$0xff]
  %v395 = vld [vmem:[%s1 + $0xb3] sm:$0xff]
  %v396 = vld [vmem:[%s1 + $0xbb] sm:$0xff]
  %v397 = vld [vmem:[%s1 + $0xc3] sm:$0xff]
  %v398 = vld [vmem:[%s1 + $0xcb] sm:$0xff]
  %v399 = vld [vmem:[%s1 + $0xd3] sm:$0xff]
  %v400 = vld [vmem:[%s1 + $0xdb] sm:$0xff]
  %v401 = vld [vmem:[%s1 + $0xe3] sm:$0xff]
  %v402 = vld [vmem:[%s1 + $0xeb] sm:$0xff]
  %v403 = vld [vmem:[%s1 + $0xf3] sm:$0xff]
  %v404 = vld [vmem:[%s1 + $0xfb] sm:$0xff]
  %v405 = vld [vmem:[%s1 + $0x103] sm:$0xff]
  %v406 = vld [vmem:[%s1 + $0x10b] sm:$0xff]
  %v407 = vld [vmem:[%s1 + $0x113] sm:$0xff]
  %v408 = vld [vmem:[%s1 + $0x11b] sm:$0xff]
  %v409 = vpack.c.bf16 %v385, %v384
  %v410 = vpack.c.bf16 %v387, %v386
  %v411 = vpack.c.bf16 %v389, %v388
  %v412 = vpack.c.bf16 %v391, %v390
  %v413 = vpack.c.bf16 %v393, %v392
  %v414 = vpack.c.bf16 %v395, %v394
  %v415 = vpack.c.bf16 %v397, %v396
  %v416 = vpack.c.bf16 %v399, %v398
  %v417 = vpack.c.bf16 %v401, %v400
  %v418 = vpack.c.bf16 %v403, %v402
  %v419 = vpack.c.bf16 %v405, %v404
  %v420 = vpack.c.bf16 %v407, %v406
  %v421 = vpack.c.bf16 %v408, %v408
  %v435 = vunpack.c.l.b16 %v409
  %v436 = vunpack.c.h.b16 %v409
  %v437 = vunpack.c.l.b16 %v410
  %v438 = vunpack.c.h.b16 %v410
  %v439 = vunpack.c.l.b16 %v411
  %v440 = vunpack.c.h.b16 %v411
  %v441 = vunpack.c.l.b16 %v412
  %v442 = vunpack.c.h.b16 %v412
  %v443 = vunpack.c.l.b16 %v413
  %v444 = vunpack.c.h.b16 %v413
  %v445 = vunpack.c.l.b16 %v414
  %v446 = vunpack.c.h.b16 %v414
  %v447 = vunpack.c.l.b16 %v415
  %v448 = vunpack.c.h.b16 %v415
  %v449 = vunpack.c.l.b16 %v416
  %v450 = vunpack.c.h.b16 %v416
  %v451 = vunpack.c.l.b16 %v417
  %v452 = vunpack.c.h.b16 %v417
  %v453 = vunpack.c.l.b16 %v418
  %v454 = vunpack.c.h.b16 %v418
  %v455 = vunpack.c.l.b16 %v419
  %v456 = vunpack.c.h.b16 %v419
  %v457 = vunpack.c.l.b16 %v420
  %v458 = vunpack.c.h.b16 %v420
  %v459 = vunpack.c.l.b16 %v421
  %v460 = vpack.c.b16 %v435, %v435
  %v461 = vpack.c.b16 %v436, %v436
  %v462 = vpack.c.b16 %v437, %v437
  %v463 = vpack.c.b16 %v438, %v438
  %v464 = vpack.c.b16 %v439, %v439
  %v465 = vpack.c.b16 %v440, %v440
  %v466 = vpack.c.b16 %v441, %v441
  %v467 = vpack.c.b16 %v442, %v442
  %v468 = vpack.c.b16 %v443, %v443
  %v469 = vpack.c.b16 %v444, %v444
  %v470 = vpack.c.b16 %v445, %v445
  %v471 = vpack.c.b16 %v446, %v446
  %v472 = vpack.c.b16 %v447, %v447
  %v473 = vpack.c.b16 %v448, %v448
  %v474 = vpack.c.b16 %v449, %v449
  %v475 = vpack.c.b16 %v450, %v450
  %v476 = vpack.c.b16 %v451, %v451
  %v477 = vpack.c.b16 %v452, %v452
  %v478 = vpack.c.b16 %v453, %v453
  %v479 = vpack.c.b16 %v454, %v454
  %v480 = vpack.c.b16 %v455, %v455
  %v481 = vpack.c.b16 %v456, %v456
  %v482 = vpack.c.b16 %v457, %v457
  %v483 = vpack.c.b16 %v458, %v458
  %v484 = vpack.c.b16 %v459, %v459
  %510 = vst.msk [vmem:[#allocation2 + $0x4] sm:$0xf] %vm156, %v460
  %511 = vst.msk [vmem:[#allocation2 + $0xc] sm:$0xf] %vm156, %v461
  %512 = vst.msk [vmem:[#allocation2 + $0x14] sm:$0xf] %vm156, %v462
  %513 = vst.msk [vmem:[#allocation2 + $0x1c] sm:$0xf] %vm156, %v463
  %514 = vst.msk [vmem:[#allocation2 + $0x24] sm:$0xf] %vm156, %v464
  %515 = vst.msk [vmem:[#allocation2 + $0x2c] sm:$0xf] %vm156, %v465
  %516 = vst.msk [vmem:[#allocation2 + $0x34] sm:$0xf] %vm156, %v466
  %517 = vst.msk [vmem:[#allocation2 + $0x3c] sm:$0xf] %vm156, %v467
  %518 = vst.msk [vmem:[#allocation2 + $0x44] sm:$0xf] %vm156, %v468
  %519 = vst.msk [vmem:[#allocation2 + $0x4c] sm:$0xf] %vm156, %v469
  %520 = vst.msk [vmem:[#allocation2 + $0x54] sm:$0xf] %vm156, %v470
  %521 = vst.msk [vmem:[#allocation2 + $0x5c] sm:$0xf] %vm156, %v471
  %522 = vst.msk [vmem:[#allocation2 + $0x64] sm:$0xf] %vm156, %v472
  %523 = vst.msk [vmem:[#allocation2 + $0x6c] sm:$0xf] %vm156, %v473
  %524 = vst.msk [vmem:[#allocation2 + $0x74] sm:$0xf] %vm156, %v474
  %525 = vst.msk [vmem:[#allocation2 + $0x7c] sm:$0xf] %vm156, %v475
  %526 = vst.msk [vmem:[#allocation2 + $0x84] sm:$0xf] %vm156, %v476
  %527 = vst.msk [vmem:[#allocation2 + $0x8c] sm:$0xf] %vm156, %v477
  %528 = vst.msk [vmem:[#allocation2 + $0x94] sm:$0xf] %vm156, %v478
  %529 = vst.msk [vmem:[#allocation2 + $0x9c] sm:$0xf] %vm156, %v479
  %530 = vst.msk [vmem:[#allocation2 + $0xa4] sm:$0xf] %vm156, %v480
  %531 = vst.msk [vmem:[#allocation2 + $0xac] sm:$0xf] %vm156, %v481
  %532 = vst.msk [vmem:[#allocation2 + $0xb4] sm:$0xf] %vm156, %v482
  %533 = vst.msk [vmem:[#allocation2 + $0xbc] sm:$0xf] %vm156, %v483
  %534 = vst.msk [vmem:[#allocation2 + $0xc4] sm:$0xf] %vm156, %v484
  %v535 = vld [vmem:[#allocation2] sm:$0xff]
  %v536 = vld [vmem:[#allocation2 + $0x8] sm:$0xff]
  %v537 = vld [vmem:[#allocation2 + $0x10] sm:$0xff]
  %v538 = vld [vmem:[#allocation2 + $0x18] sm:$0xff]
  %v539 = vld [vmem:[#allocation2 + $0x20] sm:$0xff]
  %v540 = vld [vmem:[#allocation2 + $0x28] sm:$0xff]
  %v541 = vld [vmem:[#allocation2 + $0x30] sm:$0xff]
  %v542 = vld [vmem:[#allocation2 + $0x38] sm:$0xff]
  %v543 = vld [vmem:[#allocation2 + $0x40] sm:$0xff]
  %v544 = vld [vmem:[#allocation2 + $0x48] sm:$0xff]
  %v545 = vld [vmem:[#allocation2 + $0x50] sm:$0xff]
  %v546 = vld [vmem:[#allocation2 + $0x58] sm:$0xff]
  %v547 = vld [vmem:[#allocation2 + $0x60] sm:$0xff]
  %v548 = vld [vmem:[#allocation2 + $0x68] sm:$0xff]
  %v549 = vld [vmem:[#allocation2 + $0x70] sm:$0xff]
  %v550 = vld [vmem:[#allocation2 + $0x78] sm:$0xff]
  %v551 = vld [vmem:[#allocation2 + $0x80] sm:$0xff]
  %v552 = vld [vmem:[#allocation2 + $0x88] sm:$0xff]
  %v553 = vld [vmem:[#allocation2 + $0x90] sm:$0xff]
  %v554 = vld [vmem:[#allocation2 + $0x98] sm:$0xff]
  %v555 = vld [vmem:[#allocation2 + $0xa0] sm:$0xff]
  %v556 = vld [vmem:[#allocation2 + $0xa8] sm:$0xff]
  %v557 = vld [vmem:[#allocation2 + $0xb0] sm:$0xff]
  %v558 = vld [vmem:[#allocation2 + $0xb8] sm:$0xff]
  %v559 = vld [vmem:[#allocation2 + $0xc0] sm:$0xff]
  %v560 = vld [vmem:[%s3] sm:$0xf]
  %v561 = vld [vmem:[%s3 + $0x4] sm:$0xf]
  %v562 = vld [vmem:[%s3 + $0x8] sm:$0xf]
  %v563 = vld [vmem:[%s3 + $0xc] sm:$0xf]
  %v564 = vld [vmem:[%s3 + $0x10] sm:$0xf]
  %v565 = vld [vmem:[%s3 + $0x14] sm:$0xf]
  %v566 = vld [vmem:[%s3 + $0x18] sm:$0xf]
  %v567 = vld [vmem:[%s3 + $0x1c] sm:$0xf]
  %v568 = vld [vmem:[%s3 + $0x20] sm:$0xf]
  %v569 = vld [vmem:[%s3 + $0x24] sm:$0xf]
  %v570 = vld [vmem:[%s3 + $0x28] sm:$0xf]
  %v571 = vld [vmem:[%s3 + $0x2c] sm:$0xf]
  %v572 = vld [vmem:[%s3 + $0x30] sm:$0xf]
  %v573 = vld [vmem:[%s3 + $0x34] sm:$0xf]
  %v574 = vld [vmem:[%s3 + $0x38] sm:$0xf]
  %v575 = vld [vmem:[%s3 + $0x3c] sm:$0xf]
  %v576 = vld [vmem:[%s3 + $0x40] sm:$0xf]
  %v577 = vld [vmem:[%s3 + $0x44] sm:$0xf]
  %v578 = vld [vmem:[%s3 + $0x48] sm:$0xf]
  %v579 = vld [vmem:[%s3 + $0x4c] sm:$0xf]
  %v580 = vld [vmem:[%s3 + $0x50] sm:$0xf]
  %v581 = vld [vmem:[%s3 + $0x54] sm:$0xf]
  %v582 = vld [vmem:[%s3 + $0x58] sm:$0xf]
  %v583 = vld [vmem:[%s3 + $0x5c] sm:$0xf]
  %v584 = vld [vmem:[%s1 + $0x63] sm:$0xff]
  %v585 = vld [vmem:[%s1 + $0x6b] sm:$0xff]
  %v586 = vld [vmem:[%s1 + $0x73] sm:$0xff]
  %v587 = vld [vmem:[%s1 + $0x7b] sm:$0xff]
  %v588 = vld [vmem:[%s1 + $0x83] sm:$0xff]
  %v589 = vld [vmem:[%s1 + $0x8b] sm:$0xff]
  %v590 = vld [vmem:[%s1 + $0x93] sm:$0xff]
  %v591 = vld [vmem:[%s1 + $0x9b] sm:$0xff]
  %v592 = vld [vmem:[%s1 + $0xa3] sm:$0xff]
  %v593 = vld [vmem:[%s1 + $0xab] sm:$0xff]
  %v594 = vld [vmem:[%s1 + $0xb3] sm:$0xff]
  %v595 = vld [vmem:[%s1 + $0xbb] sm:$0xff]
  %v596 = vld [vmem:[%s1 + $0xc3] sm:$0xff]
  %v597 = vld [vmem:[%s1 + $0xcb] sm:$0xff]
  %v598 = vld [vmem:[%s1 + $0xd3] sm:$0xff]
  %v599 = vld [vmem:[%s1 + $0xdb] sm:$0xff]
  %v600 = vld [vmem:[%s1 + $0xe3] sm:$0xff]
  %v601 = vld [vmem:[%s1 + $0xeb] sm:$0xff]
  %v602 = vld [vmem:[%s1 + $0xf3] sm:$0xff]
  %v603 = vld [vmem:[%s1 + $0xfb] sm:$0xff]
  %v604 = vld [vmem:[%s1 + $0x103] sm:$0xff]
  %v605 = vld [vmem:[%s1 + $0x10b] sm:$0xff]
  %v606 = vld [vmem:[%s1 + $0x113] sm:$0xff]
  %v607 = vld [vmem:[%s1 + $0x11b] sm:$0xff]
  %v608 = vld [vmem:[%s1 + $0x123] sm:$0xff]
  %v609 = vpack.c.bf16 %v585, %v584
  %v610 = vpack.c.bf16 %v587, %v586
  %v611 = vpack.c.bf16 %v589, %v588
  %v612 = vpack.c.bf16 %v591, %v590
  %v613 = vpack.c.bf16 %v593, %v592
  %v614 = vpack.c.bf16 %v595, %v594
  %v615 = vpack.c.bf16 %v597, %v596
  %v616 = vpack.c.bf16 %v599, %v598
  %v617 = vpack.c.bf16 %v601, %v600
  %v618 = vpack.c.bf16 %v603, %v602
  %v619 = vpack.c.bf16 %v605, %v604
  %v620 = vpack.c.bf16 %v607, %v606
  %v621 = vpack.c.bf16 %v608, %v608
  %v635 = vunpack.c.l.b16 %v609
  %v636 = vunpack.c.h.b16 %v609
  %v637 = vunpack.c.l.b16 %v610
  %v638 = vunpack.c.h.b16 %v610
  %v639 = vunpack.c.l.b16 %v611
  %v640 = vunpack.c.h.b16 %v611
  %v641 = vunpack.c.l.b16 %v612
  %v642 = vunpack.c.h.b16 %v612
  %v643 = vunpack.c.l.b16 %v613
  %v644 = vunpack.c.h.b16 %v613
  %v645 = vunpack.c.l.b16 %v614
  %v646 = vunpack.c.h.b16 %v614
  %v647 = vunpack.c.l.b16 %v615
  %v648 = vunpack.c.h.b16 %v615
  %v649 = vunpack.c.l.b16 %v616
  %v650 = vunpack.c.h.b16 %v616
  %v651 = vunpack.c.l.b16 %v617
  %v652 = vunpack.c.h.b16 %v617
  %v653 = vunpack.c.l.b16 %v618
  %v654 = vunpack.c.h.b16 %v618
  %v655 = vunpack.c.l.b16 %v619
  %v656 = vunpack.c.h.b16 %v619
  %v657 = vunpack.c.l.b16 %v620
  %v658 = vunpack.c.h.b16 %v620
  %v659 = vunpack.c.l.b16 %v621
  %v660 = vpack.c.b16 %v635, %v635
  %v661 = vpack.c.b16 %v636, %v636
  %v662 = vpack.c.b16 %v637, %v637
  %v663 = vpack.c.b16 %v638, %v638
  %v664 = vpack.c.b16 %v639, %v639
  %v665 = vpack.c.b16 %v640, %v640
  %v666 = vpack.c.b16 %v641, %v641
  %v667 = vpack.c.b16 %v642, %v642
  %v668 = vpack.c.b16 %v643, %v643
  %v669 = vpack.c.b16 %v644, %v644
  %v670 = vpack.c.b16 %v645, %v645
  %v671 = vpack.c.b16 %v646, %v646
  %v672 = vpack.c.b16 %v647, %v647
  %v673 = vpack.c.b16 %v648, %v648
  %v674 = vpack.c.b16 %v649, %v649
  %v675 = vpack.c.b16 %v650, %v650
  %v676 = vpack.c.b16 %v651, %v651
  %v677 = vpack.c.b16 %v652, %v652
  %v678 = vpack.c.b16 %v653, %v653
  %v679 = vpack.c.b16 %v654, %v654
  %v680 = vpack.c.b16 %v655, %v655
  %v681 = vpack.c.b16 %v656, %v656
  %v682 = vpack.c.b16 %v657, %v657
  %v683 = vpack.c.b16 %v658, %v658
  %v684 = vpack.c.b16 %v659, %v659
  %710 = vst.msk [vmem:[#allocation2] sm:$0xf] %vm156, %v660
  %711 = vst.msk [vmem:[#allocation2 + $0x8] sm:$0xf] %vm156, %v661
  %712 = vst.msk [vmem:[#allocation2 + $0x10] sm:$0xf] %vm156, %v662
  %713 = vst.msk [vmem:[#allocation2 + $0x18] sm:$0xf] %vm156, %v663
  %714 = vst.msk [vmem:[#allocation2 + $0x20] sm:$0xf] %vm156, %v664
  %715 = vst.msk [vmem:[#allocation2 + $0x28] sm:$0xf] %vm156, %v665
  %716 = vst.msk [vmem:[#allocation2 + $0x30] sm:$0xf] %vm156, %v666
  %717 = vst.msk [vmem:[#allocation2 + $0x38] sm:$0xf] %vm156, %v667
  %718 = vst.msk [vmem:[#allocation2 + $0x40] sm:$0xf] %vm156, %v668
  %719 = vst.msk [vmem:[#allocation2 + $0x48] sm:$0xf] %vm156, %v669
  %720 = vst.msk [vmem:[#allocation2 + $0x50] sm:$0xf] %vm156, %v670
  %721 = vst.msk [vmem:[#allocation2 + $0x58] sm:$0xf] %vm156, %v671
  %722 = vst.msk [vmem:[#allocation2 + $0x60] sm:$0xf] %vm156, %v672
  %723 = vst.msk [vmem:[#allocation2 + $0x68] sm:$0xf] %vm156, %v673
  %724 = vst.msk [vmem:[#allocation2 + $0x70] sm:$0xf] %vm156, %v674
  %725 = vst.msk [vmem:[#allocation2 + $0x78] sm:$0xf] %vm156, %v675
  %726 = vst.msk [vmem:[#allocation2 + $0x80] sm:$0xf] %vm156, %v676
  %727 = vst.msk [vmem:[#allocation2 + $0x88] sm:$0xf] %vm156, %v677
  %728 = vst.msk [vmem:[#allocation2 + $0x90] sm:$0xf] %vm156, %v678
  %729 = vst.msk [vmem:[#allocation2 + $0x98] sm:$0xf] %vm156, %v679
  %730 = vst.msk [vmem:[#allocation2 + $0xa0] sm:$0xf] %vm156, %v680
  %731 = vst.msk [vmem:[#allocation2 + $0xa8] sm:$0xf] %vm156, %v681
  %732 = vst.msk [vmem:[#allocation2 + $0xb0] sm:$0xf] %vm156, %v682
  %733 = vst.msk [vmem:[#allocation2 + $0xb8] sm:$0xf] %vm156, %v683
  %734 = vst.msk [vmem:[#allocation2 + $0xc0] sm:$0xf] %vm156, %v684
  %v735 = vld [vmem:[%s1 + $0x64] sm:$0xff]
  %v736 = vld [vmem:[%s1 + $0x6c] sm:$0xff]
  %v737 = vld [vmem:[%s1 + $0x74] sm:$0xff]
  %v738 = vld [vmem:[%s1 + $0x7c] sm:$0xff]
  %v739 = vld [vmem:[%s1 + $0x84] sm:$0xff]
  %v740 = vld [vmem:[%s1 + $0x8c] sm:$0xff]
  %v741 = vld [vmem:[%s1 + $0x94] sm:$0xff]
  %v742 = vld [vmem:[%s1 + $0x9c] sm:$0xff]
  %v743 = vld [vmem:[%s1 + $0xa4] sm:$0xff]
  %v744 = vld [vmem:[%s1 + $0xac] sm:$0xff]
  %v745 = vld [vmem:[%s1 + $0xb4] sm:$0xff]
  %v746 = vld [vmem:[%s1 + $0xbc] sm:$0xff]
  %v747 = vld [vmem:[%s1 + $0xc4] sm:$0xff]
  %v748 = vld [vmem:[%s1 + $0xcc] sm:$0xff]
  %v749 = vld [vmem:[%s1 + $0xd4] sm:$0xff]
  %v750 = vld [vmem:[%s1 + $0xdc] sm:$0xff]
  %v751 = vld [vmem:[%s1 + $0xe4] sm:$0xff]
  %v752 = vld [vmem:[%s1 + $0xec] sm:$0xff]
  %v753 = vld [vmem:[%s1 + $0xf4] sm:$0xff]
  %v754 = vld [vmem:[%s1 + $0xfc] sm:$0xff]
  %v755 = vld [vmem:[%s1 + $0x104] sm:$0xff]
  %v756 = vld [vmem:[%s1 + $0x10c] sm:$0xff]
  %v757 = vld [vmem:[%s1 + $0x114] sm:$0xff]
  %v758 = vld [vmem:[%s1 + $0x11c] sm:$0xff]
  %v759 = vld [vmem:[%s1 + $0x124] sm:$0xff]
  %v760 = vpack.c.bf16 %v736, %v735
  %v761 = vpack.c.bf16 %v738, %v737
  %v762 = vpack.c.bf16 %v740, %v739
  %v763 = vpack.c.bf16 %v742, %v741
  %v764 = vpack.c.bf16 %v744, %v743
  %v765 = vpack.c.bf16 %v746, %v745
  %v766 = vpack.c.bf16 %v748, %v747
  %v767 = vpack.c.bf16 %v750, %v749
  %v768 = vpack.c.bf16 %v752, %v751
  %v769 = vpack.c.bf16 %v754, %v753
  %v770 = vpack.c.bf16 %v756, %v755
  %v771 = vpack.c.bf16 %v758, %v757
  %v772 = vpack.c.bf16 %v759, %v759
  %v786 = vunpack.c.l.b16 %v760
  %v787 = vunpack.c.h.b16 %v760
  %v788 = vunpack.c.l.b16 %v761
  %v789 = vunpack.c.h.b16 %v761
  %v790 = vunpack.c.l.b16 %v762
  %v791 = vunpack.c.h.b16 %v762
  %v792 = vunpack.c.l.b16 %v763
  %v793 = vunpack.c.h.b16 %v763
  %v794 = vunpack.c.l.b16 %v764
  %v795 = vunpack.c.h.b16 %v764
  %v796 = vunpack.c.l.b16 %v765
  %v797 = vunpack.c.h.b16 %v765
  %v798 = vunpack.c.l.b16 %v766
  %v799 = vunpack.c.h.b16 %v766
  %v800 = vunpack.c.l.b16 %v767
  %v801 = vunpack.c.h.b16 %v767
  %v802 = vunpack.c.l.b16 %v768
  %v803 = vunpack.c.h.b16 %v768
  %v804 = vunpack.c.l.b16 %v769
  %v805 = vunpack.c.h.b16 %v769
  %v806 = vunpack.c.l.b16 %v770
  %v807 = vunpack.c.h.b16 %v770
  %v808 = vunpack.c.l.b16 %v771
  %v809 = vunpack.c.h.b16 %v771
  %v810 = vunpack.c.l.b16 %v772
  %v811 = vpack.c.b16 %v786, %v786
  %v812 = vpack.c.b16 %v787, %v787
  %v813 = vpack.c.b16 %v788, %v788
  %v814 = vpack.c.b16 %v789, %v789
  %v815 = vpack.c.b16 %v790, %v790
  %v816 = vpack.c.b16 %v791, %v791
  %v817 = vpack.c.b16 %v792, %v792
  %v818 = vpack.c.b16 %v793, %v793
  %v819 = vpack.c.b16 %v794, %v794
  %v820 = vpack.c.b16 %v795, %v795
  %v821 = vpack.c.b16 %v796, %v796
  %v822 = vpack.c.b16 %v797, %v797
  %v823 = vpack.c.b16 %v798, %v798
  %v824 = vpack.c.b16 %v799, %v799
  %v825 = vpack.c.b16 %v800, %v800
  %v826 = vpack.c.b16 %v801, %v801
  %v827 = vpack.c.b16 %v802, %v802
  %v828 = vpack.c.b16 %v803, %v803
  %v829 = vpack.c.b16 %v804, %v804
  %v830 = vpack.c.b16 %v805, %v805
  %v831 = vpack.c.b16 %v806, %v806
  %v832 = vpack.c.b16 %v807, %v807
  %v833 = vpack.c.b16 %v808, %v808
  %v834 = vpack.c.b16 %v809, %v809
  %v835 = vpack.c.b16 %v810, %v810
  %836 = vrot.lane.b32.xlu0 %v811, 64
  %v837 = vpop.permute.xlu0 %836
  %838 = vrot.lane.b32.xlu0 %v812, 64
  %v839 = vpop.permute.xlu0 %838
  %840 = vrot.lane.b32.xlu0 %v813, 64
  %v841 = vpop.permute.xlu0 %840
  %842 = vrot.lane.b32.xlu0 %v814, 64
  %v843 = vpop.permute.xlu0 %842
  %844 = vrot.lane.b32.xlu0 %v815, 64
  %v845 = vpop.permute.xlu0 %844
  %846 = vrot.lane.b32.xlu0 %v816, 64
  %v847 = vpop.permute.xlu0 %846
  %848 = vrot.lane.b32.xlu0 %v817, 64
  %v849 = vpop.permute.xlu0 %848
  %850 = vrot.lane.b32.xlu0 %v818, 64
  %v851 = vpop.permute.xlu0 %850
  %852 = vrot.lane.b32.xlu0 %v819, 64
  %v853 = vpop.permute.xlu0 %852
  %854 = vrot.lane.b32.xlu0 %v820, 64
  %v855 = vpop.permute.xlu0 %854
  %856 = vrot.lane.b32.xlu0 %v821, 64
  %v857 = vpop.permute.xlu0 %856
  %858 = vrot.lane.b32.xlu0 %v822, 64
  %v859 = vpop.permute.xlu0 %858
  %860 = vrot.lane.b32.xlu0 %v823, 64
  %v861 = vpop.permute.xlu0 %860
  %862 = vrot.lane.b32.xlu0 %v824, 64
  %v863 = vpop.permute.xlu0 %862
  %864 = vrot.lane.b32.xlu0 %v825, 64
  %v865 = vpop.permute.xlu0 %864
  %866 = vrot.lane.b32.xlu0 %v826, 64
  %v867 = vpop.permute.xlu0 %866
  %868 = vrot.lane.b32.xlu0 %v827, 64
  %v869 = vpop.permute.xlu0 %868
  %870 = vrot.lane.b32.xlu0 %v828, 64
  %v871 = vpop.permute.xlu0 %870
  %872 = vrot.lane.b32.xlu0 %v829, 64
  %v873 = vpop.permute.xlu0 %872
  %874 = vrot.lane.b32.xlu0 %v830, 64
  %v875 = vpop.permute.xlu0 %874
  %876 = vrot.lane.b32.xlu0 %v831, 64
  %v877 = vpop.permute.xlu0 %876
  %878 = vrot.lane.b32.xlu0 %v832, 64
  %v879 = vpop.permute.xlu0 %878
  %880 = vrot.lane.b32.xlu0 %v833, 64
  %v881 = vpop.permute.xlu0 %880
  %882 = vrot.lane.b32.xlu0 %v834, 64
  %v883 = vpop.permute.xlu0 %882
  %884 = vrot.lane.b32.xlu0 %v835, 64
  %v885 = vpop.permute.xlu0 %884
  %911 = vst.msk [vmem:[#allocation2] sm:$0xf] %vm358, %v837
  %912 = vst.msk [vmem:[#allocation2 + $0x8] sm:$0xf] %vm358, %v839
  %913 = vst.msk [vmem:[#allocation2 + $0x10] sm:$0xf] %vm358, %v841
  %914 = vst.msk [vmem:[#allocation2 + $0x18] sm:$0xf] %vm358, %v843
  %915 = vst.msk [vmem:[#allocation2 + $0x20] sm:$0xf] %vm358, %v845
  %916 = vst.msk [vmem:[#allocation2 + $0x28] sm:$0xf] %vm358, %v847
  %917 = vst.msk [vmem:[#allocation2 + $0x30] sm:$0xf] %vm358, %v849
  %918 = vst.msk [vmem:[#allocation2 + $0x38] sm:$0xf] %vm358, %v851
  %919 = vst.msk [vmem:[#allocation2 + $0x40] sm:$0xf] %vm358, %v853
  %920 = vst.msk [vmem:[#allocation2 + $0x48] sm:$0xf] %vm358, %v855
  %921 = vst.msk [vmem:[#allocation2 + $0x50] sm:$0xf] %vm358, %v857
  %922 = vst.msk [vmem:[#allocation2 + $0x58] sm:$0xf] %vm358, %v859
  %923 = vst.msk [vmem:[#allocation2 + $0x60] sm:$0xf] %vm358, %v861
  %924 = vst.msk [vmem:[#allocation2 + $0x68] sm:$0xf] %vm358, %v863
  %925 = vst.msk [vmem:[#allocation2 + $0x70] sm:$0xf] %vm358, %v865
  %926 = vst.msk [vmem:[#allocation2 + $0x78] sm:$0xf] %vm358, %v867
  %927 = vst.msk [vmem:[#allocation2 + $0x80] sm:$0xf] %vm358, %v869
  %928 = vst.msk [vmem:[#allocation2 + $0x88] sm:$0xf] %vm358, %v871
  %929 = vst.msk [vmem:[#allocation2 + $0x90] sm:$0xf] %vm358, %v873
  %930 = vst.msk [vmem:[#allocation2 + $0x98] sm:$0xf] %vm358, %v875
  %931 = vst.msk [vmem:[#allocation2 + $0xa0] sm:$0xf] %vm358, %v877
  %932 = vst.msk [vmem:[#allocation2 + $0xa8] sm:$0xf] %vm358, %v879
  %933 = vst.msk [vmem:[#allocation2 + $0xb0] sm:$0xf] %vm358, %v881
  %934 = vst.msk [vmem:[#allocation2 + $0xb8] sm:$0xf] %vm358, %v883
  %935 = vst.msk [vmem:[#allocation2 + $0xc0] sm:$0xf] %vm358, %v885
  %v936 = vld [vmem:[%s1 + $0x65] sm:$0xff]
  %v937 = vld [vmem:[%s1 + $0x6d] sm:$0xff]
  %v938 = vld [vmem:[%s1 + $0x75] sm:$0xff]
  %v939 = vld [vmem:[%s1 + $0x7d] sm:$0xff]
  %v940 = vld [vmem:[%s1 + $0x85] sm:$0xff]
  %v941 = vld [vmem:[%s1 + $0x8d] sm:$0xff]
  %v942 = vld [vmem:[%s1 + $0x95] sm:$0xff]
  %v943 = vld [vmem:[%s1 + $0x9d] sm:$0xff]
  %v944 = vld [vmem:[%s1 + $0xa5] sm:$0xff]
  %v945 = vld [vmem:[%s1 + $0xad] sm:$0xff]
  %v946 = vld [vmem:[%s1 + $0xb5] sm:$0xff]
  %v947 = vld [vmem:[%s1 + $0xbd] sm:$0xff]
  %v948 = vld [vmem:[%s1 + $0xc5] sm:$0xff]
  %v949 = vld [vmem:[%s1 + $0xcd] sm:$0xff]
  %v950 = vld [vmem:[%s1 + $0xd5] sm:$0xff]
  %v951 = vld [vmem:[%s1 + $0xdd] sm:$0xff]
  %v952 = vld [vmem:[%s1 + $0xe5] sm:$0xff]
  %v953 = vld [vmem:[%s1 + $0xed] sm:$0xff]
  %v954 = vld [vmem:[%s1 + $0xf5] sm:$0xff]
  %v955 = vld [vmem:[%s1 + $0xfd] sm:$0xff]
  %v956 = vld [vmem:[%s1 + $0x105] sm:$0xff]
  %v957 = vld [vmem:[%s1 + $0x10d] sm:$0xff]
  %v958 = vld [vmem:[%s1 + $0x115] sm:$0xff]
  %v959 = vld [vmem:[%s1 + $0x11d] sm:$0xff]
  %v960 = vld [vmem:[%s1 + $0x125] sm:$0xff]
  %v961 = vpack.c.bf16 %v937, %v936
  %v962 = vpack.c.bf16 %v939, %v938
  %v963 = vpack.c.bf16 %v941, %v940
  %v964 = vpack.c.bf16 %v943, %v942
  %v965 = vpack.c.bf16 %v945, %v944
  %v966 = vpack.c.bf16 %v947, %v946
  %v967 = vpack.c.bf16 %v949, %v948
  %v968 = vpack.c.bf16 %v951, %v950
  %v969 = vpack.c.bf16 %v953, %v952
  %v970 = vpack.c.bf16 %v955, %v954
  %v971 = vpack.c.bf16 %v957, %v956
  %v972 = vpack.c.bf16 %v959, %v958
  %v973 = vpack.c.bf16 %v960, %v960
  %v987 = vunpack.c.l.b16 %v961
  %v988 = vunpack.c.h.b16 %v961
  %v989 = vunpack.c.l.b16 %v962
  %v990 = vunpack.c.h.b16 %v962
  %v991 = vunpack.c.l.b16 %v963
  %v992 = vunpack.c.h.b16 %v963
  %v993 = vunpack.c.l.b16 %v964
  %v994 = vunpack.c.h.b16 %v964
  %v995 = vunpack.c.l.b16 %v965
  %v996 = vunpack.c.h.b16 %v965
  %v997 = vunpack.c.l.b16 %v966
  %v998 = vunpack.c.h.b16 %v966
  %v999 = vunpack.c.l.b16 %v967
  %v1000 = vunpack.c.h.b16 %v967
  %v1001 = vunpack.c.l.b16 %v968
  %v1002 = vunpack.c.h.b16 %v968
  %v1003 = vunpack.c.l.b16 %v969
  %v1004 = vunpack.c.h.b16 %v969
  %v1005 = vunpack.c.l.b16 %v970
  %v1006 = vunpack.c.h.b16 %v970
  %v1007 = vunpack.c.l.b16 %v971
  %v1008 = vunpack.c.h.b16 %v971
  %v1009 = vunpack.c.l.b16 %v972
  %v1010 = vunpack.c.h.b16 %v972
  %v1011 = vunpack.c.l.b16 %v973
  %v1012 = vpack.c.b16 %v987, %v987
  %v1013 = vpack.c.b16 %v988, %v988
  %v1014 = vpack.c.b16 %v989, %v989
  %v1015 = vpack.c.b16 %v990, %v990
  %v1016 = vpack.c.b16 %v991, %v991
  %v1017 = vpack.c.b16 %v992, %v992
  %v1018 = vpack.c.b16 %v993, %v993
  %v1019 = vpack.c.b16 %v994, %v994
  %v1020 = vpack.c.b16 %v995, %v995
  %v1021 = vpack.c.b16 %v996, %v996
  %v1022 = vpack.c.b16 %v997, %v997
  %v1023 = vpack.c.b16 %v998, %v998
  %v1024 = vpack.c.b16 %v999, %v999
  %v1025 = vpack.c.b16 %v1000, %v1000
  %v1026 = vpack.c.b16 %v1001, %v1001
  %v1027 = vpack.c.b16 %v1002, %v1002
  %v1028 = vpack.c.b16 %v1003, %v1003
  %v1029 = vpack.c.b16 %v1004, %v1004
  %v1030 = vpack.c.b16 %v1005, %v1005
  %v1031 = vpack.c.b16 %v1006, %v1006
  %v1032 = vpack.c.b16 %v1007, %v1007
  %v1033 = vpack.c.b16 %v1008, %v1008
  %v1034 = vpack.c.b16 %v1009, %v1009
  %v1035 = vpack.c.b16 %v1010, %v1010
  %v1036 = vpack.c.b16 %v1011, %v1011
  %1062 = vst.msk [vmem:[#allocation2 + $0x4] sm:$0xf] %vm156, %v1012
  %1063 = vst.msk [vmem:[#allocation2 + $0xc] sm:$0xf] %vm156, %v1013
  %1064 = vst.msk [vmem:[#allocation2 + $0x14] sm:$0xf] %vm156, %v1014
  %1065 = vst.msk [vmem:[#allocation2 + $0x1c] sm:$0xf] %vm156, %v1015
  %1066 = vst.msk [vmem:[#allocation2 + $0x24] sm:$0xf] %vm156, %v1016
  %1067 = vst.msk [vmem:[#allocation2 + $0x2c] sm:$0xf] %vm156, %v1017
  %1068 = vst.msk [vmem:[#allocation2 + $0x34] sm:$0xf] %vm156, %v1018
  %1069 = vst.msk [vmem:[#allocation2 + $0x3c] sm:$0xf] %vm156, %v1019
  %1070 = vst.msk [vmem:[#allocation2 + $0x44] sm:$0xf] %vm156, %v1020
  %1071 = vst.msk [vmem:[#allocation2 + $0x4c] sm:$0xf] %vm156, %v1021
  %1072 = vst.msk [vmem:[#allocation2 + $0x54] sm:$0xf] %vm156, %v1022
  %1073 = vst.msk [vmem:[#allocation2 + $0x5c] sm:$0xf] %vm156, %v1023
  %1074 = vst.msk [vmem:[#allocation2 + $0x64] sm:$0xf] %vm156, %v1024
  %1075 = vst.msk [vmem:[#allocation2 + $0x6c] sm:$0xf] %vm156, %v1025
  %1076 = vst.msk [vmem:[#allocation2 + $0x74] sm:$0xf] %vm156, %v1026
  %1077 = vst.msk [vmem:[#allocation2 + $0x7c] sm:$0xf] %vm156, %v1027
  %1078 = vst.msk [vmem:[#allocation2 + $0x84] sm:$0xf] %vm156, %v1028
  %1079 = vst.msk [vmem:[#allocation2 + $0x8c] sm:$0xf] %vm156, %v1029
  %1080 = vst.msk [vmem:[#allocation2 + $0x94] sm:$0xf] %vm156, %v1030
  %1081 = vst.msk [vmem:[#allocation2 + $0x9c] sm:$0xf] %vm156, %v1031
  %1082 = vst.msk [vmem:[#allocation2 + $0xa4] sm:$0xf] %vm156, %v1032
  %1083 = vst.msk [vmem:[#allocation2 + $0xac] sm:$0xf] %vm156, %v1033
  %1084 = vst.msk [vmem:[#allocation2 + $0xb4] sm:$0xf] %vm156, %v1034
  %1085 = vst.msk [vmem:[#allocation2 + $0xbc] sm:$0xf] %vm156, %v1035
  %1086 = vst.msk [vmem:[#allocation2 + $0xc4] sm:$0xf] %vm156, %v1036
  %v1087 = vld [vmem:[#allocation2] sm:$0xff]
  %v1088 = vld [vmem:[#allocation2 + $0x8] sm:$0xff]
  %v1089 = vld [vmem:[#allocation2 + $0x10] sm:$0xff]
  %v1090 = vld [vmem:[#allocation2 + $0x18] sm:$0xff]
  %v1091 = vld [vmem:[#allocation2 + $0x20] sm:$0xff]
  %v1092 = vld [vmem:[#allocation2 + $0x28] sm:$0xff]
  %v1093 = vld [vmem:[#allocation2 + $0x30] sm:$0xff]
  %v1094 = vld [vmem:[#allocation2 + $0x38] sm:$0xff]
  %v1095 = vld [vmem:[#allocation2 + $0x40] sm:$0xff]
  %v1096 = vld [vmem:[#allocation2 + $0x48] sm:$0xff]
  %v1097 = vld [vmem:[#allocation2 + $0x50] sm:$0xff]
  %v1098 = vld [vmem:[#allocation2 + $0x58] sm:$0xff]
  %v1099 = vld [vmem:[#allocation2 + $0x60] sm:$0xff]
  %v1100 = vld [vmem:[#allocation2 + $0x68] sm:$0xff]
  %v1101 = vld [vmem:[#allocation2 + $0x70] sm:$0xff]
  %v1102 = vld [vmem:[#allocation2 + $0x78] sm:$0xff]
  %v1103 = vld [vmem:[#allocation2 + $0x80] sm:$0xff]
  %v1104 = vld [vmem:[#allocation2 + $0x88] sm:$0xff]
  %v1105 = vld [vmem:[#allocation2 + $0x90] sm:$0xff]
  %v1106 = vld [vmem:[#allocation2 + $0x98] sm:$0xff]
  %v1107 = vld [vmem:[#allocation2 + $0xa0] sm:$0xff]
  %v1108 = vld [vmem:[#allocation2 + $0xa8] sm:$0xff]
  %v1109 = vld [vmem:[#allocation2 + $0xb0] sm:$0xff]
  %v1110 = vld [vmem:[#allocation2 + $0xb8] sm:$0xff]
  %v1111 = vld [vmem:[#allocation2 + $0xc0] sm:$0xff]
  %s1112 = scalar_lea.vmem %s3, 96
  %v1113 = vld [vmem:[%s1112] sm:$0xf]
  %v1114 = vld [vmem:[%s1112 + $0x4] sm:$0xf]
  %v1115 = vld [vmem:[%s1112 + $0x8] sm:$0xf]
  %v1116 = vld [vmem:[%s1112 + $0xc] sm:$0xf]
  %v1117 = vld [vmem:[%s1112 + $0x10] sm:$0xf]
  %v1118 = vld [vmem:[%s1112 + $0x14] sm:$0xf]
  %v1119 = vld [vmem:[%s1112 + $0x18] sm:$0xf]
  %v1120 = vld [vmem:[%s1112 + $0x1c] sm:$0xf]
  %v1121 = vld [vmem:[%s1112 + $0x20] sm:$0xf]
  %v1122 = vld [vmem:[%s1112 + $0x24] sm:$0xf]
  %v1123 = vld [vmem:[%s1112 + $0x28] sm:$0xf]
  %v1124 = vld [vmem:[%s1112 + $0x2c] sm:$0xf]
  %v1125 = vld [vmem:[%s1112 + $0x30] sm:$0xf]
  %v1126 = vld [vmem:[%s1112 + $0x34] sm:$0xf]
  %v1127 = vld [vmem:[%s1112 + $0x38] sm:$0xf]
  %v1128 = vld [vmem:[%s1112 + $0x3c] sm:$0xf]
  %v1129 = vld [vmem:[%s1112 + $0x40] sm:$0xf]
  %v1130 = vld [vmem:[%s1112 + $0x44] sm:$0xf]
  %v1131 = vld [vmem:[%s1112 + $0x48] sm:$0xf]
  %v1132 = vld [vmem:[%s1112 + $0x4c] sm:$0xf]
  %v1133 = vld [vmem:[%s1112 + $0x50] sm:$0xf]
  %v1134 = vld [vmem:[%s1112 + $0x54] sm:$0xf]
  %v1135 = vld [vmem:[%s1112 + $0x58] sm:$0xf]
  %v1136 = vld [vmem:[%s1112 + $0x5c] sm:$0xf]
  %v1162 = vunpack.c.l.b16 %v1087
  %v1163 = vunpack.c.h.b16 %v1087
  %v1164 = vunpack.c.l.b16 %v1088
  %v1165 = vunpack.c.h.b16 %v1088
  %v1166 = vunpack.c.l.b16 %v1089
  %v1167 = vunpack.c.h.b16 %v1089
  %v1168 = vunpack.c.l.b16 %v1090
  %v1169 = vunpack.c.h.b16 %v1090
  %v1170 = vunpack.c.l.b16 %v1091
  %v1171 = vunpack.c.h.b16 %v1091
  %v1172 = vunpack.c.l.b16 %v1092
  %v1173 = vunpack.c.h.b16 %v1092
  %v1174 = vunpack.c.l.b16 %v1093
  %v1175 = vunpack.c.h.b16 %v1093
  %v1176 = vunpack.c.l.b16 %v1094
  %v1177 = vunpack.c.h.b16 %v1094
  %v1178 = vunpack.c.l.b16 %v1095
  %v1179 = vunpack.c.h.b16 %v1095
  %v1180 = vunpack.c.l.b16 %v1096
  %v1181 = vunpack.c.h.b16 %v1096
  %v1182 = vunpack.c.l.b16 %v1097
  %v1183 = vunpack.c.h.b16 %v1097
  %v1184 = vunpack.c.l.b16 %v1098
  %v1185 = vunpack.c.h.b16 %v1098
  %v1186 = vunpack.c.l.b16 %v1099
  %v1187 = vunpack.c.h.b16 %v1099
  %v1188 = vunpack.c.l.b16 %v1100
  %v1189 = vunpack.c.h.b16 %v1100
  %v1190 = vunpack.c.l.b16 %v1101
  %v1191 = vunpack.c.h.b16 %v1101
  %v1192 = vunpack.c.l.b16 %v1102
  %v1193 = vunpack.c.h.b16 %v1102
  %v1194 = vunpack.c.l.b16 %v1103
  %v1195 = vunpack.c.h.b16 %v1103
  %v1196 = vunpack.c.l.b16 %v1104
  %v1197 = vunpack.c.h.b16 %v1104
  %v1198 = vunpack.c.l.b16 %v1105
  %v1199 = vunpack.c.h.b16 %v1105
  %v1200 = vunpack.c.l.b16 %v1106
  %v1201 = vunpack.c.h.b16 %v1106
  %v1202 = vunpack.c.l.b16 %v1107
  %v1203 = vunpack.c.h.b16 %v1107
  %v1204 = vunpack.c.l.b16 %v1108
  %v1205 = vunpack.c.h.b16 %v1108
  %v1206 = vunpack.c.l.b16 %v1109
  %v1207 = vunpack.c.h.b16 %v1109
  %v1208 = vunpack.c.l.b16 %v1110
  %v1209 = vunpack.c.h.b16 %v1110
  %v1210 = vunpack.c.l.b16 %v1111
  %v1211 = vunpack.c.h.b16 %v1111
  %v1212 = vpack.c.b16 %v1164, %v1162
  %v1213 = vpack.c.b16 %v1165, %v1163
  %v1214 = vpack.c.b16 %v1168, %v1166
  %v1215 = vpack.c.b16 %v1169, %v1167
  %v1216 = vpack.c.b16 %v1172, %v1170
  %v1217 = vpack.c.b16 %v1173, %v1171
  %v1218 = vpack.c.b16 %v1176, %v1174
  %v1219 = vpack.c.b16 %v1177, %v1175
  %v1220 = vpack.c.b16 %v1180, %v1178
  %v1221 = vpack.c.b16 %v1181, %v1179
  %v1222 = vpack.c.b16 %v1184, %v1182
  %v1223 = vpack.c.b16 %v1185, %v1183
  %v1224 = vpack.c.b16 %v1188, %v1186
  %v1225 = vpack.c.b16 %v1189, %v1187
  %v1226 = vpack.c.b16 %v1192, %v1190
  %v1227 = vpack.c.b16 %v1193, %v1191
  %v1228 = vpack.c.b16 %v1196, %v1194
  %v1229 = vpack.c.b16 %v1197, %v1195
  %v1230 = vpack.c.b16 %v1200, %v1198
  %v1231 = vpack.c.b16 %v1201, %v1199
  %v1232 = vpack.c.b16 %v1204, %v1202
  %v1233 = vpack.c.b16 %v1205, %v1203
  %v1234 = vpack.c.b16 %v1208, %v1206
  %v1235 = vpack.c.b16 %v1209, %v1207
  %v1236 = vpack.c.b16 %v1210, %v1210
  %v1237 = vpack.c.b16 %v1211, %v1211
  %v1275 = vunpack.c.l.b16 %v1113
  %v1276 = vunpack.c.l.b16 %v1114
  %v1277 = vunpack.c.l.b16 %v1115
  %v1278 = vunpack.c.l.b16 %v1116
  %v1279 = vunpack.c.l.b16 %v1117
  %v1280 = vunpack.c.l.b16 %v1118
  %v1281 = vunpack.c.l.b16 %v1119
  %v1282 = vunpack.c.l.b16 %v1120
  %v1283 = vunpack.c.l.b16 %v1121
  %v1284 = vunpack.c.l.b16 %v1122
  %v1285 = vunpack.c.l.b16 %v1123
  %v1286 = vunpack.c.l.b16 %v1124
  %v1287 = vunpack.c.l.b16 %v1125
  %v1288 = vunpack.c.l.b16 %v1126
  %v1289 = vunpack.c.l.b16 %v1127
  %v1290 = vunpack.c.l.b16 %v1128
  %v1291 = vunpack.c.l.b16 %v1129
  %v1292 = vunpack.c.l.b16 %v1130
  %v1293 = vunpack.c.l.b16 %v1131
  %v1294 = vunpack.c.l.b16 %v1132
  %v1295 = vunpack.c.l.b16 %v1133
  %v1296 = vunpack.c.l.b16 %v1134
  %v1297 = vunpack.c.l.b16 %v1135
  %v1298 = vunpack.c.l.b16 %v1136
  %v1299 = vpack.c.b16 %v1276, %v1275
  %v1300 = vpack.c.b16 %v1278, %v1277
  %v1301 = vpack.c.b16 %v1280, %v1279
  %v1302 = vpack.c.b16 %v1282, %v1281
  %v1303 = vpack.c.b16 %v1284, %v1283
  %v1304 = vpack.c.b16 %v1286, %v1285
  %v1305 = vpack.c.b16 %v1288, %v1287
  %v1306 = vpack.c.b16 %v1290, %v1289
  %v1307 = vpack.c.b16 %v1292, %v1291
  %v1308 = vpack.c.b16 %v1294, %v1293
  %v1309 = vpack.c.b16 %v1296, %v1295
  %v1310 = vpack.c.b16 %v1298, %v1297
  %vm1323 = vcmask 523264
  %v1325 = vsel %vm1323, %v1213, 0
  %v1328 = vsel %vm1323, %v1215, 0
  %v1331 = vsel %vm1323, %v1217, 0
  %v1334 = vsel %vm1323, %v1219, 0
  %v1337 = vsel %vm1323, %v1221, 0
  %v1340 = vsel %vm1323, %v1223, 0
  %v1343 = vsel %vm1323, %v1225, 0
  %v1346 = vsel %vm1323, %v1227, 0
  %v1349 = vsel %vm1323, %v1229, 0
  %v1352 = vsel %vm1323, %v1231, 0
  %v1355 = vsel %vm1323, %v1233, 0
  %v1358 = vsel %vm1323, %v1235, 0
  %v1361 = vsel %vm1323, %v1237, 0
  %1363 = vmatprep.subr.bf16.mxu0 0
  %1364 = vmatpush1.bf16.msra.mxu0 %v1306
  %1365 = vmatprep.subr.bf16.mxu0 0
  %1366 = vmatpush1.bf16.msra.mxu0 %v1305
  %1367 = vmatprep.subr.bf16.mxu0 0
  %1368 = vmatpush1.bf16.msra.mxu0 %v1304
  %1369 = vmatprep.subr.bf16.mxu0 0
  %1370 = vmatpush1.bf16.msra.mxu0 %v1303
  %1371 = vmatprep.subr.bf16.mxu0 0
  %1372 = vmatpush1.bf16.msra.mxu0 %v1302
  %1373 = vmatprep.subr.bf16.mxu0 0
  %1374 = vmatpush1.bf16.msra.mxu0 %v1301
  %1375 = vmatprep.subr.bf16.mxu0 0
  %1376 = vmatpush1.bf16.msra.mxu0 %v1300
  %1377 = vmatprep.subr.bf16.mxu0 0
  %1378 = vmatpush1.bf16.msra.mxu0 %v1299
  %1379 = vmatprep.subr.bf16.mxu0 0
  %1380 = vmatpush2.bf16.msra.mxu0 0
  %1381 = vmatprep.subr.bf16.mxu0 0
  %1382 = vmatpush2.bf16.msra.mxu0 0
  %1383 = vmatprep.subr.bf16.mxu0 0
  %1384 = vmatpush2.bf16.msra.mxu0 0
  %1385 = vmatprep.subr.bf16.mxu0 0
  %1386 = vmatpush2.bf16.msra.mxu0 0
  %1387 = vmatprep.subr.bf16.mxu0 0
  %1388 = vmatpush2.bf16.msra.mxu0 %v1310
  %1389 = vmatprep.subr.bf16.mxu0 0
  %1390 = vmatpush2.bf16.msra.mxu0 %v1309
  %1391 = vmatprep.subr.bf16.mxu0 0
  %1392 = vmatpush2.bf16.msra.mxu0 %v1308
  %1393 = vmatprep.subr.bf16.mxu0 0
  %1394 = vmatpush2.bf16.msra.mxu0 %v1307
  %1395 = vmatprep.mubr.bf16.mxu0 %v1325
  %1396 = vmatmul.mubr.bf16.gmra.mxu0 %v1212
  %v1397 = vpop.f32.mrf.mxu0
  %v1398 = vadd.f32 0.0, %v1397
  %v1399 = vpop.f32.mrf.mxu0
  %v1400 = vpop.f32.mrf.mxu0
  %v1401 = vadd.f32 0.0, %v1400
  %v1402 = vpop.f32.mrf.mxu0
  %1403 = vmatprep.mubr.bf16.mxu0 %v1328
  %1404 = vmatmul.mubr.bf16.gmra.mxu0 %v1214
  %v1405 = vpop.f32.mrf.mxu0
  %v1406 = vadd.f32 0.0, %v1405
  %v1407 = vpop.f32.mrf.mxu0
  %v1408 = vpop.f32.mrf.mxu0
  %v1409 = vadd.f32 0.0, %v1408
  %v1410 = vpop.f32.mrf.mxu0
  %1411 = vmatprep.mubr.bf16.mxu0 %v1331
  %1412 = vmatmul.mubr.bf16.gmra.mxu0 %v1216
  %v1413 = vpop.f32.mrf.mxu0
  %v1414 = vadd.f32 0.0, %v1413
  %v1415 = vpop.f32.mrf.mxu0
  %v1416 = vpop.f32.mrf.mxu0
  %v1417 = vadd.f32 0.0, %v1416
  %v1418 = vpop.f32.mrf.mxu0
  %1419 = vmatprep.mubr.bf16.mxu0 %v1334
  %1420 = vmatmul.mubr.bf16.gmra.mxu0 %v1218
  %v1421 = vpop.f32.mrf.mxu0
  %v1422 = vadd.f32 0.0, %v1421
  %v1423 = vpop.f32.mrf.mxu0
  %v1424 = vpop.f32.mrf.mxu0
  %v1425 = vadd.f32 0.0, %v1424
  %v1426 = vpop.f32.mrf.mxu0
  %1427 = vmatprep.mubr.bf16.mxu0 %v1337
  %1428 = vmatmul.mubr.bf16.gmra.mxu0 %v1220
  %v1429 = vpop.f32.mrf.mxu0
  %v1430 = vadd.f32 0.0, %v1429
  %v1431 = vpop.f32.mrf.mxu0
  %v1432 = vpop.f32.mrf.mxu0
  %v1433 = vadd.f32 0.0, %v1432
  %v1434 = vpop.f32.mrf.mxu0
  %1435 = vmatprep.mubr.bf16.mxu0 %v1340
  %1436 = vmatmul.mubr.bf16.gmra.mxu0 %v1222
  %v1437 = vpop.f32.mrf.mxu0
  %v1438 = vadd.f32 0.0, %v1437
  %v1439 = vpop.f32.mrf.mxu0
  %v1440 = vpop.f32.mrf.mxu0
  %v1441 = vadd.f32 0.0, %v1440
  %v1442 = vpop.f32.mrf.mxu0
  %1443 = vmatprep.mubr.bf16.mxu0 %v1343
  %1444 = vmatmul.mubr.bf16.gmra.mxu0 %v1224
  %v1445 = vpop.f32.mrf.mxu0
  %v1446 = vadd.f32 0.0, %v1445
  %v1447 = vpop.f32.mrf.mxu0
  %v1448 = vpop.f32.mrf.mxu0
  %v1449 = vadd.f32 0.0, %v1448
  %v1450 = vpop.f32.mrf.mxu0
  %1451 = vmatprep.mubr.bf16.mxu0 %v1346
  %1452 = vmatmul.mubr.bf16.gmra.mxu0 %v1226
  %v1453 = vpop.f32.mrf.mxu0
  %v1454 = vadd.f32 0.0, %v1453
  %v1455 = vpop.f32.mrf.mxu0
  %v1456 = vpop.f32.mrf.mxu0
  %v1457 = vadd.f32 0.0, %v1456
  %v1458 = vpop.f32.mrf.mxu0
  %1459 = vmatprep.mubr.bf16.mxu0 %v1349
  %1460 = vmatmul.mubr.bf16.gmra.mxu0 %v1228
  %v1461 = vpop.f32.mrf.mxu0
  %v1462 = vadd.f32 0.0, %v1461
  %v1463 = vpop.f32.mrf.mxu0
  %v1464 = vpop.f32.mrf.mxu0
  %v1465 = vadd.f32 0.0, %v1464
  %v1466 = vpop.f32.mrf.mxu0
  %1467 = vmatprep.mubr.bf16.mxu0 %v1352
  %1468 = vmatmul.mubr.bf16.gmra.mxu0 %v1230
  %v1469 = vpop.f32.mrf.mxu0
  %v1470 = vadd.f32 0.0, %v1469
  %v1471 = vpop.f32.mrf.mxu0
  %v1472 = vpop.f32.mrf.mxu0
  %v1473 = vadd.f32 0.0, %v1472
  %v1474 = vpop.f32.mrf.mxu0
  %1475 = vmatprep.mubr.bf16.mxu0 %v1355
  %1476 = vmatmul.mubr.bf16.gmra.mxu0 %v1232
  %v1477 = vpop.f32.mrf.mxu0
  %v1478 = vadd.f32 0.0, %v1477
  %v1479 = vpop.f32.mrf.mxu0
  %v1480 = vpop.f32.mrf.mxu0
  %v1481 = vadd.f32 0.0, %v1480
  %v1482 = vpop.f32.mrf.mxu0
  %1483 = vmatprep.mubr.bf16.mxu0 %v1358
  %1484 = vmatmul.mubr.bf16.gmra.mxu0 %v1234
  %v1485 = vpop.f32.mrf.mxu0
  %v1486 = vadd.f32 0.0, %v1485
  %v1487 = vpop.f32.mrf.mxu0
  %v1488 = vpop.f32.mrf.mxu0
  %v1489 = vadd.f32 0.0, %v1488
  %v1490 = vpop.f32.mrf.mxu0
  %1491 = vmatprep.mubr.bf16.mxu0 %v1361
  %1492 = vmatmul.mubr.bf16.gmra.mxu0 %v1236
  %v1493 = vpop.f32.mrf.mxu0
  %v1494 = vadd.f32 0.0, %v1493
  %v1495 = vpop.f32.mrf.mxu0
  %v1496 = vpop.f32.mrf.mxu0
  %v1497 = vpop.f32.mrf.mxu0
  %1498 = vdwg.mxu0
  %v1524 = vunpack.c.l.b16 %v535
  %v1525 = vunpack.c.h.b16 %v535
  %v1526 = vunpack.c.l.b16 %v536
  %v1527 = vunpack.c.h.b16 %v536
  %v1528 = vunpack.c.l.b16 %v537
  %v1529 = vunpack.c.h.b16 %v537
  %v1530 = vunpack.c.l.b16 %v538
  %v1531 = vunpack.c.h.b16 %v538
  %v1532 = vunpack.c.l.b16 %v539
  %v1533 = vunpack.c.h.b16 %v539
  %v1534 = vunpack.c.l.b16 %v540
  %v1535 = vunpack.c.h.b16 %v540
  %v1536 = vunpack.c.l.b16 %v541
  %v1537 = vunpack.c.h.b16 %v541
  %v1538 = vunpack.c.l.b16 %v542
  %v1539 = vunpack.c.h.b16 %v542
  %v1540 = vunpack.c.l.b16 %v543
  %v1541 = vunpack.c.h.b16 %v543
  %v1542 = vunpack.c.l.b16 %v544
  %v1543 = vunpack.c.h.b16 %v544
  %v1544 = vunpack.c.l.b16 %v545
  %v1545 = vunpack.c.h.b16 %v545
  %v1546 = vunpack.c.l.b16 %v546
  %v1547 = vunpack.c.h.b16 %v546
  %v1548 = vunpack.c.l.b16 %v547
  %v1549 = vunpack.c.h.b16 %v547
  %v1550 = vunpack.c.l.b16 %v548
  %v1551 = vunpack.c.h.b16 %v548
  %v1552 = vunpack.c.l.b16 %v549
  %v1553 = vunpack.c.h.b16 %v549
  %v1554 = vunpack.c.l.b16 %v550
  %v1555 = vunpack.c.h.b16 %v550
  %v1556 = vunpack.c.l.b16 %v551
  %v1557 = vunpack.c.h.b16 %v551
  %v1558 = vunpack.c.l.b16 %v552
  %v1559 = vunpack.c.h.b16 %v552
  %v1560 = vunpack.c.l.b16 %v553
  %v1561 = vunpack.c.h.b16 %v553
  %v1562 = vunpack.c.l.b16 %v554
  %v1563 = vunpack.c.h.b16 %v554
  %v1564 = vunpack.c.l.b16 %v555
  %v1565 = vunpack.c.h.b16 %v555
  %v1566 = vunpack.c.l.b16 %v556
  %v1567 = vunpack.c.h.b16 %v556
  %v1568 = vunpack.c.l.b16 %v557
  %v1569 = vunpack.c.h.b16 %v557
  %v1570 = vunpack.c.l.b16 %v558
  %v1571 = vunpack.c.h.b16 %v558
  %v1572 = vunpack.c.l.b16 %v559
  %v1573 = vunpack.c.h.b16 %v559
  %v1574 = vpack.c.b16 %v1526, %v1524
  %v1575 = vpack.c.b16 %v1527, %v1525
  %v1576 = vpack.c.b16 %v1530, %v1528
  %v1577 = vpack.c.b16 %v1531, %v1529
  %v1578 = vpack.c.b16 %v1534, %v1532
  %v1579 = vpack.c.b16 %v1535, %v1533
  %v1580 = vpack.c.b16 %v1538, %v1536
  %v1581 = vpack.c.b16 %v1539, %v1537
  %v1582 = vpack.c.b16 %v1542, %v1540
  %v1583 = vpack.c.b16 %v1543, %v1541
  %v1584 = vpack.c.b16 %v1546, %v1544
  %v1585 = vpack.c.b16 %v1547, %v1545
  %v1586 = vpack.c.b16 %v1550, %v1548
  %v1587 = vpack.c.b16 %v1551, %v1549
  %v1588 = vpack.c.b16 %v1554, %v1552
  %v1589 = vpack.c.b16 %v1555, %v1553
  %v1590 = vpack.c.b16 %v1558, %v1556
  %v1591 = vpack.c.b16 %v1559, %v1557
  %v1592 = vpack.c.b16 %v1562, %v1560
  %v1593 = vpack.c.b16 %v1563, %v1561
  %v1594 = vpack.c.b16 %v1566, %v1564
  %v1595 = vpack.c.b16 %v1567, %v1565
  %v1596 = vpack.c.b16 %v1570, %v1568
  %v1597 = vpack.c.b16 %v1571, %v1569
  %v1598 = vpack.c.b16 %v1572, %v1572
  %v1599 = vpack.c.b16 %v1573, %v1573
  %v1637 = vunpack.c.l.b16 %v560
  %v1638 = vunpack.c.l.b16 %v561
  %v1639 = vunpack.c.l.b16 %v562
  %v1640 = vunpack.c.l.b16 %v563
  %v1641 = vunpack.c.l.b16 %v564
  %v1642 = vunpack.c.l.b16 %v565
  %v1643 = vunpack.c.l.b16 %v566
  %v1644 = vunpack.c.l.b16 %v567
  %v1645 = vunpack.c.l.b16 %v568
  %v1646 = vunpack.c.l.b16 %v569
  %v1647 = vunpack.c.l.b16 %v570
  %v1648 = vunpack.c.l.b16 %v571
  %v1649 = vunpack.c.l.b16 %v572
  %v1650 = vunpack.c.l.b16 %v573
  %v1651 = vunpack.c.l.b16 %v574
  %v1652 = vunpack.c.l.b16 %v575
  %v1653 = vunpack.c.l.b16 %v576
  %v1654 = vunpack.c.l.b16 %v577
  %v1655 = vunpack.c.l.b16 %v578
  %v1656 = vunpack.c.l.b16 %v579
  %v1657 = vunpack.c.l.b16 %v580
  %v1658 = vunpack.c.l.b16 %v581
  %v1659 = vunpack.c.l.b16 %v582
  %v1660 = vunpack.c.l.b16 %v583
  %v1661 = vpack.c.b16 %v1638, %v1637
  %v1662 = vpack.c.b16 %v1640, %v1639
  %v1663 = vpack.c.b16 %v1642, %v1641
  %v1664 = vpack.c.b16 %v1644, %v1643
  %v1665 = vpack.c.b16 %v1646, %v1645
  %v1666 = vpack.c.b16 %v1648, %v1647
  %v1667 = vpack.c.b16 %v1650, %v1649
  %v1668 = vpack.c.b16 %v1652, %v1651
  %v1669 = vpack.c.b16 %v1654, %v1653
  %v1670 = vpack.c.b16 %v1656, %v1655
  %v1671 = vpack.c.b16 %v1658, %v1657
  %v1672 = vpack.c.b16 %v1660, %v1659
  %v1686 = vsel %vm1323, %v1575, 0
  %v1689 = vsel %vm1323, %v1577, 0
  %v1692 = vsel %vm1323, %v1579, 0
  %v1695 = vsel %vm1323, %v1581, 0
  %v1698 = vsel %vm1323, %v1583, 0
  %v1701 = vsel %vm1323, %v1585, 0
  %v1704 = vsel %vm1323, %v1587, 0
  %v1707 = vsel %vm1323, %v1589, 0
  %v1710 = vsel %vm1323, %v1591, 0
  %v1713 = vsel %vm1323, %v1593, 0
  %v1716 = vsel %vm1323, %v1595, 0
  %v1719 = vsel %vm1323, %v1597, 0
  %v1722 = vsel %vm1323, %v1599, 0
  %1724 = vmatprep.subr.bf16.mxu0 0
  %1725 = vmatpush1.bf16.msra.mxu0 %v1668
  %1726 = vmatprep.subr.bf16.mxu0 0
  %1727 = vmatpush1.bf16.msra.mxu0 %v1667
  %1728 = vmatprep.subr.bf16.mxu0 0
  %1729 = vmatpush1.bf16.msra.mxu0 %v1666
  %1730 = vmatprep.subr.bf16.mxu0 0
  %1731 = vmatpush1.bf16.msra.mxu0 %v1665
  %1732 = vmatprep.subr.bf16.mxu0 0
  %1733 = vmatpush1.bf16.msra.mxu0 %v1664
  %1734 = vmatprep.subr.bf16.mxu0 0
  %1735 = vmatpush1.bf16.msra.mxu0 %v1663
  %1736 = vmatprep.subr.bf16.mxu0 0
  %1737 = vmatpush1.bf16.msra.mxu0 %v1662
  %1738 = vmatprep.subr.bf16.mxu0 0
  %1739 = vmatpush1.bf16.msra.mxu0 %v1661
  %1740 = vmatprep.subr.bf16.mxu0 0
  %1741 = vmatpush2.bf16.msra.mxu0 0
  %1742 = vmatprep.subr.bf16.mxu0 0
  %1743 = vmatpush2.bf16.msra.mxu0 0
  %1744 = vmatprep.subr.bf16.mxu0 0
  %1745 = vmatpush2.bf16.msra.mxu0 0
  %1746 = vmatprep.subr.bf16.mxu0 0
  %1747 = vmatpush2.bf16.msra.mxu0 0
  %1748 = vmatprep.subr.bf16.mxu0 0
  %1749 = vmatpush2.bf16.msra.mxu0 %v1672
  %1750 = vmatprep.subr.bf16.mxu0 0
  %1751 = vmatpush2.bf16.msra.mxu0 %v1671
  %1752 = vmatprep.subr.bf16.mxu0 0
  %1753 = vmatpush2.bf16.msra.mxu0 %v1670
  %1754 = vmatprep.subr.bf16.mxu0 0
  %1755 = vmatpush2.bf16.msra.mxu0 %v1669
  %1756 = vmatprep.mubr.bf16.mxu0 %v1686
  %1757 = vmatmul.mubr.bf16.gmra.mxu0 %v1574
  %v1758 = vpop.f32.mrf.mxu0
  %v1759 = vadd.f32 %v1398, %v1758
  %v1760 = vpop.f32.mrf.mxu0
  %v1761 = vpop.f32.mrf.mxu0
  %v1762 = vadd.f32 %v1401, %v1761
  %v1763 = vpop.f32.mrf.mxu0
  %1764 = vmatprep.mubr.bf16.mxu0 %v1689
  %1765 = vmatmul.mubr.bf16.gmra.mxu0 %v1576
  %v1766 = vpop.f32.mrf.mxu0
  %v1767 = vadd.f32 %v1406, %v1766
  %v1768 = vpop.f32.mrf.mxu0
  %v1769 = vpop.f32.mrf.mxu0
  %v1770 = vadd.f32 %v1409, %v1769
  %v1771 = vpop.f32.mrf.mxu0
  %1772 = vmatprep.mubr.bf16.mxu0 %v1692
  %1773 = vmatmul.mubr.bf16.gmra.mxu0 %v1578
  %v1774 = vpop.f32.mrf.mxu0
  %v1775 = vadd.f32 %v1414, %v1774
  %v1776 = vpop.f32.mrf.mxu0
  %v1777 = vpop.f32.mrf.mxu0
  %v1778 = vadd.f32 %v1417, %v1777
  %v1779 = vpop.f32.mrf.mxu0
  %1780 = vmatprep.mubr.bf16.mxu0 %v1695
  %1781 = vmatmul.mubr.bf16.gmra.mxu0 %v1580
  %v1782 = vpop.f32.mrf.mxu0
  %v1783 = vadd.f32 %v1422, %v1782
  %v1784 = vpop.f32.mrf.mxu0
  %v1785 = vpop.f32.mrf.mxu0
  %v1786 = vadd.f32 %v1425, %v1785
  %v1787 = vpop.f32.mrf.mxu0
  %1788 = vmatprep.mubr.bf16.mxu0 %v1698
  %1789 = vmatmul.mubr.bf16.gmra.mxu0 %v1582
  %v1790 = vpop.f32.mrf.mxu0
  %v1791 = vadd.f32 %v1430, %v1790
  %v1792 = vpop.f32.mrf.mxu0
  %v1793 = vpop.f32.mrf.mxu0
  %v1794 = vadd.f32 %v1433, %v1793
  %v1795 = vpop.f32.mrf.mxu0
  %1796 = vmatprep.mubr.bf16.mxu0 %v1701
  %1797 = vmatmul.mubr.bf16.gmra.mxu0 %v1584
  %v1798 = vpop.f32.mrf.mxu0
  %v1799 = vadd.f32 %v1438, %v1798
  %v1800 = vpop.f32.mrf.mxu0
  %v1801 = vpop.f32.mrf.mxu0
  %v1802 = vadd.f32 %v1441, %v1801
  %v1803 = vpop.f32.mrf.mxu0
  %1804 = vmatprep.mubr.bf16.mxu0 %v1704
  %1805 = vmatmul.mubr.bf16.gmra.mxu0 %v1586
  %v1806 = vpop.f32.mrf.mxu0
  %v1807 = vadd.f32 %v1446, %v1806
  %v1808 = vpop.f32.mrf.mxu0
  %v1809 = vpop.f32.mrf.mxu0
  %v1810 = vadd.f32 %v1449, %v1809
  %v1811 = vpop.f32.mrf.mxu0
  %1812 = vmatprep.mubr.bf16.mxu0 %v1707
  %1813 = vmatmul.mubr.bf16.gmra.mxu0 %v1588
  %v1814 = vpop.f32.mrf.mxu0
  %v1815 = vadd.f32 %v1454, %v1814
  %v1816 = vpop.f32.mrf.mxu0
  %v1817 = vpop.f32.mrf.mxu0
  %v1818 = vadd.f32 %v1457, %v1817
  %v1819 = vpop.f32.mrf.mxu0
  %1820 = vmatprep.mubr.bf16.mxu0 %v1710
  %1821 = vmatmul.mubr.bf16.gmra.mxu0 %v1590
  %v1822 = vpop.f32.mrf.mxu0
  %v1823 = vadd.f32 %v1462, %v1822
  %v1824 = vpop.f32.mrf.mxu0
  %v1825 = vpop.f32.mrf.mxu0
  %v1826 = vadd.f32 %v1465, %v1825
  %v1827 = vpop.f32.mrf.mxu0
  %1828 = vmatprep.mubr.bf16.mxu0 %v1713
  %1829 = vmatmul.mubr.bf16.gmra.mxu0 %v1592
  %v1830 = vpop.f32.mrf.mxu0
  %v1831 = vadd.f32 %v1470, %v1830
  %v1832 = vpop.f32.mrf.mxu0
  %v1833 = vpop.f32.mrf.mxu0
  %v1834 = vadd.f32 %v1473, %v1833
  %v1835 = vpop.f32.mrf.mxu0
  %1836 = vmatprep.mubr.bf16.mxu0 %v1716
  %1837 = vmatmul.mubr.bf16.gmra.mxu0 %v1594
  %v1838 = vpop.f32.mrf.mxu0
  %v1839 = vadd.f32 %v1478, %v1838
  %v1840 = vpop.f32.mrf.mxu0
  %v1841 = vpop.f32.mrf.mxu0
  %v1842 = vadd.f32 %v1481, %v1841
  %v1843 = vpop.f32.mrf.mxu0
  %1844 = vmatprep.mubr.bf16.mxu0 %v1719
  %1845 = vmatmul.mubr.bf16.gmra.mxu0 %v1596
  %v1846 = vpop.f32.mrf.mxu0
  %v1847 = vadd.f32 %v1486, %v1846
  %v1848 = vpop.f32.mrf.mxu0
  %v1849 = vpop.f32.mrf.mxu0
  %v1850 = vadd.f32 %v1489, %v1849
  %v1851 = vpop.f32.mrf.mxu0
  %1852 = vmatprep.mubr.bf16.mxu0 %v1722
  %1853 = vmatmul.mubr.bf16.gmra.mxu0 %v1598
  %v1854 = vpop.f32.mrf.mxu0
  %v1855 = vadd.f32 %v1494, %v1854
  %v1856 = vpop.f32.mrf.mxu0
  %v1857 = vpop.f32.mrf.mxu0
  %v1858 = vpop.f32.mrf.mxu0
  %1859 = vdwg.mxu0
  %v1860 = vld [vmem:[%s1 + $0x6d] sm:$0xff]
  %v1861 = vld [vmem:[%s1 + $0x75] sm:$0xff]
  %v1862 = vld [vmem:[%s1 + $0x7d] sm:$0xff]
  %v1863 = vld [vmem:[%s1 + $0x85] sm:$0xff]
  %v1864 = vld [vmem:[%s1 + $0x8d] sm:$0xff]
  %v1865 = vld [vmem:[%s1 + $0x95] sm:$0xff]
  %v1866 = vld [vmem:[%s1 + $0x9d] sm:$0xff]
  %v1867 = vld [vmem:[%s1 + $0xa5] sm:$0xff]
  %v1868 = vld [vmem:[%s1 + $0xad] sm:$0xff]
  %v1869 = vld [vmem:[%s1 + $0xb5] sm:$0xff]
  %v1870 = vld [vmem:[%s1 + $0xbd] sm:$0xff]
  %v1871 = vld [vmem:[%s1 + $0xc5] sm:$0xff]
  %v1872 = vld [vmem:[%s1 + $0xcd] sm:$0xff]
  %v1873 = vld [vmem:[%s1 + $0xd5] sm:$0xff]
  %v1874 = vld [vmem:[%s1 + $0xdd] sm:$0xff]
  %v1875 = vld [vmem:[%s1 + $0xe5] sm:$0xff]
  %v1876 = vld [vmem:[%s1 + $0xed] sm:$0xff]
  %v1877 = vld [vmem:[%s1 + $0xf5] sm:$0xff]
  %v1878 = vld [vmem:[%s1 + $0xfd] sm:$0xff]
  %v1879 = vld [vmem:[%s1 + $0x105] sm:$0xff]
  %v1880 = vld [vmem:[%s1 + $0x10d] sm:$0xff]
  %v1881 = vld [vmem:[%s1 + $0x115] sm:$0xff]
  %v1882 = vld [vmem:[%s1 + $0x11d] sm:$0xff]
  %v1883 = vld [vmem:[%s1 + $0x125] sm:$0xff]
  %v1884 = vld [vmem:[%s1 + $0x12d] sm:$0xff]
  %v1885 = vpack.c.bf16 %v1861, %v1860
  %v1886 = vpack.c.bf16 %v1863, %v1862
  %v1887 = vpack.c.bf16 %v1865, %v1864
  %v1888 = vpack.c.bf16 %v1867, %v1866
  %v1889 = vpack.c.bf16 %v1869, %v1868
  %v1890 = vpack.c.bf16 %v1871, %v1870
  %v1891 = vpack.c.bf16 %v1873, %v1872
  %v1892 = vpack.c.bf16 %v1875, %v1874
  %v1893 = vpack.c.bf16 %v1877, %v1876
  %v1894 = vpack.c.bf16 %v1879, %v1878
  %v1895 = vpack.c.bf16 %v1881, %v1880
  %v1896 = vpack.c.bf16 %v1883, %v1882
  %v1897 = vpack.c.bf16 %v1884, %v1884
  %v1911 = vunpack.c.l.b16 %v1885
  %v1912 = vunpack.c.h.b16 %v1885
  %v1913 = vunpack.c.l.b16 %v1886
  %v1914 = vunpack.c.h.b16 %v1886
  %v1915 = vunpack.c.l.b16 %v1887
  %v1916 = vunpack.c.h.b16 %v1887
  %v1917 = vunpack.c.l.b16 %v1888
  %v1918 = vunpack.c.h.b16 %v1888
  %v1919 = vunpack.c.l.b16 %v1889
  %v1920 = vunpack.c.h.b16 %v1889
  %v1921 = vunpack.c.l.b16 %v1890
  %v1922 = vunpack.c.h.b16 %v1890
  %v1923 = vunpack.c.l.b16 %v1891
  %v1924 = vunpack.c.h.b16 %v1891
  %v1925 = vunpack.c.l.b16 %v1892
  %v1926 = vunpack.c.h.b16 %v1892
  %v1927 = vunpack.c.l.b16 %v1893
  %v1928 = vunpack.c.h.b16 %v1893
  %v1929 = vunpack.c.l.b16 %v1894
  %v1930 = vunpack.c.h.b16 %v1894
  %v1931 = vunpack.c.l.b16 %v1895
  %v1932 = vunpack.c.h.b16 %v1895
  %v1933 = vunpack.c.l.b16 %v1896
  %v1934 = vunpack.c.h.b16 %v1896
  %v1935 = vunpack.c.l.b16 %v1897
  %v1936 = vpack.c.b16 %v1911, %v1911
  %v1937 = vpack.c.b16 %v1912, %v1912
  %v1938 = vpack.c.b16 %v1913, %v1913
  %v1939 = vpack.c.b16 %v1914, %v1914
  %v1940 = vpack.c.b16 %v1915, %v1915
  %v1941 = vpack.c.b16 %v1916, %v1916
  %v1942 = vpack.c.b16 %v1917, %v1917
  %v1943 = vpack.c.b16 %v1918, %v1918
  %v1944 = vpack.c.b16 %v1919, %v1919
  %v1945 = vpack.c.b16 %v1920, %v1920
  %v1946 = vpack.c.b16 %v1921, %v1921
  %v1947 = vpack.c.b16 %v1922, %v1922
  %v1948 = vpack.c.b16 %v1923, %v1923
  %v1949 = vpack.c.b16 %v1924, %v1924
  %v1950 = vpack.c.b16 %v1925, %v1925
  %v1951 = vpack.c.b16 %v1926, %v1926
  %v1952 = vpack.c.b16 %v1927, %v1927
  %v1953 = vpack.c.b16 %v1928, %v1928
  %v1954 = vpack.c.b16 %v1929, %v1929
  %v1955 = vpack.c.b16 %v1930, %v1930
  %v1956 = vpack.c.b16 %v1931, %v1931
  %v1957 = vpack.c.b16 %v1932, %v1932
  %v1958 = vpack.c.b16 %v1933, %v1933
  %v1959 = vpack.c.b16 %v1934, %v1934
  %v1960 = vpack.c.b16 %v1935, %v1935
  %1986 = vst.msk [vmem:[#allocation2] sm:$0xf] %vm156, %v1936
  %1987 = vst.msk [vmem:[#allocation2 + $0x8] sm:$0xf] %vm156, %v1937
  %1988 = vst.msk [vmem:[#allocation2 + $0x10] sm:$0xf] %vm156, %v1938
  %1989 = vst.msk [vmem:[#allocation2 + $0x18] sm:$0xf] %vm156, %v1939
  %1990 = vst.msk [vmem:[#allocation2 + $0x20] sm:$0xf] %vm156, %v1940
  %1991 = vst.msk [vmem:[#allocation2 + $0x28] sm:$0xf] %vm156, %v1941
  %1992 = vst.msk [vmem:[#allocation2 + $0x30] sm:$0xf] %vm156, %v1942
  %1993 = vst.msk [vmem:[#allocation2 + $0x38] sm:$0xf] %vm156, %v1943
  %1994 = vst.msk [vmem:[#allocation2 + $0x40] sm:$0xf] %vm156, %v1944
  %1995 = vst.msk [vmem:[#allocation2 + $0x48] sm:$0xf] %vm156, %v1945
  %1996 = vst.msk [vmem:[#allocation2 + $0x50] sm:$0xf] %vm156, %v1946
  %1997 = vst.msk [vmem:[#allocation2 + $0x58] sm:$0xf] %vm156, %v1947
  %1998 = vst.msk [vmem:[#allocation2 + $0x60] sm:$0xf] %vm156, %v1948
  %1999 = vst.msk [vmem:[#allocation2 + $0x68] sm:$0xf] %vm156, %v1949
  %2000 = vst.msk [vmem:[#allocation2 + $0x70] sm:$0xf] %vm156, %v1950
  %2001 = vst.msk [vmem:[#allocation2 + $0x78] sm:$0xf] %vm156, %v1951
  %2002 = vst.msk [vmem:[#allocation2 + $0x80] sm:$0xf] %vm156, %v1952
  %2003 = vst.msk [vmem:[#allocation2 + $0x88] sm:$0xf] %vm156, %v1953
  %2004 = vst.msk [vmem:[#allocation2 + $0x90] sm:$0xf] %vm156, %v1954
  %2005 = vst.msk [vmem:[#allocation2 + $0x98] sm:$0xf] %vm156, %v1955
  %2006 = vst.msk [vmem:[#allocation2 + $0xa0] sm:$0xf] %vm156, %v1956
  %2007 = vst.msk [vmem:[#allocation2 + $0xa8] sm:$0xf] %vm156, %v1957
  %2008 = vst.msk [vmem:[#allocation2 + $0xb0] sm:$0xf] %vm156, %v1958
  %2009 = vst.msk [vmem:[#allocation2 + $0xb8] sm:$0xf] %vm156, %v1959
  %2010 = vst.msk [vmem:[#allocation2 + $0xc0] sm:$0xf] %vm156, %v1960
  %v2011 = vld [vmem:[%s1 + $0x6e] sm:$0xff]
  %v2012 = vld [vmem:[%s1 + $0x76] sm:$0xff]
  %v2013 = vld [vmem:[%s1 + $0x7e] sm:$0xff]
  %v2014 = vld [vmem:[%s1 + $0x86] sm:$0xff]
  %v2015 = vld [vmem:[%s1 + $0x8e] sm:$0xff]
  %v2016 = vld [vmem:[%s1 + $0x96] sm:$0xff]
  %v2017 = vld [vmem:[%s1 + $0x9e] sm:$0xff]
  %v2018 = vld [vmem:[%s1 + $0xa6] sm:$0xff]
  %v2019 = vld [vmem:[%s1 + $0xae] sm:$0xff]
  %v2020 = vld [vmem:[%s1 + $0xb6] sm:$0xff]
  %v2021 = vld [vmem:[%s1 + $0xbe] sm:$0xff]
  %v2022 = vld [vmem:[%s1 + $0xc6] sm:$0xff]
  %v2023 = vld [vmem:[%s1 + $0xce] sm:$0xff]
  %v2024 = vld [vmem:[%s1 + $0xd6] sm:$0xff]
  %v2025 = vld [vmem:[%s1 + $0xde] sm:$0xff]
  %v2026 = vld [vmem:[%s1 + $0xe6] sm:$0xff]
  %v2027 = vld [vmem:[%s1 + $0xee] sm:$0xff]
  %v2028 = vld [vmem:[%s1 + $0xf6] sm:$0xff]
  %v2029 = vld [vmem:[%s1 + $0xfe] sm:$0xff]
  %v2030 = vld [vmem:[%s1 + $0x106] sm:$0xff]
  %v2031 = vld [vmem:[%s1 + $0x10e] sm:$0xff]
  %v2032 = vld [vmem:[%s1 + $0x116] sm:$0xff]
  %v2033 = vld [vmem:[%s1 + $0x11e] sm:$0xff]
  %v2034 = vld [vmem:[%s1 + $0x126] sm:$0xff]
  %v2035 = vld [vmem:[%s1 + $0x12e] sm:$0xff]
  %v2036 = vpack.c.bf16 %v2012, %v2011
  %v2037 = vpack.c.bf16 %v2014, %v2013
  %v2038 = vpack.c.bf16 %v2016, %v2015
  %v2039 = vpack.c.bf16 %v2018, %v2017
  %v2040 = vpack.c.bf16 %v2020, %v2019
  %v2041 = vpack.c.bf16 %v2022, %v2021
  %v2042 = vpack.c.bf16 %v2024, %v2023
  %v2043 = vpack.c.bf16 %v2026, %v2025
  %v2044 = vpack.c.bf16 %v2028, %v2027
  %v2045 = vpack.c.bf16 %v2030, %v2029
  %v2046 = vpack.c.bf16 %v2032, %v2031
  %v2047 = vpack.c.bf16 %v2034, %v2033
  %v2048 = vpack.c.bf16 %v2035, %v2035
  %v2062 = vunpack.c.l.b16 %v2036
  %v2063 = vunpack.c.h.b16 %v2036
  %v2064 = vunpack.c.l.b16 %v2037
  %v2065 = vunpack.c.h.b16 %v2037
  %v2066 = vunpack.c.l.b16 %v2038
  %v2067 = vunpack.c.h.b16 %v2038
  %v2068 = vunpack.c.l.b16 %v2039
  %v2069 = vunpack.c.h.b16 %v2039
  %v2070 = vunpack.c.l.b16 %v2040
  %v2071 = vunpack.c.h.b16 %v2040
  %v2072 = vunpack.c.l.b16 %v2041
  %v2073 = vunpack.c.h.b16 %v2041
  %v2074 = vunpack.c.l.b16 %v2042
  %v2075 = vunpack.c.h.b16 %v2042
  %v2076 = vunpack.c.l.b16 %v2043
  %v2077 = vunpack.c.h.b16 %v2043
  %v2078 = vunpack.c.l.b16 %v2044
  %v2079 = vunpack.c.h.b16 %v2044
  %v2080 = vunpack.c.l.b16 %v2045
  %v2081 = vunpack.c.h.b16 %v2045
  %v2082 = vunpack.c.l.b16 %v2046
  %v2083 = vunpack.c.h.b16 %v2046
  %v2084 = vunpack.c.l.b16 %v2047
  %v2085 = vunpack.c.h.b16 %v2047
  %v2086 = vunpack.c.l.b16 %v2048
  %v2087 = vpack.c.b16 %v2062, %v2062
  %v2088 = vpack.c.b16 %v2063, %v2063
  %v2089 = vpack.c.b16 %v2064, %v2064
  %v2090 = vpack.c.b16 %v2065, %v2065
  %v2091 = vpack.c.b16 %v2066, %v2066
  %v2092 = vpack.c.b16 %v2067, %v2067
  %v2093 = vpack.c.b16 %v2068, %v2068
  %v2094 = vpack.c.b16 %v2069, %v2069
  %v2095 = vpack.c.b16 %v2070, %v2070
  %v2096 = vpack.c.b16 %v2071, %v2071
  %v2097 = vpack.c.b16 %v2072, %v2072
  %v2098 = vpack.c.b16 %v2073, %v2073
  %v2099 = vpack.c.b16 %v2074, %v2074
  %v2100 = vpack.c.b16 %v2075, %v2075
  %v2101 = vpack.c.b16 %v2076, %v2076
  %v2102 = vpack.c.b16 %v2077, %v2077
  %v2103 = vpack.c.b16 %v2078, %v2078
  %v2104 = vpack.c.b16 %v2079, %v2079
  %v2105 = vpack.c.b16 %v2080, %v2080
  %v2106 = vpack.c.b16 %v2081, %v2081
  %v2107 = vpack.c.b16 %v2082, %v2082
  %v2108 = vpack.c.b16 %v2083, %v2083
  %v2109 = vpack.c.b16 %v2084, %v2084
  %v2110 = vpack.c.b16 %v2085, %v2085
  %v2111 = vpack.c.b16 %v2086, %v2086
  %2112 = vrot.lane.b32.xlu0 %v2087, 64
  %v2113 = vpop.permute.xlu0 %2112
  %2114 = vrot.lane.b32.xlu0 %v2088, 64
  %v2115 = vpop.permute.xlu0 %2114
  %2116 = vrot.lane.b32.xlu0 %v2089, 64
  %v2117 = vpop.permute.xlu0 %2116
  %2118 = vrot.lane.b32.xlu0 %v2090, 64
  %v2119 = vpop.permute.xlu0 %2118
  %2120 = vrot.lane.b32.xlu0 %v2091, 64
  %v2121 = vpop.permute.xlu0 %2120
  %2122 = vrot.lane.b32.xlu0 %v2092, 64
  %v2123 = vpop.permute.xlu0 %2122
  %2124 = vrot.lane.b32.xlu0 %v2093, 64
  %v2125 = vpop.permute.xlu0 %2124
  %2126 = vrot.lane.b32.xlu0 %v2094, 64
  %v2127 = vpop.permute.xlu0 %2126
  %2128 = vrot.lane.b32.xlu0 %v2095, 64
  %v2129 = vpop.permute.xlu0 %2128
  %2130 = vrot.lane.b32.xlu0 %v2096, 64
  %v2131 = vpop.permute.xlu0 %2130
  %2132 = vrot.lane.b32.xlu0 %v2097, 64
  %v2133 = vpop.permute.xlu0 %2132
  %2134 = vrot.lane.b32.xlu0 %v2098, 64
  %v2135 = vpop.permute.xlu0 %2134
  %2136 = vrot.lane.b32.xlu0 %v2099, 64
  %v2137 = vpop.permute.xlu0 %2136
  %2138 = vrot.lane.b32.xlu0 %v2100, 64
  %v2139 = vpop.permute.xlu0 %2138
  %2140 = vrot.lane.b32.xlu0 %v2101, 64
  %v2141 = vpop.permute.xlu0 %2140
  %2142 = vrot.lane.b32.xlu0 %v2102, 64
  %v2143 = vpop.permute.xlu0 %2142
  %2144 = vrot.lane.b32.xlu0 %v2103, 64
  %v2145 = vpop.permute.xlu0 %2144
  %2146 = vrot.lane.b32.xlu0 %v2104, 64
  %v2147 = vpop.permute.xlu0 %2146
  %2148 = vrot.lane.b32.xlu0 %v2105, 64
  %v2149 = vpop.permute.xlu0 %2148
  %2150 = vrot.lane.b32.xlu0 %v2106, 64
  %v2151 = vpop.permute.xlu0 %2150
  %2152 = vrot.lane.b32.xlu0 %v2107, 64
  %v2153 = vpop.permute.xlu0 %2152
  %2154 = vrot.lane.b32.xlu0 %v2108, 64
  %v2155 = vpop.permute.xlu0 %2154
  %2156 = vrot.lane.b32.xlu0 %v2109, 64
  %v2157 = vpop.permute.xlu0 %2156
  %2158 = vrot.lane.b32.xlu0 %v2110, 64
  %v2159 = vpop.permute.xlu0 %2158
  %2160 = vrot.lane.b32.xlu0 %v2111, 64
  %v2161 = vpop.permute.xlu0 %2160
  %2187 = vst.msk [vmem:[#allocation2] sm:$0xf] %vm358, %v2113
  %2188 = vst.msk [vmem:[#allocation2 + $0x8] sm:$0xf] %vm358, %v2115
  %2189 = vst.msk [vmem:[#allocation2 + $0x10] sm:$0xf] %vm358, %v2117
  %2190 = vst.msk [vmem:[#allocation2 + $0x18] sm:$0xf] %vm358, %v2119
  %2191 = vst.msk [vmem:[#allocation2 + $0x20] sm:$0xf] %vm358, %v2121
  %2192 = vst.msk [vmem:[#allocation2 + $0x28] sm:$0xf] %vm358, %v2123
  %2193 = vst.msk [vmem:[#allocation2 + $0x30] sm:$0xf] %vm358, %v2125
  %2194 = vst.msk [vmem:[#allocation2 + $0x38] sm:$0xf] %vm358, %v2127
  %2195 = vst.msk [vmem:[#allocation2 + $0x40] sm:$0xf] %vm358, %v2129
  %2196 = vst.msk [vmem:[#allocation2 + $0x48] sm:$0xf] %vm358, %v2131
  %2197 = vst.msk [vmem:[#allocation2 + $0x50] sm:$0xf] %vm358, %v2133
  %2198 = vst.msk [vmem:[#allocation2 + $0x58] sm:$0xf] %vm358, %v2135
  %2199 = vst.msk [vmem:[#allocation2 + $0x60] sm:$0xf] %vm358, %v2137
  %2200 = vst.msk [vmem:[#allocation2 + $0x68] sm:$0xf] %vm358, %v2139
  %2201 = vst.msk [vmem:[#allocation2 + $0x70] sm:$0xf] %vm358, %v2141
  %2202 = vst.msk [vmem:[#allocation2 + $0x78] sm:$0xf] %vm358, %v2143
  %2203 = vst.msk [vmem:[#allocation2 + $0x80] sm:$0xf] %vm358, %v2145
  %2204 = vst.msk [vmem:[#allocation2 + $0x88] sm:$0xf] %vm358, %v2147
  %2205 = vst.msk [vmem:[#allocation2 + $0x90] sm:$0xf] %vm358, %v2149
  %2206 = vst.msk [vmem:[#allocation2 + $0x98] sm:$0xf] %vm358, %v2151
  %2207 = vst.msk [vmem:[#allocation2 + $0xa0] sm:$0xf] %vm358, %v2153
  %2208 = vst.msk [vmem:[#allocation2 + $0xa8] sm:$0xf] %vm358, %v2155
  %2209 = vst.msk [vmem:[#allocation2 + $0xb0] sm:$0xf] %vm358, %v2157
  %2210 = vst.msk [vmem:[#allocation2 + $0xb8] sm:$0xf] %vm358, %v2159
  %2211 = vst.msk [vmem:[#allocation2 + $0xc0] sm:$0xf] %vm358, %v2161
  %v2212 = vld [vmem:[%s1 + $0x6f] sm:$0xff]
  %v2213 = vld [vmem:[%s1 + $0x77] sm:$0xff]
  %v2214 = vld [vmem:[%s1 + $0x7f] sm:$0xff]
  %v2215 = vld [vmem:[%s1 + $0x87] sm:$0xff]
  %v2216 = vld [vmem:[%s1 + $0x8f] sm:$0xff]
  %v2217 = vld [vmem:[%s1 + $0x97] sm:$0xff]
  %v2218 = vld [vmem:[%s1 + $0x9f] sm:$0xff]
  %v2219 = vld [vmem:[%s1 + $0xa7] sm:$0xff]
  %v2220 = vld [vmem:[%s1 + $0xaf] sm:$0xff]
  %v2221 = vld [vmem:[%s1 + $0xb7] sm:$0xff]
  %v2222 = vld [vmem:[%s1 + $0xbf] sm:$0xff]
  %v2223 = vld [vmem:[%s1 + $0xc7] sm:$0xff]
  %v2224 = vld [vmem:[%s1 + $0xcf] sm:$0xff]
  %v2225 = vld [vmem:[%s1 + $0xd7] sm:$0xff]
  %v2226 = vld [vmem:[%s1 + $0xdf] sm:$0xff]
  %v2227 = vld [vmem:[%s1 + $0xe7] sm:$0xff]
  %v2228 = vld [vmem:[%s1 + $0xef] sm:$0xff]
  %v2229 = vld [vmem:[%s1 + $0xf7] sm:$0xff]
  %v2230 = vld [vmem:[%s1 + $0xff] sm:$0xff]
  %v2231 = vld [vmem:[%s1 + $0x107] sm:$0xff]
  %v2232 = vld [vmem:[%s1 + $0x10f] sm:$0xff]
  %v2233 = vld [vmem:[%s1 + $0x117] sm:$0xff]
  %v2234 = vld [vmem:[%s1 + $0x11f] sm:$0xff]
  %v2235 = vld [vmem:[%s1 + $0x127] sm:$0xff]
  %v2236 = vld [vmem:[%s1 + $0x12f] sm:$0xff]
  %v2237 = vpack.c.bf16 %v2213, %v2212
  %v2238 = vpack.c.bf16 %v2215, %v2214
  %v2239 = vpack.c.bf16 %v2217, %v2216
  %v2240 = vpack.c.bf16 %v2219, %v2218
  %v2241 = vpack.c.bf16 %v2221, %v2220
  %v2242 = vpack.c.bf16 %v2223, %v2222
  %v2243 = vpack.c.bf16 %v2225, %v2224
  %v2244 = vpack.c.bf16 %v2227, %v2226
  %v2245 = vpack.c.bf16 %v2229, %v2228
  %v2246 = vpack.c.bf16 %v2231, %v2230
  %v2247 = vpack.c.bf16 %v2233, %v2232
  %v2248 = vpack.c.bf16 %v2235, %v2234
  %v2249 = vpack.c.bf16 %v2236, %v2236
  %v2263 = vunpack.c.l.b16 %v2237
  %v2264 = vunpack.c.h.b16 %v2237
  %v2265 = vunpack.c.l.b16 %v2238
  %v2266 = vunpack.c.h.b16 %v2238
  %v2267 = vunpack.c.l.b16 %v2239
  %v2268 = vunpack.c.h.b16 %v2239
  %v2269 = vunpack.c.l.b16 %v2240
  %v2270 = vunpack.c.h.b16 %v2240
  %v2271 = vunpack.c.l.b16 %v2241
  %v2272 = vunpack.c.h.b16 %v2241
  %v2273 = vunpack.c.l.b16 %v2242
  %v2274 = vunpack.c.h.b16 %v2242
  %v2275 = vunpack.c.l.b16 %v2243
  %v2276 = vunpack.c.h.b16 %v2243
  %v2277 = vunpack.c.l.b16 %v2244
  %v2278 = vunpack.c.h.b16 %v2244
  %v2279 = vunpack.c.l.b16 %v2245
  %v2280 = vunpack.c.h.b16 %v2245
  %v2281 = vunpack.c.l.b16 %v2246
  %v2282 = vunpack.c.h.b16 %v2246
  %v2283 = vunpack.c.l.b16 %v2247
  %v2284 = vunpack.c.h.b16 %v2247
  %v2285 = vunpack.c.l.b16 %v2248
  %v2286 = vunpack.c.h.b16 %v2248
  %v2287 = vunpack.c.l.b16 %v2249
  %v2288 = vpack.c.b16 %v2263, %v2263
  %v2289 = vpack.c.b16 %v2264, %v2264
  %v2290 = vpack.c.b16 %v2265, %v2265
  %v2291 = vpack.c.b16 %v2266, %v2266
  %v2292 = vpack.c.b16 %v2267, %v2267
  %v2293 = vpack.c.b16 %v2268, %v2268
  %v2294 = vpack.c.b16 %v2269, %v2269
  %v2295 = vpack.c.b16 %v2270, %v2270
  %v2296 = vpack.c.b16 %v2271, %v2271
  %v2297 = vpack.c.b16 %v2272, %v2272
  %v2298 = vpack.c.b16 %v2273, %v2273
  %v2299 = vpack.c.b16 %v2274, %v2274
  %v2300 = vpack.c.b16 %v2275, %v2275
  %v2301 = vpack.c.b16 %v2276, %v2276
  %v2302 = vpack.c.b16 %v2277, %v2277
  %v2303 = vpack.c.b16 %v2278, %v2278
  %v2304 = vpack.c.b16 %v2279, %v2279
  %v2305 = vpack.c.b16 %v2280, %v2280
  %v2306 = vpack.c.b16 %v2281, %v2281
  %v2307 = vpack.c.b16 %v2282, %v2282
  %v2308 = vpack.c.b16 %v2283, %v2283
  %v2309 = vpack.c.b16 %v2284, %v2284
  %v2310 = vpack.c.b16 %v2285, %v2285
  %v2311 = vpack.c.b16 %v2286, %v2286
  %v2312 = vpack.c.b16 %v2287, %v2287
  %2338 = vst.msk [vmem:[#allocation2 + $0x4] sm:$0xf] %vm156, %v2288
  %2339 = vst.msk [vmem:[#allocation2 + $0xc] sm:$0xf] %vm156, %v2289
  %2340 = vst.msk [vmem:[#allocation2 + $0x14] sm:$0xf] %vm156, %v2290
  %2341 = vst.msk [vmem:[#allocation2 + $0x1c] sm:$0xf] %vm156, %v2291
  %2342 = vst.msk [vmem:[#allocation2 + $0x24] sm:$0xf] %vm156, %v2292
  %2343 = vst.msk [vmem:[#allocation2 + $0x2c] sm:$0xf] %vm156, %v2293
  %2344 = vst.msk [vmem:[#allocation2 + $0x34] sm:$0xf] %vm156, %v2294
  %2345 = vst.msk [vmem:[#allocation2 + $0x3c] sm:$0xf] %vm156, %v2295
  %2346 = vst.msk [vmem:[#allocation2 + $0x44] sm:$0xf] %vm156, %v2296
  %2347 = vst.msk [vmem:[#allocation2 + $0x4c] sm:$0xf] %vm156, %v2297
  %2348 = vst.msk [vmem:[#allocation2 + $0x54] sm:$0xf] %vm156, %v2298
  %2349 = vst.msk [vmem:[#allocation2 + $0x5c] sm:$0xf] %vm156, %v2299
  %2350 = vst.msk [vmem:[#allocation2 + $0x64] sm:$0xf] %vm156, %v2300
  %2351 = vst.msk [vmem:[#allocation2 + $0x6c] sm:$0xf] %vm156, %v2301
  %2352 = vst.msk [vmem:[#allocation2 + $0x74] sm:$0xf] %vm156, %v2302
  %2353 = vst.msk [vmem:[#allocation2 + $0x7c] sm:$0xf] %vm156, %v2303
  %2354 = vst.msk [vmem:[#allocation2 + $0x84] sm:$0xf] %vm156, %v2304
  %2355 = vst.msk [vmem:[#allocation2 + $0x8c] sm:$0xf] %vm156, %v2305
  %2356 = vst.msk [vmem:[#allocation2 + $0x94] sm:$0xf] %vm156, %v2306
  %2357 = vst.msk [vmem:[#allocation2 + $0x9c] sm:$0xf] %vm156, %v2307
  %2358 = vst.msk [vmem:[#allocation2 + $0xa4] sm:$0xf] %vm156, %v2308
  %2359 = vst.msk [vmem:[#allocation2 + $0xac] sm:$0xf] %vm156, %v2309
  %2360 = vst.msk [vmem:[#allocation2 + $0xb4] sm:$0xf] %vm156, %v2310
  %2361 = vst.msk [vmem:[#allocation2 + $0xbc] sm:$0xf] %vm156, %v2311
  %2362 = vst.msk [vmem:[#allocation2 + $0xc4] sm:$0xf] %vm156, %v2312
  %v2363 = vld [vmem:[#allocation2] sm:$0xff]
  %v2364 = vld [vmem:[#allocation2 + $0x8] sm:$0xff]
  %v2365 = vld [vmem:[#allocation2 + $0x10] sm:$0xff]
  %v2366 = vld [vmem:[#allocation2 + $0x18] sm:$0xff]
  %v2367 = vld [vmem:[#allocation2 + $0x20] sm:$0xff]
  %v2368 = vld [vmem:[#allocation2 + $0x28] sm:$0xff]
  %v2369 = vld [vmem:[#allocation2 + $0x30] sm:$0xff]
  %v2370 = vld [vmem:[#allocation2 + $0x38] sm:$0xff]
  %v2371 = vld [vmem:[#allocation2 + $0x40] sm:$0xff]
  %v2372 = vld [vmem:[#allocation2 + $0x48] sm:$0xff]
  %v2373 = vld [vmem:[#allocation2 + $0x50] sm:$0xff]
  %v2374 = vld [vmem:[#allocation2 + $0x58] sm:$0xff]
  %v2375 = vld [vmem:[#allocation2 + $0x60] sm:$0xff]
  %v2376 = vld [vmem:[#allocation2 + $0x68] sm:$0xff]
  %v2377 = vld [vmem:[#allocation2 + $0x70] sm:$0xff]
  %v2378 = vld [vmem:[#allocation2 + $0x78] sm:$0xff]
  %v2379 = vld [vmem:[#allocation2 + $0x80] sm:$0xff]
  %v2380 = vld [vmem:[#allocation2 + $0x88] sm:$0xff]
  %v2381 = vld [vmem:[#allocation2 + $0x90] sm:$0xff]
  %v2382 = vld [vmem:[#allocation2 + $0x98] sm:$0xff]
  %v2383 = vld [vmem:[#allocation2 + $0xa0] sm:$0xff]
  %v2384 = vld [vmem:[#allocation2 + $0xa8] sm:$0xff]
  %v2385 = vld [vmem:[#allocation2 + $0xb0] sm:$0xff]
  %v2386 = vld [vmem:[#allocation2 + $0xb8] sm:$0xff]
  %v2387 = vld [vmem:[#allocation2 + $0xc0] sm:$0xff]
  %s2388 = scalar_lea.vmem %s3, 192
  %v2389 = vld [vmem:[%s2388] sm:$0xf]
  %v2390 = vld [vmem:[%s2388 + $0x4] sm:$0xf]
  %v2391 = vld [vmem:[%s2388 + $0x8] sm:$0xf]
  %v2392 = vld [vmem:[%s2388 + $0xc] sm:$0xf]
  %v2393 = vld [vmem:[%s2388 + $0x10] sm:$0xf]
  %v2394 = vld [vmem:[%s2388 + $0x14] sm:$0xf]
  %v2395 = vld [vmem:[%s2388 + $0x18] sm:$0xf]
  %v2396 = vld [vmem:[%s2388 + $0x1c] sm:$0xf]
  %v2397 = vld [vmem:[%s2388 + $0x20] sm:$0xf]
  %v2398 = vld [vmem:[%s2388 + $0x24] sm:$0xf]
  %v2399 = vld [vmem:[%s2388 + $0x28] sm:$0xf]
  %v2400 = vld [vmem:[%s2388 + $0x2c] sm:$0xf]
  %v2401 = vld [vmem:[%s2388 + $0x30] sm:$0xf]
  %v2402 = vld [vmem:[%s2388 + $0x34] sm:$0xf]
  %v2403 = vld [vmem:[%s2388 + $0x38] sm:$0xf]
  %v2404 = vld [vmem:[%s2388 + $0x3c] sm:$0xf]
  %v2405 = vld [vmem:[%s2388 + $0x40] sm:$0xf]
  %v2406 = vld [vmem:[%s2388 + $0x44] sm:$0xf]
  %v2407 = vld [vmem:[%s2388 + $0x48] sm:$0xf]
  %v2408 = vld [vmem:[%s2388 + $0x4c] sm:$0xf]
  %v2409 = vld [vmem:[%s2388 + $0x50] sm:$0xf]
  %v2410 = vld [vmem:[%s2388 + $0x54] sm:$0xf]
  %v2411 = vld [vmem:[%s2388 + $0x58] sm:$0xf]
  %v2412 = vld [vmem:[%s2388 + $0x5c] sm:$0xf]
  %v2438 = vunpack.c.l.b16 %v2363
  %v2439 = vunpack.c.h.b16 %v2363
  %v2440 = vunpack.c.l.b16 %v2364
  %v2441 = vunpack.c.h.b16 %v2364
  %v2442 = vunpack.c.l.b16 %v2365
  %v2443 = vunpack.c.h.b16 %v2365
  %v2444 = vunpack.c.l.b16 %v2366
  %v2445 = vunpack.c.h.b16 %v2366
  %v2446 = vunpack.c.l.b16 %v2367
  %v2447 = vunpack.c.h.b16 %v2367
  %v2448 = vunpack.c.l.b16 %v2368
  %v2449 = vunpack.c.h.b16 %v2368
  %v2450 = vunpack.c.l.b16 %v2369
  %v2451 = vunpack.c.h.b16 %v2369
  %v2452 = vunpack.c.l.b16 %v2370
  %v2453 = vunpack.c.h.b16 %v2370
  %v2454 = vunpack.c.l.b16 %v2371
  %v2455 = vunpack.c.h.b16 %v2371
  %v2456 = vunpack.c.l.b16 %v2372
  %v2457 = vunpack.c.h.b16 %v2372
  %v2458 = vunpack.c.l.b16 %v2373
  %v2459 = vunpack.c.h.b16 %v2373
  %v2460 = vunpack.c.l.b16 %v2374
  %v2461 = vunpack.c.h.b16 %v2374
  %v2462 = vunpack.c.l.b16 %v2375
  %v2463 = vunpack.c.h.b16 %v2375
  %v2464 = vunpack.c.l.b16 %v2376
  %v2465 = vunpack.c.h.b16 %v2376
  %v2466 = vunpack.c.l.b16 %v2377
  %v2467 = vunpack.c.h.b16 %v2377
  %v2468 = vunpack.c.l.b16 %v2378
  %v2469 = vunpack.c.h.b16 %v2378
  %v2470 = vunpack.c.l.b16 %v2379
  %v2471 = vunpack.c.h.b16 %v2379
  %v2472 = vunpack.c.l.b16 %v2380
  %v2473 = vunpack.c.h.b16 %v2380
  %v2474 = vunpack.c.l.b16 %v2381
  %v2475 = vunpack.c.h.b16 %v2381
  %v2476 = vunpack.c.l.b16 %v2382
  %v2477 = vunpack.c.h.b16 %v2382
  %v2478 = vunpack.c.l.b16 %v2383
  %v2479 = vunpack.c.h.b16 %v2383
  %v2480 = vunpack.c.l.b16 %v2384
  %v2481 = vunpack.c.h.b16 %v2384
  %v2482 = vunpack.c.l.b16 %v2385
  %v2483 = vunpack.c.h.b16 %v2385
  %v2484 = vunpack.c.l.b16 %v2386
  %v2485 = vunpack.c.h.b16 %v2386
  %v2486 = vunpack.c.l.b16 %v2387
  %v2487 = vunpack.c.h.b16 %v2387
  %v2488 = vpack.c.b16 %v2440, %v2438
  %v2489 = vpack.c.b16 %v2441, %v2439
  %v2490 = vpack.c.b16 %v2444, %v2442
  %v2491 = vpack.c.b16 %v2445, %v2443
  %v2492 = vpack.c.b16 %v2448, %v2446
  %v2493 = vpack.c.b16 %v2449, %v2447
  %v2494 = vpack.c.b16 %v2452, %v2450
  %v2495 = vpack.c.b16 %v2453, %v2451
  %v2496 = vpack.c.b16 %v2456, %v2454
  %v2497 = vpack.c.b16 %v2457, %v2455
  %v2498 = vpack.c.b16 %v2460, %v2458
  %v2499 = vpack.c.b16 %v2461, %v2459
  %v2500 = vpack.c.b16 %v2464, %v2462
  %v2501 = vpack.c.b16 %v2465, %v2463
  %v2502 = vpack.c.b16 %v2468, %v2466
  %v2503 = vpack.c.b16 %v2469, %v2467
  %v2504 = vpack.c.b16 %v2472, %v2470
  %v2505 = vpack.c.b16 %v2473, %v2471
  %v2506 = vpack.c.b16 %v2476, %v2474
  %v2507 = vpack.c.b16 %v2477, %v2475
  %v2508 = vpack.c.b16 %v2480, %v2478
  %v2509 = vpack.c.b16 %v2481, %v2479
  %v2510 = vpack.c.b16 %v2484, %v2482
  %v2511 = vpack.c.b16 %v2485, %v2483
  %v2512 = vpack.c.b16 %v2486, %v2486
  %v2513 = vpack.c.b16 %v2487, %v2487
  %v2551 = vunpack.c.l.b16 %v2389
  %v2552 = vunpack.c.l.b16 %v2390
  %v2553 = vunpack.c.l.b16 %v2391
  %v2554 = vunpack.c.l.b16 %v2392
  %v2555 = vunpack.c.l.b16 %v2393
  %v2556 = vunpack.c.l.b16 %v2394
  %v2557 = vunpack.c.l.b16 %v2395
  %v2558 = vunpack.c.l.b16 %v2396
  %v2559 = vunpack.c.l.b16 %v2397
  %v2560 = vunpack.c.l.b16 %v2398
  %v2561 = vunpack.c.l.b16 %v2399
  %v2562 = vunpack.c.l.b16 %v2400
  %v2563 = vunpack.c.l.b16 %v2401
  %v2564 = vunpack.c.l.b16 %v2402
  %v2565 = vunpack.c.l.b16 %v2403
  %v2566 = vunpack.c.l.b16 %v2404
  %v2567 = vunpack.c.l.b16 %v2405
  %v2568 = vunpack.c.l.b16 %v2406
  %v2569 = vunpack.c.l.b16 %v2407
  %v2570 = vunpack.c.l.b16 %v2408
  %v2571 = vunpack.c.l.b16 %v2409
  %v2572 = vunpack.c.l.b16 %v2410
  %v2573 = vunpack.c.l.b16 %v2411
  %v2574 = vunpack.c.l.b16 %v2412
  %v2575 = vpack.c.b16 %v2552, %v2551
  %v2576 = vpack.c.b16 %v2554, %v2553
  %v2577 = vpack.c.b16 %v2556, %v2555
  %v2578 = vpack.c.b16 %v2558, %v2557
  %v2579 = vpack.c.b16 %v2560, %v2559
  %v2580 = vpack.c.b16 %v2562, %v2561
  %v2581 = vpack.c.b16 %v2564, %v2563
  %v2582 = vpack.c.b16 %v2566, %v2565
  %v2583 = vpack.c.b16 %v2568, %v2567
  %v2584 = vpack.c.b16 %v2570, %v2569
  %v2585 = vpack.c.b16 %v2572, %v2571
  %v2586 = vpack.c.b16 %v2574, %v2573
  %v2600 = vsel %vm1323, %v2489, 0
  %v2603 = vsel %vm1323, %v2491, 0
  %v2606 = vsel %vm1323, %v2493, 0
  %v2609 = vsel %vm1323, %v2495, 0
  %v2612 = vsel %vm1323, %v2497, 0
  %v2615 = vsel %vm1323, %v2499, 0
  %v2618 = vsel %vm1323, %v2501, 0
  %v2621 = vsel %vm1323, %v2503, 0
  %v2624 = vsel %vm1323, %v2505, 0
  %v2627 = vsel %vm1323, %v2507, 0
  %v2630 = vsel %vm1323, %v2509, 0
  %v2633 = vsel %vm1323, %v2511, 0
  %v2636 = vsel %vm1323, %v2513, 0
  %2638 = vmatprep.subr.bf16.mxu0 0
  %2639 = vmatpush1.bf16.msra.mxu0 %v2582
  %2640 = vmatprep.subr.bf16.mxu0 0
  %2641 = vmatpush1.bf16.msra.mxu0 %v2581
  %2642 = vmatprep.subr.bf16.mxu0 0
  %2643 = vmatpush1.bf16.msra.mxu0 %v2580
  %2644 = vmatprep.subr.bf16.mxu0 0
  %2645 = vmatpush1.bf16.msra.mxu0 %v2579
  %2646 = vmatprep.subr.bf16.mxu0 0
  %2647 = vmatpush1.bf16.msra.mxu0 %v2578
  %2648 = vmatprep.subr.bf16.mxu0 0
  %2649 = vmatpush1.bf16.msra.mxu0 %v2577
  %2650 = vmatprep.subr.bf16.mxu0 0
  %2651 = vmatpush1.bf16.msra.mxu0 %v2576
  %2652 = vmatprep.subr.bf16.mxu0 0
  %2653 = vmatpush1.bf16.msra.mxu0 %v2575
  %2654 = vmatprep.subr.bf16.mxu0 0
  %2655 = vmatpush2.bf16.msra.mxu0 0
  %2656 = vmatprep.subr.bf16.mxu0 0
  %2657 = vmatpush2.bf16.msra.mxu0 0
  %2658 = vmatprep.subr.bf16.mxu0 0
  %2659 = vmatpush2.bf16.msra.mxu0 0
  %2660 = vmatprep.subr.bf16.mxu0 0
  %2661 = vmatpush2.bf16.msra.mxu0 0
  %2662 = vmatprep.subr.bf16.mxu0 0
  %2663 = vmatpush2.bf16.msra.mxu0 %v2586
  %2664 = vmatprep.subr.bf16.mxu0 0
  %2665 = vmatpush2.bf16.msra.mxu0 %v2585
  %2666 = vmatprep.subr.bf16.mxu0 0
  %2667 = vmatpush2.bf16.msra.mxu0 %v2584
  %2668 = vmatprep.subr.bf16.mxu0 0
  %2669 = vmatpush2.bf16.msra.mxu0 %v2583
  %2670 = vmatprep.mubr.bf16.mxu0 %v2600
  %2671 = vmatmul.mubr.bf16.gmra.mxu0 %v2488
  %v2672 = vpop.f32.mrf.mxu0
  %v2673 = vadd.f32 0.0, %v2672
  %v2674 = vpop.f32.mrf.mxu0
  %v2675 = vpop.f32.mrf.mxu0
  %v2676 = vadd.f32 0.0, %v2675
  %v2677 = vpop.f32.mrf.mxu0
  %2678 = vmatprep.mubr.bf16.mxu0 %v2603
  %2679 = vmatmul.mubr.bf16.gmra.mxu0 %v2490
  %v2680 = vpop.f32.mrf.mxu0
  %v2681 = vadd.f32 0.0, %v2680
  %v2682 = vpop.f32.mrf.mxu0
  %v2683 = vpop.f32.mrf.mxu0
  %v2684 = vadd.f32 0.0, %v2683
  %v2685 = vpop.f32.mrf.mxu0
  %2686 = vmatprep.mubr.bf16.mxu0 %v2606
  %2687 = vmatmul.mubr.bf16.gmra.mxu0 %v2492
  %v2688 = vpop.f32.mrf.mxu0
  %v2689 = vadd.f32 0.0, %v2688
  %v2690 = vpop.f32.mrf.mxu0
  %v2691 = vpop.f32.mrf.mxu0
  %v2692 = vadd.f32 0.0, %v2691
  %v2693 = vpop.f32.mrf.mxu0
  %2694 = vmatprep.mubr.bf16.mxu0 %v2609
  %2695 = vmatmul.mubr.bf16.gmra.mxu0 %v2494
  %v2696 = vpop.f32.mrf.mxu0
  %v2697 = vadd.f32 0.0, %v2696
  %v2698 = vpop.f32.mrf.mxu0
  %v2699 = vpop.f32.mrf.mxu0
  %v2700 = vadd.f32 0.0, %v2699
  %v2701 = vpop.f32.mrf.mxu0
  %2702 = vmatprep.mubr.bf16.mxu0 %v2612
  %2703 = vmatmul.mubr.bf16.gmra.mxu0 %v2496
  %v2704 = vpop.f32.mrf.mxu0
  %v2705 = vadd.f32 0.0, %v2704
  %v2706 = vpop.f32.mrf.mxu0
  %v2707 = vpop.f32.mrf.mxu0
  %v2708 = vadd.f32 0.0, %v2707
  %v2709 = vpop.f32.mrf.mxu0
  %2710 = vmatprep.mubr.bf16.mxu0 %v2615
  %2711 = vmatmul.mubr.bf16.gmra.mxu0 %v2498
  %v2712 = vpop.f32.mrf.mxu0
  %v2713 = vadd.f32 0.0, %v2712
  %v2714 = vpop.f32.mrf.mxu0
  %v2715 = vpop.f32.mrf.mxu0
  %v2716 = vadd.f32 0.0, %v2715
  %v2717 = vpop.f32.mrf.mxu0
  %2718 = vmatprep.mubr.bf16.mxu0 %v2618
  %2719 = vmatmul.mubr.bf16.gmra.mxu0 %v2500
  %v2720 = vpop.f32.mrf.mxu0
  %v2721 = vadd.f32 0.0, %v2720
  %v2722 = vpop.f32.mrf.mxu0
  %v2723 = vpop.f32.mrf.mxu0
  %v2724 = vadd.f32 0.0, %v2723
  %v2725 = vpop.f32.mrf.mxu0
  %2726 = vmatprep.mubr.bf16.mxu0 %v2621
  %2727 = vmatmul.mubr.bf16.gmra.mxu0 %v2502
  %v2728 = vpop.f32.mrf.mxu0
  %v2729 = vadd.f32 0.0, %v2728
  %v2730 = vpop.f32.mrf.mxu0
  %v2731 = vpop.f32.mrf.mxu0
  %v2732 = vadd.f32 0.0, %v2731
  %v2733 = vpop.f32.mrf.mxu0
  %2734 = vmatprep.mubr.bf16.mxu0 %v2624
  %2735 = vmatmul.mubr.bf16.gmra.mxu0 %v2504
  %v2736 = vpop.f32.mrf.mxu0
  %v2737 = vadd.f32 0.0, %v2736
  %v2738 = vpop.f32.mrf.mxu0
  %v2739 = vpop.f32.mrf.mxu0
  %v2740 = vadd.f32 0.0, %v2739
  %v2741 = vpop.f32.mrf.mxu0
  %2742 = vmatprep.mubr.bf16.mxu0 %v2627
  %2743 = vmatmul.mubr.bf16.gmra.mxu0 %v2506
  %v2744 = vpop.f32.mrf.mxu0
  %v2745 = vadd.f32 0.0, %v2744
  %v2746 = vpop.f32.mrf.mxu0
  %v2747 = vpop.f32.mrf.mxu0
  %v2748 = vadd.f32 0.0, %v2747
  %v2749 = vpop.f32.mrf.mxu0
  %2750 = vmatprep.mubr.bf16.mxu0 %v2630
  %2751 = vmatmul.mubr.bf16.gmra.mxu0 %v2508
  %v2752 = vpop.f32.mrf.mxu0
  %v2753 = vadd.f32 0.0, %v2752
  %v2754 = vpop.f32.mrf.mxu0
  %v2755 = vpop.f32.mrf.mxu0
  %v2756 = vadd.f32 0.0, %v2755
  %v2757 = vpop.f32.mrf.mxu0
  %2758 = vmatprep.mubr.bf16.mxu0 %v2633
  %2759 = vmatmul.mubr.bf16.gmra.mxu0 %v2510
  %v2760 = vpop.f32.mrf.mxu0
  %v2761 = vadd.f32 0.0, %v2760
  %v2762 = vpop.f32.mrf.mxu0
  %v2763 = vpop.f32.mrf.mxu0
  %v2764 = vadd.f32 0.0, %v2763
  %v2765 = vpop.f32.mrf.mxu0
  %2766 = vmatprep.mubr.bf16.mxu0 %v2636
  %2767 = vmatmul.mubr.bf16.gmra.mxu0 %v2512
  %v2768 = vpop.f32.mrf.mxu0
  %v2769 = vadd.f32 0.0, %v2768
  %v2770 = vpop.f32.mrf.mxu0
  %v2771 = vpop.f32.mrf.mxu0
  %v2772 = vpop.f32.mrf.mxu0
  %2773 = vdwg.mxu0
  %v2774 = vadd.f32 %v1759, %v2673
  %v2775 = vadd.f32 %v1762, %v2676
  %v2776 = vadd.f32 %v1767, %v2681
  %v2777 = vadd.f32 %v1770, %v2684
  %v2778 = vadd.f32 %v1775, %v2689
  %v2779 = vadd.f32 %v1778, %v2692
  %v2780 = vadd.f32 %v1783, %v2697
  %v2781 = vadd.f32 %v1786, %v2700
  %v2782 = vadd.f32 %v1791, %v2705
  %v2783 = vadd.f32 %v1794, %v2708
  %v2784 = vadd.f32 %v1799, %v2713
  %v2785 = vadd.f32 %v1802, %v2716
  %v2786 = vadd.f32 %v1807, %v2721
  %v2787 = vadd.f32 %v1810, %v2724
  %v2788 = vadd.f32 %v1815, %v2729
  %v2789 = vadd.f32 %v1818, %v2732
  %v2790 = vadd.f32 %v1823, %v2737
  %v2791 = vadd.f32 %v1826, %v2740
  %v2792 = vadd.f32 %v1831, %v2745
  %v2793 = vadd.f32 %v1834, %v2748
  %v2794 = vadd.f32 %v1839, %v2753
  %v2795 = vadd.f32 %v1842, %v2756
  %v2796 = vadd.f32 %v1847, %v2761
  %v2797 = vadd.f32 %v1850, %v2764
  %v2798 = vadd.f32 %v1855, %v2769
  %v2799 = vld [vmem:[%s2 + $0x59] sm:$0xff]
  %v2800 = vld [vmem:[%s2 + $0x61] sm:$0xff]
  %v2801 = vld [vmem:[%s2 + $0x69] sm:$0xff]
  %v2802 = vld [vmem:[%s2 + $0x71] sm:$0xff]
  %v2803 = vld [vmem:[%s2 + $0x79] sm:$0xff]
  %v2804 = vld [vmem:[%s2 + $0x81] sm:$0xff]
  %v2805 = vld [vmem:[%s2 + $0x89] sm:$0xff]
  %v2806 = vld [vmem:[%s2 + $0x91] sm:$0xff]
  %v2807 = vld [vmem:[%s2 + $0x99] sm:$0xff]
  %v2808 = vld [vmem:[%s2 + $0xa1] sm:$0xff]
  %v2809 = vld [vmem:[%s2 + $0xa9] sm:$0xff]
  %v2810 = vld [vmem:[%s2 + $0xb1] sm:$0xff]
  %v2811 = vld [vmem:[%s2 + $0xb9] sm:$0xff]
  %v2812 = vld [vmem:[%s2 + $0xc1] sm:$0xff]
  %v2813 = vld [vmem:[%s2 + $0xc9] sm:$0xff]
  %v2814 = vld [vmem:[%s2 + $0xd1] sm:$0xff]
  %v2815 = vld [vmem:[%s2 + $0xd9] sm:$0xff]
  %v2816 = vld [vmem:[%s2 + $0xe1] sm:$0xff]
  %v2817 = vld [vmem:[%s2 + $0xe9] sm:$0xff]
  %v2818 = vld [vmem:[%s2 + $0xf1] sm:$0xff]
  %v2819 = vld [vmem:[%s2 + $0xf9] sm:$0xff]
  %v2820 = vld [vmem:[%s2 + $0x101] sm:$0xff]
  %v2821 = vld [vmem:[%s2 + $0x109] sm:$0xff]
  %v2822 = vld [vmem:[%s2 + $0x111] sm:$0xff]
  %v2823 = vld [vmem:[%s2 + $0x119] sm:$0xff]
  %v2824 = vpack.c.bf16 %v2800, %v2799
  %v2825 = vpack.c.bf16 %v2802, %v2801
  %v2826 = vpack.c.bf16 %v2804, %v2803
  %v2827 = vpack.c.bf16 %v2806, %v2805
  %v2828 = vpack.c.bf16 %v2808, %v2807
  %v2829 = vpack.c.bf16 %v2810, %v2809
  %v2830 = vpack.c.bf16 %v2812, %v2811
  %v2831 = vpack.c.bf16 %v2814, %v2813
  %v2832 = vpack.c.bf16 %v2816, %v2815
  %v2833 = vpack.c.bf16 %v2818, %v2817
  %v2834 = vpack.c.bf16 %v2820, %v2819
  %v2835 = vpack.c.bf16 %v2822, %v2821
  %v2836 = vpack.c.bf16 %v2823, %v2823
  %v2850 = vunpack.c.l.b16 %v2824
  %v2851 = vunpack.c.h.b16 %v2824
  %v2852 = vunpack.c.l.b16 %v2825
  %v2853 = vunpack.c.h.b16 %v2825
  %v2854 = vunpack.c.l.b16 %v2826
  %v2855 = vunpack.c.h.b16 %v2826
  %v2856 = vunpack.c.l.b16 %v2827
  %v2857 = vunpack.c.h.b16 %v2827
  %v2858 = vunpack.c.l.b16 %v2828
  %v2859 = vunpack.c.h.b16 %v2828
  %v2860 = vunpack.c.l.b16 %v2829
  %v2861 = vunpack.c.h.b16 %v2829
  %v2862 = vunpack.c.l.b16 %v2830
  %v2863 = vunpack.c.h.b16 %v2830
  %v2864 = vunpack.c.l.b16 %v2831
  %v2865 = vunpack.c.h.b16 %v2831
  %v2866 = vunpack.c.l.b16 %v2832
  %v2867 = vunpack.c.h.b16 %v2832
  %v2868 = vunpack.c.l.b16 %v2833
  %v2869 = vunpack.c.h.b16 %v2833
  %v2870 = vunpack.c.l.b16 %v2834
  %v2871 = vunpack.c.h.b16 %v2834
  %v2872 = vunpack.c.l.b16 %v2835
  %v2873 = vunpack.c.h.b16 %v2835
  %v2874 = vunpack.c.l.b16 %v2836
  %v2875 = vpack.c.b16 %v2850, %v2850
  %v2876 = vpack.c.b16 %v2851, %v2851
  %v2877 = vpack.c.b16 %v2852, %v2852
  %v2878 = vpack.c.b16 %v2853, %v2853
  %v2879 = vpack.c.b16 %v2854, %v2854
  %v2880 = vpack.c.b16 %v2855, %v2855
  %v2881 = vpack.c.b16 %v2856, %v2856
  %v2882 = vpack.c.b16 %v2857, %v2857
  %v2883 = vpack.c.b16 %v2858, %v2858
  %v2884 = vpack.c.b16 %v2859, %v2859
  %v2885 = vpack.c.b16 %v2860, %v2860
  %v2886 = vpack.c.b16 %v2861, %v2861
  %v2887 = vpack.c.b16 %v2862, %v2862
  %v2888 = vpack.c.b16 %v2863, %v2863
  %v2889 = vpack.c.b16 %v2864, %v2864
  %v2890 = vpack.c.b16 %v2865, %v2865
  %v2891 = vpack.c.b16 %v2866, %v2866
  %v2892 = vpack.c.b16 %v2867, %v2867
  %v2893 = vpack.c.b16 %v2868, %v2868
  %v2894 = vpack.c.b16 %v2869, %v2869
  %v2895 = vpack.c.b16 %v2870, %v2870
  %v2896 = vpack.c.b16 %v2871, %v2871
  %v2897 = vpack.c.b16 %v2872, %v2872
  %v2898 = vpack.c.b16 %v2873, %v2873
  %v2899 = vpack.c.b16 %v2874, %v2874
  %2925 = vst.msk [vmem:[#allocation2] sm:$0xf] %vm156, %v2875
  %2926 = vst.msk [vmem:[#allocation2 + $0x8] sm:$0xf] %vm156, %v2876
  %2927 = vst.msk [vmem:[#allocation2 + $0x10] sm:$0xf] %vm156, %v2877
  %2928 = vst.msk [vmem:[#allocation2 + $0x18] sm:$0xf] %vm156, %v2878
  %2929 = vst.msk [vmem:[#allocation2 + $0x20] sm:$0xf] %vm156, %v2879
  %2930 = vst.msk [vmem:[#allocation2 + $0x28] sm:$0xf] %vm156, %v2880
  %2931 = vst.msk [vmem:[#allocation2 + $0x30] sm:$0xf] %vm156, %v2881
  %2932 = vst.msk [vmem:[#allocation2 + $0x38] sm:$0xf] %vm156, %v2882
  %2933 = vst.msk [vmem:[#allocation2 + $0x40] sm:$0xf] %vm156, %v2883
  %2934 = vst.msk [vmem:[#allocation2 + $0x48] sm:$0xf] %vm156, %v2884
  %2935 = vst.msk [vmem:[#allocation2 + $0x50] sm:$0xf] %vm156, %v2885
  %2936 = vst.msk [vmem:[#allocation2 + $0x58] sm:$0xf] %vm156, %v2886
  %2937 = vst.msk [vmem:[#allocation2 + $0x60] sm:$0xf] %vm156, %v2887
  %2938 = vst.msk [vmem:[#allocation2 + $0x68] sm:$0xf] %vm156, %v2888
  %2939 = vst.msk [vmem:[#allocation2 + $0x70] sm:$0xf] %vm156, %v2889
  %2940 = vst.msk [vmem:[#allocation2 + $0x78] sm:$0xf] %vm156, %v2890
  %2941 = vst.msk [vmem:[#allocation2 + $0x80] sm:$0xf] %vm156, %v2891
  %2942 = vst.msk [vmem:[#allocation2 + $0x88] sm:$0xf] %vm156, %v2892
  %2943 = vst.msk [vmem:[#allocation2 + $0x90] sm:$0xf] %vm156, %v2893
  %2944 = vst.msk [vmem:[#allocation2 + $0x98] sm:$0xf] %vm156, %v2894
  %2945 = vst.msk [vmem:[#allocation2 + $0xa0] sm:$0xf] %vm156, %v2895
  %2946 = vst.msk [vmem:[#allocation2 + $0xa8] sm:$0xf] %vm156, %v2896
  %2947 = vst.msk [vmem:[#allocation2 + $0xb0] sm:$0xf] %vm156, %v2897
  %2948 = vst.msk [vmem:[#allocation2 + $0xb8] sm:$0xf] %vm156, %v2898
  %2949 = vst.msk [vmem:[#allocation2 + $0xc0] sm:$0xf] %vm156, %v2899
  %v2950 = vld [vmem:[%s2 + $0x5a] sm:$0xff]
  %v2951 = vld [vmem:[%s2 + $0x62] sm:$0xff]
  %v2952 = vld [vmem:[%s2 + $0x6a] sm:$0xff]
  %v2953 = vld [vmem:[%s2 + $0x72] sm:$0xff]
  %v2954 = vld [vmem:[%s2 + $0x7a] sm:$0xff]
  %v2955 = vld [vmem:[%s2 + $0x82] sm:$0xff]
  %v2956 = vld [vmem:[%s2 + $0x8a] sm:$0xff]
  %v2957 = vld [vmem:[%s2 + $0x92] sm:$0xff]
  %v2958 = vld [vmem:[%s2 + $0x9a] sm:$0xff]
  %v2959 = vld [vmem:[%s2 + $0xa2] sm:$0xff]
  %v2960 = vld [vmem:[%s2 + $0xaa] sm:$0xff]
  %v2961 = vld [vmem:[%s2 + $0xb2] sm:$0xff]
  %v2962 = vld [vmem:[%s2 + $0xba] sm:$0xff]
  %v2963 = vld [vmem:[%s2 + $0xc2] sm:$0xff]
  %v2964 = vld [vmem:[%s2 + $0xca] sm:$0xff]
  %v2965 = vld [vmem:[%s2 + $0xd2] sm:$0xff]
  %v2966 = vld [vmem:[%s2 + $0xda] sm:$0xff]
  %v2967 = vld [vmem:[%s2 + $0xe2] sm:$0xff]
  %v2968 = vld [vmem:[%s2 + $0xea] sm:$0xff]
  %v2969 = vld [vmem:[%s2 + $0xf2] sm:$0xff]
  %v2970 = vld [vmem:[%s2 + $0xfa] sm:$0xff]
  %v2971 = vld [vmem:[%s2 + $0x102] sm:$0xff]
  %v2972 = vld [vmem:[%s2 + $0x10a] sm:$0xff]
  %v2973 = vld [vmem:[%s2 + $0x112] sm:$0xff]
  %v2974 = vld [vmem:[%s2 + $0x11a] sm:$0xff]
  %v2975 = vpack.c.bf16 %v2951, %v2950
  %v2976 = vpack.c.bf16 %v2953, %v2952
  %v2977 = vpack.c.bf16 %v2955, %v2954
  %v2978 = vpack.c.bf16 %v2957, %v2956
  %v2979 = vpack.c.bf16 %v2959, %v2958
  %v2980 = vpack.c.bf16 %v2961, %v2960
  %v2981 = vpack.c.bf16 %v2963, %v2962
  %v2982 = vpack.c.bf16 %v2965, %v2964
  %v2983 = vpack.c.bf16 %v2967, %v2966
  %v2984 = vpack.c.bf16 %v2969, %v2968
  %v2985 = vpack.c.bf16 %v2971, %v2970
  %v2986 = vpack.c.bf16 %v2973, %v2972
  %v2987 = vpack.c.bf16 %v2974, %v2974
  %v3001 = vunpack.c.l.b16 %v2975
  %v3002 = vunpack.c.h.b16 %v2975
  %v3003 = vunpack.c.l.b16 %v2976
  %v3004 = vunpack.c.h.b16 %v2976
  %v3005 = vunpack.c.l.b16 %v2977
  %v3006 = vunpack.c.h.b16 %v2977
  %v3007 = vunpack.c.l.b16 %v2978
  %v3008 = vunpack.c.h.b16 %v2978
  %v3009 = vunpack.c.l.b16 %v2979
  %v3010 = vunpack.c.h.b16 %v2979
  %v3011 = vunpack.c.l.b16 %v2980
  %v3012 = vunpack.c.h.b16 %v2980
  %v3013 = vunpack.c.l.b16 %v2981
  %v3014 = vunpack.c.h.b16 %v2981
  %v3015 = vunpack.c.l.b16 %v2982
  %v3016 = vunpack.c.h.b16 %v2982
  %v3017 = vunpack.c.l.b16 %v2983
  %v3018 = vunpack.c.h.b16 %v2983
  %v3019 = vunpack.c.l.b16 %v2984
  %v3020 = vunpack.c.h.b16 %v2984
  %v3021 = vunpack.c.l.b16 %v2985
  %v3022 = vunpack.c.h.b16 %v2985
  %v3023 = vunpack.c.l.b16 %v2986
  %v3024 = vunpack.c.h.b16 %v2986
  %v3025 = vunpack.c.l.b16 %v2987
  %v3026 = vpack.c.b16 %v3001, %v3001
  %v3027 = vpack.c.b16 %v3002, %v3002
  %v3028 = vpack.c.b16 %v3003, %v3003
  %v3029 = vpack.c.b16 %v3004, %v3004
  %v3030 = vpack.c.b16 %v3005, %v3005
  %v3031 = vpack.c.b16 %v3006, %v3006
  %v3032 = vpack.c.b16 %v3007, %v3007
  %v3033 = vpack.c.b16 %v3008, %v3008
  %v3034 = vpack.c.b16 %v3009, %v3009
  %v3035 = vpack.c.b16 %v3010, %v3010
  %v3036 = vpack.c.b16 %v3011, %v3011
  %v3037 = vpack.c.b16 %v3012, %v3012
  %v3038 = vpack.c.b16 %v3013, %v3013
  %v3039 = vpack.c.b16 %v3014, %v3014
  %v3040 = vpack.c.b16 %v3015, %v3015
  %v3041 = vpack.c.b16 %v3016, %v3016
  %v3042 = vpack.c.b16 %v3017, %v3017
  %v3043 = vpack.c.b16 %v3018, %v3018
  %v3044 = vpack.c.b16 %v3019, %v3019
  %v3045 = vpack.c.b16 %v3020, %v3020
  %v3046 = vpack.c.b16 %v3021, %v3021
  %v3047 = vpack.c.b16 %v3022, %v3022
  %v3048 = vpack.c.b16 %v3023, %v3023
  %v3049 = vpack.c.b16 %v3024, %v3024
  %v3050 = vpack.c.b16 %v3025, %v3025
  %3051 = vrot.lane.b32.xlu0 %v3026, 64
  %v3052 = vpop.permute.xlu0 %3051
  %3053 = vrot.lane.b32.xlu0 %v3027, 64
  %v3054 = vpop.permute.xlu0 %3053
  %3055 = vrot.lane.b32.xlu0 %v3028, 64
  %v3056 = vpop.permute.xlu0 %3055
  %3057 = vrot.lane.b32.xlu0 %v3029, 64
  %v3058 = vpop.permute.xlu0 %3057
  %3059 = vrot.lane.b32.xlu0 %v3030, 64
  %v3060 = vpop.permute.xlu0 %3059
  %3061 = vrot.lane.b32.xlu0 %v3031, 64
  %v3062 = vpop.permute.xlu0 %3061
  %3063 = vrot.lane.b32.xlu0 %v3032, 64
  %v3064 = vpop.permute.xlu0 %3063
  %3065 = vrot.lane.b32.xlu0 %v3033, 64
  %v3066 = vpop.permute.xlu0 %3065
  %3067 = vrot.lane.b32.xlu0 %v3034, 64
  %v3068 = vpop.permute.xlu0 %3067
  %3069 = vrot.lane.b32.xlu0 %v3035, 64
  %v3070 = vpop.permute.xlu0 %3069
  %3071 = vrot.lane.b32.xlu0 %v3036, 64
  %v3072 = vpop.permute.xlu0 %3071
  %3073 = vrot.lane.b32.xlu0 %v3037, 64
  %v3074 = vpop.permute.xlu0 %3073
  %3075 = vrot.lane.b32.xlu0 %v3038, 64
  %v3076 = vpop.permute.xlu0 %3075
  %3077 = vrot.lane.b32.xlu0 %v3039, 64
  %v3078 = vpop.permute.xlu0 %3077
  %3079 = vrot.lane.b32.xlu0 %v3040, 64
  %v3080 = vpop.permute.xlu0 %3079
  %3081 = vrot.lane.b32.xlu0 %v3041, 64
  %v3082 = vpop.permute.xlu0 %3081
  %3083 = vrot.lane.b32.xlu0 %v3042, 64
  %v3084 = vpop.permute.xlu0 %3083
  %3085 = vrot.lane.b32.xlu0 %v3043, 64
  %v3086 = vpop.permute.xlu0 %3085
  %3087 = vrot.lane.b32.xlu0 %v3044, 64
  %v3088 = vpop.permute.xlu0 %3087
  %3089 = vrot.lane.b32.xlu0 %v3045, 64
  %v3090 = vpop.permute.xlu0 %3089
  %3091 = vrot.lane.b32.xlu0 %v3046, 64
  %v3092 = vpop.permute.xlu0 %3091
  %3093 = vrot.lane.b32.xlu0 %v3047, 64
  %v3094 = vpop.permute.xlu0 %3093
  %3095 = vrot.lane.b32.xlu0 %v3048, 64
  %v3096 = vpop.permute.xlu0 %3095
  %3097 = vrot.lane.b32.xlu0 %v3049, 64
  %v3098 = vpop.permute.xlu0 %3097
  %3099 = vrot.lane.b32.xlu0 %v3050, 64
  %v3100 = vpop.permute.xlu0 %3099
  %3126 = vst.msk [vmem:[#allocation2] sm:$0xf] %vm358, %v3052
  %3127 = vst.msk [vmem:[#allocation2 + $0x8] sm:$0xf] %vm358, %v3054
  %3128 = vst.msk [vmem:[#allocation2 + $0x10] sm:$0xf] %vm358, %v3056
  %3129 = vst.msk [vmem:[#allocation2 + $0x18] sm:$0xf] %vm358, %v3058
  %3130 = vst.msk [vmem:[#allocation2 + $0x20] sm:$0xf] %vm358, %v3060
  %3131 = vst.msk [vmem:[#allocation2 + $0x28] sm:$0xf] %vm358, %v3062
  %3132 = vst.msk [vmem:[#allocation2 + $0x30] sm:$0xf] %vm358, %v3064
  %3133 = vst.msk [vmem:[#allocation2 + $0x38] sm:$0xf] %vm358, %v3066
  %3134 = vst.msk [vmem:[#allocation2 + $0x40] sm:$0xf] %vm358, %v3068
  %3135 = vst.msk [vmem:[#allocation2 + $0x48] sm:$0xf] %vm358, %v3070
  %3136 = vst.msk [vmem:[#allocation2 + $0x50] sm:$0xf] %vm358, %v3072
  %3137 = vst.msk [vmem:[#allocation2 + $0x58] sm:$0xf] %vm358, %v3074
  %3138 = vst.msk [vmem:[#allocation2 + $0x60] sm:$0xf] %vm358, %v3076
  %3139 = vst.msk [vmem:[#allocation2 + $0x68] sm:$0xf] %vm358, %v3078
  %3140 = vst.msk [vmem:[#allocation2 + $0x70] sm:$0xf] %vm358, %v3080
  %3141 = vst.msk [vmem:[#allocation2 + $0x78] sm:$0xf] %vm358, %v3082
  %3142 = vst.msk [vmem:[#allocation2 + $0x80] sm:$0xf] %vm358, %v3084
  %3143 = vst.msk [vmem:[#allocation2 + $0x88] sm:$0xf] %vm358, %v3086
  %3144 = vst.msk [vmem:[#allocation2 + $0x90] sm:$0xf] %vm358, %v3088
  %3145 = vst.msk [vmem:[#allocation2 + $0x98] sm:$0xf] %vm358, %v3090
  %3146 = vst.msk [vmem:[#allocation2 + $0xa0] sm:$0xf] %vm358, %v3092
  %3147 = vst.msk [vmem:[#allocation2 + $0xa8] sm:$0xf] %vm358, %v3094
  %3148 = vst.msk [vmem:[#allocation2 + $0xb0] sm:$0xf] %vm358, %v3096
  %3149 = vst.msk [vmem:[#allocation2 + $0xb8] sm:$0xf] %vm358, %v3098
  %3150 = vst.msk [vmem:[#allocation2 + $0xc0] sm:$0xf] %vm358, %v3100
  %v3151 = vld [vmem:[%s2 + $0x5b] sm:$0xff]
  %v3152 = vld [vmem:[%s2 + $0x63] sm:$0xff]
  %v3153 = vld [vmem:[%s2 + $0x6b] sm:$0xff]
  %v3154 = vld [vmem:[%s2 + $0x73] sm:$0xff]
  %v3155 = vld [vmem:[%s2 + $0x7b] sm:$0xff]
  %v3156 = vld [vmem:[%s2 + $0x83] sm:$0xff]
  %v3157 = vld [vmem:[%s2 + $0x8b] sm:$0xff]
  %v3158 = vld [vmem:[%s2 + $0x93] sm:$0xff]
  %v3159 = vld [vmem:[%s2 + $0x9b] sm:$0xff]
  %v3160 = vld [vmem:[%s2 + $0xa3] sm:$0xff]
  %v3161 = vld [vmem:[%s2 + $0xab] sm:$0xff]
  %v3162 = vld [vmem:[%s2 + $0xb3] sm:$0xff]
  %v3163 = vld [vmem:[%s2 + $0xbb] sm:$0xff]
  %v3164 = vld [vmem:[%s2 + $0xc3] sm:$0xff]
  %v3165 = vld [vmem:[%s2 + $0xcb] sm:$0xff]
  %v3166 = vld [vmem:[%s2 + $0xd3] sm:$0xff]
  %v3167 = vld [vmem:[%s2 + $0xdb] sm:$0xff]
  %v3168 = vld [vmem:[%s2 + $0xe3] sm:$0xff]
  %v3169 = vld [vmem:[%s2 + $0xeb] sm:$0xff]
  %v3170 = vld [vmem:[%s2 + $0xf3] sm:$0xff]
  %v3171 = vld [vmem:[%s2 + $0xfb] sm:$0xff]
  %v3172 = vld [vmem:[%s2 + $0x103] sm:$0xff]
  %v3173 = vld [vmem:[%s2 + $0x10b] sm:$0xff]
  %v3174 = vld [vmem:[%s2 + $0x113] sm:$0xff]
  %v3175 = vld [vmem:[%s2 + $0x11b] sm:$0xff]
  %v3176 = vpack.c.bf16 %v3152, %v3151
  %v3177 = vpack.c.bf16 %v3154, %v3153
  %v3178 = vpack.c.bf16 %v3156, %v3155
  %v3179 = vpack.c.bf16 %v3158, %v3157
  %v3180 = vpack.c.bf16 %v3160, %v3159
  %v3181 = vpack.c.bf16 %v3162, %v3161
  %v3182 = vpack.c.bf16 %v3164, %v3163
  %v3183 = vpack.c.bf16 %v3166, %v3165
  %v3184 = vpack.c.bf16 %v3168, %v3167
  %v3185 = vpack.c.bf16 %v3170, %v3169
  %v3186 = vpack.c.bf16 %v3172, %v3171
  %v3187 = vpack.c.bf16 %v3174, %v3173
  %v3188 = vpack.c.bf16 %v3175, %v3175
  %v3202 = vunpack.c.l.b16 %v3176
  %v3203 = vunpack.c.h.b16 %v3176
  %v3204 = vunpack.c.l.b16 %v3177
  %v3205 = vunpack.c.h.b16 %v3177
  %v3206 = vunpack.c.l.b16 %v3178
  %v3207 = vunpack.c.h.b16 %v3178
  %v3208 = vunpack.c.l.b16 %v3179
  %v3209 = vunpack.c.h.b16 %v3179
  %v3210 = vunpack.c.l.b16 %v3180
  %v3211 = vunpack.c.h.b16 %v3180
  %v3212 = vunpack.c.l.b16 %v3181
  %v3213 = vunpack.c.h.b16 %v3181
  %v3214 = vunpack.c.l.b16 %v3182
  %v3215 = vunpack.c.h.b16 %v3182
  %v3216 = vunpack.c.l.b16 %v3183
  %v3217 = vunpack.c.h.b16 %v3183
  %v3218 = vunpack.c.l.b16 %v3184
  %v3219 = vunpack.c.h.b16 %v3184
  %v3220 = vunpack.c.l.b16 %v3185
  %v3221 = vunpack.c.h.b16 %v3185
  %v3222 = vunpack.c.l.b16 %v3186
  %v3223 = vunpack.c.h.b16 %v3186
  %v3224 = vunpack.c.l.b16 %v3187
  %v3225 = vunpack.c.h.b16 %v3187
  %v3226 = vunpack.c.l.b16 %v3188
  %v3227 = vpack.c.b16 %v3202, %v3202
  %v3228 = vpack.c.b16 %v3203, %v3203
  %v3229 = vpack.c.b16 %v3204, %v3204
  %v3230 = vpack.c.b16 %v3205, %v3205
  %v3231 = vpack.c.b16 %v3206, %v3206
  %v3232 = vpack.c.b16 %v3207, %v3207
  %v3233 = vpack.c.b16 %v3208, %v3208
  %v3234 = vpack.c.b16 %v3209, %v3209
  %v3235 = vpack.c.b16 %v3210, %v3210
  %v3236 = vpack.c.b16 %v3211, %v3211
  %v3237 = vpack.c.b16 %v3212, %v3212
  %v3238 = vpack.c.b16 %v3213, %v3213
  %v3239 = vpack.c.b16 %v3214, %v3214
  %v3240 = vpack.c.b16 %v3215, %v3215
  %v3241 = vpack.c.b16 %v3216, %v3216
  %v3242 = vpack.c.b16 %v3217, %v3217
  %v3243 = vpack.c.b16 %v3218, %v3218
  %v3244 = vpack.c.b16 %v3219, %v3219
  %v3245 = vpack.c.b16 %v3220, %v3220
  %v3246 = vpack.c.b16 %v3221, %v3221
  %v3247 = vpack.c.b16 %v3222, %v3222
  %v3248 = vpack.c.b16 %v3223, %v3223
  %v3249 = vpack.c.b16 %v3224, %v3224
  %v3250 = vpack.c.b16 %v3225, %v3225
  %v3251 = vpack.c.b16 %v3226, %v3226
  %3277 = vst.msk [vmem:[#allocation2 + $0x4] sm:$0xf] %vm156, %v3227
  %3278 = vst.msk [vmem:[#allocation2 + $0xc] sm:$0xf] %vm156, %v3228
  %3279 = vst.msk [vmem:[#allocation2 + $0x14] sm:$0xf] %vm156, %v3229
  %3280 = vst.msk [vmem:[#allocation2 + $0x1c] sm:$0xf] %vm156, %v3230
  %3281 = vst.msk [vmem:[#allocation2 + $0x24] sm:$0xf] %vm156, %v3231
  %3282 = vst.msk [vmem:[#allocation2 + $0x2c] sm:$0xf] %vm156, %v3232
  %3283 = vst.msk [vmem:[#allocation2 + $0x34] sm:$0xf] %vm156, %v3233
  %3284 = vst.msk [vmem:[#allocation2 + $0x3c] sm:$0xf] %vm156, %v3234
  %3285 = vst.msk [vmem:[#allocation2 + $0x44] sm:$0xf] %vm156, %v3235
  %3286 = vst.msk [vmem:[#allocation2 + $0x4c] sm:$0xf] %vm156, %v3236
  %3287 = vst.msk [vmem:[#allocation2 + $0x54] sm:$0xf] %vm156, %v3237
  %3288 = vst.msk [vmem:[#allocation2 + $0x5c] sm:$0xf] %vm156, %v3238
  %3289 = vst.msk [vmem:[#allocation2 + $0x64] sm:$0xf] %vm156, %v3239
  %3290 = vst.msk [vmem:[#allocation2 + $0x6c] sm:$0xf] %vm156, %v3240
  %3291 = vst.msk [vmem:[#allocation2 + $0x74] sm:$0xf] %vm156, %v3241
  %3292 = vst.msk [vmem:[#allocation2 + $0x7c] sm:$0xf] %vm156, %v3242
  %3293 = vst.msk [vmem:[#allocation2 + $0x84] sm:$0xf] %vm156, %v3243
  %3294 = vst.msk [vmem:[#allocation2 + $0x8c] sm:$0xf] %vm156, %v3244
  %3295 = vst.msk [vmem:[#allocation2 + $0x94] sm:$0xf] %vm156, %v3245
  %3296 = vst.msk [vmem:[#allocation2 + $0x9c] sm:$0xf] %vm156, %v3246
  %3297 = vst.msk [vmem:[#allocation2 + $0xa4] sm:$0xf] %vm156, %v3247
  %3298 = vst.msk [vmem:[#allocation2 + $0xac] sm:$0xf] %vm156, %v3248
  %3299 = vst.msk [vmem:[#allocation2 + $0xb4] sm:$0xf] %vm156, %v3249
  %3300 = vst.msk [vmem:[#allocation2 + $0xbc] sm:$0xf] %vm156, %v3250
  %3301 = vst.msk [vmem:[#allocation2 + $0xc4] sm:$0xf] %vm156, %v3251
  %v3302 = vld [vmem:[#allocation2] sm:$0xff]
  %v3303 = vld [vmem:[#allocation2 + $0x8] sm:$0xff]
  %v3304 = vld [vmem:[#allocation2 + $0x10] sm:$0xff]
  %v3305 = vld [vmem:[#allocation2 + $0x18] sm:$0xff]
  %v3306 = vld [vmem:[#allocation2 + $0x20] sm:$0xff]
  %v3307 = vld [vmem:[#allocation2 + $0x28] sm:$0xff]
  %v3308 = vld [vmem:[#allocation2 + $0x30] sm:$0xff]
  %v3309 = vld [vmem:[#allocation2 + $0x38] sm:$0xff]
  %v3310 = vld [vmem:[#allocation2 + $0x40] sm:$0xff]
  %v3311 = vld [vmem:[#allocation2 + $0x48] sm:$0xff]
  %v3312 = vld [vmem:[#allocation2 + $0x50] sm:$0xff]
  %v3313 = vld [vmem:[#allocation2 + $0x58] sm:$0xff]
  %v3314 = vld [vmem:[#allocation2 + $0x60] sm:$0xff]
  %v3315 = vld [vmem:[#allocation2 + $0x68] sm:$0xff]
  %v3316 = vld [vmem:[#allocation2 + $0x70] sm:$0xff]
  %v3317 = vld [vmem:[#allocation2 + $0x78] sm:$0xff]
  %v3318 = vld [vmem:[#allocation2 + $0x80] sm:$0xff]
  %v3319 = vld [vmem:[#allocation2 + $0x88] sm:$0xff]
  %v3320 = vld [vmem:[#allocation2 + $0x90] sm:$0xff]
  %v3321 = vld [vmem:[#allocation2 + $0x98] sm:$0xff]
  %v3322 = vld [vmem:[#allocation2 + $0xa0] sm:$0xff]
  %v3323 = vld [vmem:[#allocation2 + $0xa8] sm:$0xff]
  %v3324 = vld [vmem:[#allocation2 + $0xb0] sm:$0xff]
  %v3325 = vld [vmem:[#allocation2 + $0xb8] sm:$0xff]
  %v3326 = vld [vmem:[#allocation2 + $0xc0] sm:$0xff]
  %v3327 = vld [vmem:[%s4] sm:$0xf]
  %v3328 = vld [vmem:[%s4 + $0x4] sm:$0xf]
  %v3329 = vld [vmem:[%s4 + $0x8] sm:$0xf]
  %v3330 = vld [vmem:[%s4 + $0xc] sm:$0xf]
  %v3331 = vld [vmem:[%s4 + $0x10] sm:$0xf]
  %v3332 = vld [vmem:[%s4 + $0x14] sm:$0xf]
  %v3333 = vld [vmem:[%s4 + $0x18] sm:$0xf]
  %v3334 = vld [vmem:[%s4 + $0x1c] sm:$0xf]
  %v3335 = vld [vmem:[%s4 + $0x20] sm:$0xf]
  %v3336 = vld [vmem:[%s4 + $0x24] sm:$0xf]
  %v3337 = vld [vmem:[%s4 + $0x28] sm:$0xf]
  %v3338 = vld [vmem:[%s4 + $0x2c] sm:$0xf]
  %v3339 = vld [vmem:[%s4 + $0x30] sm:$0xf]
  %v3340 = vld [vmem:[%s4 + $0x34] sm:$0xf]
  %v3341 = vld [vmem:[%s4 + $0x38] sm:$0xf]
  %v3342 = vld [vmem:[%s4 + $0x3c] sm:$0xf]
  %v3343 = vld [vmem:[%s4 + $0x40] sm:$0xf]
  %v3344 = vld [vmem:[%s4 + $0x44] sm:$0xf]
  %v3345 = vld [vmem:[%s4 + $0x48] sm:$0xf]
  %v3346 = vld [vmem:[%s4 + $0x4c] sm:$0xf]
  %v3347 = vld [vmem:[%s4 + $0x50] sm:$0xf]
  %v3348 = vld [vmem:[%s4 + $0x54] sm:$0xf]
  %v3349 = vld [vmem:[%s4 + $0x58] sm:$0xf]
  %v3350 = vld [vmem:[%s4 + $0x5c] sm:$0xf]
  %v3376 = vunpack.c.l.b16 %v3302
  %v3377 = vunpack.c.h.b16 %v3302
  %v3378 = vunpack.c.l.b16 %v3303
  %v3379 = vunpack.c.h.b16 %v3303
  %v3380 = vunpack.c.l.b16 %v3304
  %v3381 = vunpack.c.h.b16 %v3304
  %v3382 = vunpack.c.l.b16 %v3305
  %v3383 = vunpack.c.h.b16 %v3305
  %v3384 = vunpack.c.l.b16 %v3306
  %v3385 = vunpack.c.h.b16 %v3306
  %v3386 = vunpack.c.l.b16 %v3307
  %v3387 = vunpack.c.h.b16 %v3307
  %v3388 = vunpack.c.l.b16 %v3308
  %v3389 = vunpack.c.h.b16 %v3308
  %v3390 = vunpack.c.l.b16 %v3309
  %v3391 = vunpack.c.h.b16 %v3309
  %v3392 = vunpack.c.l.b16 %v3310
  %v3393 = vunpack.c.h.b16 %v3310
  %v3394 = vunpack.c.l.b16 %v3311
  %v3395 = vunpack.c.h.b16 %v3311
  %v3396 = vunpack.c.l.b16 %v3312
  %v3397 = vunpack.c.h.b16 %v3312
  %v3398 = vunpack.c.l.b16 %v3313
  %v3399 = vunpack.c.h.b16 %v3313
  %v3400 = vunpack.c.l.b16 %v3314
  %v3401 = vunpack.c.h.b16 %v3314
  %v3402 = vunpack.c.l.b16 %v3315
  %v3403 = vunpack.c.h.b16 %v3315
  %v3404 = vunpack.c.l.b16 %v3316
  %v3405 = vunpack.c.h.b16 %v3316
  %v3406 = vunpack.c.l.b16 %v3317
  %v3407 = vunpack.c.h.b16 %v3317
  %v3408 = vunpack.c.l.b16 %v3318
  %v3409 = vunpack.c.h.b16 %v3318
  %v3410 = vunpack.c.l.b16 %v3319
  %v3411 = vunpack.c.h.b16 %v3319
  %v3412 = vunpack.c.l.b16 %v3320
  %v3413 = vunpack.c.h.b16 %v3320
  %v3414 = vunpack.c.l.b16 %v3321
  %v3415 = vunpack.c.h.b16 %v3321
  %v3416 = vunpack.c.l.b16 %v3322
  %v3417 = vunpack.c.h.b16 %v3322
  %v3418 = vunpack.c.l.b16 %v3323
  %v3419 = vunpack.c.h.b16 %v3323
  %v3420 = vunpack.c.l.b16 %v3324
  %v3421 = vunpack.c.h.b16 %v3324
  %v3422 = vunpack.c.l.b16 %v3325
  %v3423 = vunpack.c.h.b16 %v3325
  %v3424 = vunpack.c.l.b16 %v3326
  %v3425 = vunpack.c.h.b16 %v3326
  %v3426 = vpack.c.b16 %v3378, %v3376
  %v3427 = vpack.c.b16 %v3379, %v3377
  %v3428 = vpack.c.b16 %v3382, %v3380
  %v3429 = vpack.c.b16 %v3383, %v3381
  %v3430 = vpack.c.b16 %v3386, %v3384
  %v3431 = vpack.c.b16 %v3387, %v3385
  %v3432 = vpack.c.b16 %v3390, %v3388
  %v3433 = vpack.c.b16 %v3391, %v3389
  %v3434 = vpack.c.b16 %v3394, %v3392
  %v3435 = vpack.c.b16 %v3395, %v3393
  %v3436 = vpack.c.b16 %v3398, %v3396
  %v3437 = vpack.c.b16 %v3399, %v3397
  %v3438 = vpack.c.b16 %v3402, %v3400
  %v3439 = vpack.c.b16 %v3403, %v3401
  %v3440 = vpack.c.b16 %v3406, %v3404
  %v3441 = vpack.c.b16 %v3407, %v3405
  %v3442 = vpack.c.b16 %v3410, %v3408
  %v3443 = vpack.c.b16 %v3411, %v3409
  %v3444 = vpack.c.b16 %v3414, %v3412
  %v3445 = vpack.c.b16 %v3415, %v3413
  %v3446 = vpack.c.b16 %v3418, %v3416
  %v3447 = vpack.c.b16 %v3419, %v3417
  %v3448 = vpack.c.b16 %v3422, %v3420
  %v3449 = vpack.c.b16 %v3423, %v3421
  %v3450 = vpack.c.b16 %v3424, %v3424
  %v3451 = vpack.c.b16 %v3425, %v3425
  %v3489 = vunpack.c.l.b16 %v3327
  %v3490 = vunpack.c.l.b16 %v3328
  %v3491 = vunpack.c.l.b16 %v3329
  %v3492 = vunpack.c.l.b16 %v3330
  %v3493 = vunpack.c.l.b16 %v3331
  %v3494 = vunpack.c.l.b16 %v3332
  %v3495 = vunpack.c.l.b16 %v3333
  %v3496 = vunpack.c.l.b16 %v3334
  %v3497 = vunpack.c.l.b16 %v3335
  %v3498 = vunpack.c.l.b16 %v3336
  %v3499 = vunpack.c.l.b16 %v3337
  %v3500 = vunpack.c.l.b16 %v3338
  %v3501 = vunpack.c.l.b16 %v3339
  %v3502 = vunpack.c.l.b16 %v3340
  %v3503 = vunpack.c.l.b16 %v3341
  %v3504 = vunpack.c.l.b16 %v3342
  %v3505 = vunpack.c.l.b16 %v3343
  %v3506 = vunpack.c.l.b16 %v3344
  %v3507 = vunpack.c.l.b16 %v3345
  %v3508 = vunpack.c.l.b16 %v3346
  %v3509 = vunpack.c.l.b16 %v3347
  %v3510 = vunpack.c.l.b16 %v3348
  %v3511 = vunpack.c.l.b16 %v3349
  %v3512 = vunpack.c.l.b16 %v3350
  %v3513 = vpack.c.b16 %v3490, %v3489
  %v3514 = vpack.c.b16 %v3492, %v3491
  %v3515 = vpack.c.b16 %v3494, %v3493
  %v3516 = vpack.c.b16 %v3496, %v3495
  %v3517 = vpack.c.b16 %v3498, %v3497
  %v3518 = vpack.c.b16 %v3500, %v3499
  %v3519 = vpack.c.b16 %v3502, %v3501
  %v3520 = vpack.c.b16 %v3504, %v3503
  %v3521 = vpack.c.b16 %v3506, %v3505
  %v3522 = vpack.c.b16 %v3508, %v3507
  %v3523 = vpack.c.b16 %v3510, %v3509
  %v3524 = vpack.c.b16 %v3512, %v3511
  %v3538 = vsel %vm1323, %v3427, 0
  %v3541 = vsel %vm1323, %v3429, 0
  %v3544 = vsel %vm1323, %v3431, 0
  %v3547 = vsel %vm1323, %v3433, 0
  %v3550 = vsel %vm1323, %v3435, 0
  %v3553 = vsel %vm1323, %v3437, 0
  %v3556 = vsel %vm1323, %v3439, 0
  %v3559 = vsel %vm1323, %v3441, 0
  %v3562 = vsel %vm1323, %v3443, 0
  %v3565 = vsel %vm1323, %v3445, 0
  %v3568 = vsel %vm1323, %v3447, 0
  %v3571 = vsel %vm1323, %v3449, 0
  %v3574 = vsel %vm1323, %v3451, 0
  %3576 = vmatprep.subr.bf16.mxu0 0
  %3577 = vmatpush1.bf16.msra.mxu0 %v3520
  %3578 = vmatprep.subr.bf16.mxu0 0
  %3579 = vmatpush1.bf16.msra.mxu0 %v3519
  %3580 = vmatprep.subr.bf16.mxu0 0
  %3581 = vmatpush1.bf16.msra.mxu0 %v3518
  %3582 = vmatprep.subr.bf16.mxu0 0
  %3583 = vmatpush1.bf16.msra.mxu0 %v3517
  %3584 = vmatprep.subr.bf16.mxu0 0
  %3585 = vmatpush1.bf16.msra.mxu0 %v3516
  %3586 = vmatprep.subr.bf16.mxu0 0
  %3587 = vmatpush1.bf16.msra.mxu0 %v3515
  %3588 = vmatprep.subr.bf16.mxu0 0
  %3589 = vmatpush1.bf16.msra.mxu0 %v3514
  %3590 = vmatprep.subr.bf16.mxu0 0
  %3591 = vmatpush1.bf16.msra.mxu0 %v3513
  %3592 = vmatprep.subr.bf16.mxu0 0
  %3593 = vmatpush2.bf16.msra.mxu0 0
  %3594 = vmatprep.subr.bf16.mxu0 0
  %3595 = vmatpush2.bf16.msra.mxu0 0
  %3596 = vmatprep.subr.bf16.mxu0 0
  %3597 = vmatpush2.bf16.msra.mxu0 0
  %3598 = vmatprep.subr.bf16.mxu0 0
  %3599 = vmatpush2.bf16.msra.mxu0 0
  %3600 = vmatprep.subr.bf16.mxu0 0
  %3601 = vmatpush2.bf16.msra.mxu0 %v3524
  %3602 = vmatprep.subr.bf16.mxu0 0
  %3603 = vmatpush2.bf16.msra.mxu0 %v3523
  %3604 = vmatprep.subr.bf16.mxu0 0
  %3605 = vmatpush2.bf16.msra.mxu0 %v3522
  %3606 = vmatprep.subr.bf16.mxu0 0
  %3607 = vmatpush2.bf16.msra.mxu0 %v3521
  %3608 = vmatprep.mubr.bf16.mxu0 %v3538
  %3609 = vmatmul.mubr.bf16.gmra.mxu0 %v3426
  %v3610 = vpop.f32.mrf.mxu0
  %v3611 = vadd.f32 0.0, %v3610
  %v3612 = vpop.f32.mrf.mxu0
  %v3613 = vpop.f32.mrf.mxu0
  %v3614 = vadd.f32 0.0, %v3613
  %v3615 = vpop.f32.mrf.mxu0
  %3616 = vmatprep.mubr.bf16.mxu0 %v3541
  %3617 = vmatmul.mubr.bf16.gmra.mxu0 %v3428
  %v3618 = vpop.f32.mrf.mxu0
  %v3619 = vadd.f32 0.0, %v3618
  %v3620 = vpop.f32.mrf.mxu0
  %v3621 = vpop.f32.mrf.mxu0
  %v3622 = vadd.f32 0.0, %v3621
  %v3623 = vpop.f32.mrf.mxu0
  %3624 = vmatprep.mubr.bf16.mxu0 %v3544
  %3625 = vmatmul.mubr.bf16.gmra.mxu0 %v3430
  %v3626 = vpop.f32.mrf.mxu0
  %v3627 = vadd.f32 0.0, %v3626
  %v3628 = vpop.f32.mrf.mxu0
  %v3629 = vpop.f32.mrf.mxu0
  %v3630 = vadd.f32 0.0, %v3629
  %v3631 = vpop.f32.mrf.mxu0
  %3632 = vmatprep.mubr.bf16.mxu0 %v3547
  %3633 = vmatmul.mubr.bf16.gmra.mxu0 %v3432
  %v3634 = vpop.f32.mrf.mxu0
  %v3635 = vadd.f32 0.0, %v3634
  %v3636 = vpop.f32.mrf.mxu0
  %v3637 = vpop.f32.mrf.mxu0
  %v3638 = vadd.f32 0.0, %v3637
  %v3639 = vpop.f32.mrf.mxu0
  %3640 = vmatprep.mubr.bf16.mxu0 %v3550
  %3641 = vmatmul.mubr.bf16.gmra.mxu0 %v3434
  %v3642 = vpop.f32.mrf.mxu0
  %v3643 = vadd.f32 0.0, %v3642
  %v3644 = vpop.f32.mrf.mxu0
  %v3645 = vpop.f32.mrf.mxu0
  %v3646 = vadd.f32 0.0, %v3645
  %v3647 = vpop.f32.mrf.mxu0
  %3648 = vmatprep.mubr.bf16.mxu0 %v3553
  %3649 = vmatmul.mubr.bf16.gmra.mxu0 %v3436
  %v3650 = vpop.f32.mrf.mxu0
  %v3651 = vadd.f32 0.0, %v3650
  %v3652 = vpop.f32.mrf.mxu0
  %v3653 = vpop.f32.mrf.mxu0
  %v3654 = vadd.f32 0.0, %v3653
  %v3655 = vpop.f32.mrf.mxu0
  %3656 = vmatprep.mubr.bf16.mxu0 %v3556
  %3657 = vmatmul.mubr.bf16.gmra.mxu0 %v3438
  %v3658 = vpop.f32.mrf.mxu0
  %v3659 = vadd.f32 0.0, %v3658
  %v3660 = vpop.f32.mrf.mxu0
  %v3661 = vpop.f32.mrf.mxu0
  %v3662 = vadd.f32 0.0, %v3661
  %v3663 = vpop.f32.mrf.mxu0
  %3664 = vmatprep.mubr.bf16.mxu0 %v3559
  %3665 = vmatmul.mubr.bf16.gmra.mxu0 %v3440
  %v3666 = vpop.f32.mrf.mxu0
  %v3667 = vadd.f32 0.0, %v3666
  %v3668 = vpop.f32.mrf.mxu0
  %v3669 = vpop.f32.mrf.mxu0
  %v3670 = vadd.f32 0.0, %v3669
  %v3671 = vpop.f32.mrf.mxu0
  %3672 = vmatprep.mubr.bf16.mxu0 %v3562
  %3673 = vmatmul.mubr.bf16.gmra.mxu0 %v3442
  %v3674 = vpop.f32.mrf.mxu0
  %v3675 = vadd.f32 0.0, %v3674
  %v3676 = vpop.f32.mrf.mxu0
  %v3677 = vpop.f32.mrf.mxu0
  %v3678 = vadd.f32 0.0, %v3677
  %v3679 = vpop.f32.mrf.mxu0
  %3680 = vmatprep.mubr.bf16.mxu0 %v3565
  %3681 = vmatmul.mubr.bf16.gmra.mxu0 %v3444
  %v3682 = vpop.f32.mrf.mxu0
  %v3683 = vadd.f32 0.0, %v3682
  %v3684 = vpop.f32.mrf.mxu0
  %v3685 = vpop.f32.mrf.mxu0
  %v3686 = vadd.f32 0.0, %v3685
  %v3687 = vpop.f32.mrf.mxu0
  %3688 = vmatprep.mubr.bf16.mxu0 %v3568
  %3689 = vmatmul.mubr.bf16.gmra.mxu0 %v3446
  %v3690 = vpop.f32.mrf.mxu0
  %v3691 = vadd.f32 0.0, %v3690
  %v3692 = vpop.f32.mrf.mxu0
  %v3693 = vpop.f32.mrf.mxu0
  %v3694 = vadd.f32 0.0, %v3693
  %v3695 = vpop.f32.mrf.mxu0
  %3696 = vmatprep.mubr.bf16.mxu0 %v3571
  %3697 = vmatmul.mubr.bf16.gmra.mxu0 %v3448
  %v3698 = vpop.f32.mrf.mxu0
  %v3699 = vadd.f32 0.0, %v3698
  %v3700 = vpop.f32.mrf.mxu0
  %v3701 = vpop.f32.mrf.mxu0
  %v3702 = vadd.f32 0.0, %v3701
  %v3703 = vpop.f32.mrf.mxu0
  %3704 = vmatprep.mubr.bf16.mxu0 %v3574
  %3705 = vmatmul.mubr.bf16.gmra.mxu0 %v3450
  %v3706 = vpop.f32.mrf.mxu0
  %v3707 = vadd.f32 0.0, %v3706
  %v3708 = vpop.f32.mrf.mxu0
  %v3709 = vpop.f32.mrf.mxu0
  %v3710 = vpop.f32.mrf.mxu0
  %3711 = vdwg.mxu0
  %v3712 = vadd.f32 %v2774, %v3611
  %v3713 = vadd.f32 %v2775, %v3614
  %v3714 = vadd.f32 %v2776, %v3619
  %v3715 = vadd.f32 %v2777, %v3622
  %v3716 = vadd.f32 %v2778, %v3627
  %v3717 = vadd.f32 %v2779, %v3630
  %v3718 = vadd.f32 %v2780, %v3635
  %v3719 = vadd.f32 %v2781, %v3638
  %v3720 = vadd.f32 %v2782, %v3643
  %v3721 = vadd.f32 %v2783, %v3646
  %v3722 = vadd.f32 %v2784, %v3651
  %v3723 = vadd.f32 %v2785, %v3654
  %v3724 = vadd.f32 %v2786, %v3659
  %v3725 = vadd.f32 %v2787, %v3662
  %v3726 = vadd.f32 %v2788, %v3667
  %v3727 = vadd.f32 %v2789, %v3670
  %v3728 = vadd.f32 %v2790, %v3675
  %v3729 = vadd.f32 %v2791, %v3678
  %v3730 = vadd.f32 %v2792, %v3683
  %v3731 = vadd.f32 %v2793, %v3686
  %v3732 = vadd.f32 %v2794, %v3691
  %v3733 = vadd.f32 %v2795, %v3694
  %v3734 = vadd.f32 %v2796, %v3699
  %v3735 = vadd.f32 %v2797, %v3702
  %v3736 = vadd.f32 %v2798, %v3707
  %v3737 = vld [vmem:[%s2 + $0x63] sm:$0xff]
  %v3738 = vld [vmem:[%s2 + $0x6b] sm:$0xff]
  %v3739 = vld [vmem:[%s2 + $0x73] sm:$0xff]
  %v3740 = vld [vmem:[%s2 + $0x7b] sm:$0xff]
  %v3741 = vld [vmem:[%s2 + $0x83] sm:$0xff]
  %v3742 = vld [vmem:[%s2 + $0x8b] sm:$0xff]
  %v3743 = vld [vmem:[%s2 + $0x93] sm:$0xff]
  %v3744 = vld [vmem:[%s2 + $0x9b] sm:$0xff]
  %v3745 = vld [vmem:[%s2 + $0xa3] sm:$0xff]
  %v3746 = vld [vmem:[%s2 + $0xab] sm:$0xff]
  %v3747 = vld [vmem:[%s2 + $0xb3] sm:$0xff]
  %v3748 = vld [vmem:[%s2 + $0xbb] sm:$0xff]
  %v3749 = vld [vmem:[%s2 + $0xc3] sm:$0xff]
  %v3750 = vld [vmem:[%s2 + $0xcb] sm:$0xff]
  %v3751 = vld [vmem:[%s2 + $0xd3] sm:$0xff]
  %v3752 = vld [vmem:[%s2 + $0xdb] sm:$0xff]
  %v3753 = vld [vmem:[%s2 + $0xe3] sm:$0xff]
  %v3754 = vld [vmem:[%s2 + $0xeb] sm:$0xff]
  %v3755 = vld [vmem:[%s2 + $0xf3] sm:$0xff]
  %v3756 = vld [vmem:[%s2 + $0xfb] sm:$0xff]
  %v3757 = vld [vmem:[%s2 + $0x103] sm:$0xff]
  %v3758 = vld [vmem:[%s2 + $0x10b] sm:$0xff]
  %v3759 = vld [vmem:[%s2 + $0x113] sm:$0xff]
  %v3760 = vld [vmem:[%s2 + $0x11b] sm:$0xff]
  %v3761 = vld [vmem:[%s2 + $0x123] sm:$0xff]
  %v3762 = vpack.c.bf16 %v3738, %v3737
  %v3763 = vpack.c.bf16 %v3740, %v3739
  %v3764 = vpack.c.bf16 %v3742, %v3741
  %v3765 = vpack.c.bf16 %v3744, %v3743
  %v3766 = vpack.c.bf16 %v3746, %v3745
  %v3767 = vpack.c.bf16 %v3748, %v3747
  %v3768 = vpack.c.bf16 %v3750, %v3749
  %v3769 = vpack.c.bf16 %v3752, %v3751
  %v3770 = vpack.c.bf16 %v3754, %v3753
  %v3771 = vpack.c.bf16 %v3756, %v3755
  %v3772 = vpack.c.bf16 %v3758, %v3757
  %v3773 = vpack.c.bf16 %v3760, %v3759
  %v3774 = vpack.c.bf16 %v3761, %v3761
  %v3788 = vunpack.c.l.b16 %v3762
  %v3789 = vunpack.c.h.b16 %v3762
  %v3790 = vunpack.c.l.b16 %v3763
  %v3791 = vunpack.c.h.b16 %v3763
  %v3792 = vunpack.c.l.b16 %v3764
  %v3793 = vunpack.c.h.b16 %v3764
  %v3794 = vunpack.c.l.b16 %v3765
  %v3795 = vunpack.c.h.b16 %v3765
  %v3796 = vunpack.c.l.b16 %v3766
  %v3797 = vunpack.c.h.b16 %v3766
  %v3798 = vunpack.c.l.b16 %v3767
  %v3799 = vunpack.c.h.b16 %v3767
  %v3800 = vunpack.c.l.b16 %v3768
  %v3801 = vunpack.c.h.b16 %v3768
  %v3802 = vunpack.c.l.b16 %v3769
  %v3803 = vunpack.c.h.b16 %v3769
  %v3804 = vunpack.c.l.b16 %v3770
  %v3805 = vunpack.c.h.b16 %v3770
  %v3806 = vunpack.c.l.b16 %v3771
  %v3807 = vunpack.c.h.b16 %v3771
  %v3808 = vunpack.c.l.b16 %v3772
  %v3809 = vunpack.c.h.b16 %v3772
  %v3810 = vunpack.c.l.b16 %v3773
  %v3811 = vunpack.c.h.b16 %v3773
  %v3812 = vunpack.c.l.b16 %v3774
  %v3813 = vpack.c.b16 %v3788, %v3788
  %v3814 = vpack.c.b16 %v3789, %v3789
  %v3815 = vpack.c.b16 %v3790, %v3790
  %v3816 = vpack.c.b16 %v3791, %v3791
  %v3817 = vpack.c.b16 %v3792, %v3792
  %v3818 = vpack.c.b16 %v3793, %v3793
  %v3819 = vpack.c.b16 %v3794, %v3794
  %v3820 = vpack.c.b16 %v3795, %v3795
  %v3821 = vpack.c.b16 %v3796, %v3796
  %v3822 = vpack.c.b16 %v3797, %v3797
  %v3823 = vpack.c.b16 %v3798, %v3798
  %v3824 = vpack.c.b16 %v3799, %v3799
  %v3825 = vpack.c.b16 %v3800, %v3800
  %v3826 = vpack.c.b16 %v3801, %v3801
  %v3827 = vpack.c.b16 %v3802, %v3802
  %v3828 = vpack.c.b16 %v3803, %v3803
  %v3829 = vpack.c.b16 %v3804, %v3804
  %v3830 = vpack.c.b16 %v3805, %v3805
  %v3831 = vpack.c.b16 %v3806, %v3806
  %v3832 = vpack.c.b16 %v3807, %v3807
  %v3833 = vpack.c.b16 %v3808, %v3808
  %v3834 = vpack.c.b16 %v3809, %v3809
  %v3835 = vpack.c.b16 %v3810, %v3810
  %v3836 = vpack.c.b16 %v3811, %v3811
  %v3837 = vpack.c.b16 %v3812, %v3812
  %3863 = vst.msk [vmem:[#allocation2] sm:$0xf] %vm156, %v3813
  %3864 = vst.msk [vmem:[#allocation2 + $0x8] sm:$0xf] %vm156, %v3814
  %3865 = vst.msk [vmem:[#allocation2 + $0x10] sm:$0xf] %vm156, %v3815
  %3866 = vst.msk [vmem:[#allocation2 + $0x18] sm:$0xf] %vm156, %v3816
  %3867 = vst.msk [vmem:[#allocation2 + $0x20] sm:$0xf] %vm156, %v3817
  %3868 = vst.msk [vmem:[#allocation2 + $0x28] sm:$0xf] %vm156, %v3818
  %3869 = vst.msk [vmem:[#allocation2 + $0x30] sm:$0xf] %vm156, %v3819
  %3870 = vst.msk [vmem:[#allocation2 + $0x38] sm:$0xf] %vm156, %v3820
  %3871 = vst.msk [vmem:[#allocation2 + $0x40] sm:$0xf] %vm156, %v3821
  %3872 = vst.msk [vmem:[#allocation2 + $0x48] sm:$0xf] %vm156, %v3822
  %3873 = vst.msk [vmem:[#allocation2 + $0x50] sm:$0xf] %vm156, %v3823
  %3874 = vst.msk [vmem:[#allocation2 + $0x58] sm:$0xf] %vm156, %v3824
  %3875 = vst.msk [vmem:[#allocation2 + $0x60] sm:$0xf] %vm156, %v3825
  %3876 = vst.msk [vmem:[#allocation2 + $0x68] sm:$0xf] %vm156, %v3826
  %3877 = vst.msk [vmem:[#allocation2 + $0x70] sm:$0xf] %vm156, %v3827
  %3878 = vst.msk [vmem:[#allocation2 + $0x78] sm:$0xf] %vm156, %v3828
  %3879 = vst.msk [vmem:[#allocation2 + $0x80] sm:$0xf] %vm156, %v3829
  %3880 = vst.msk [vmem:[#allocation2 + $0x88] sm:$0xf] %vm156, %v3830
  %3881 = vst.msk [vmem:[#allocation2 + $0x90] sm:$0xf] %vm156, %v3831
  %3882 = vst.msk [vmem:[#allocation2 + $0x98] sm:$0xf] %vm156, %v3832
  %3883 = vst.msk [vmem:[#allocation2 + $0xa0] sm:$0xf] %vm156, %v3833
  %3884 = vst.msk [vmem:[#allocation2 + $0xa8] sm:$0xf] %vm156, %v3834
  %3885 = vst.msk [vmem:[#allocation2 + $0xb0] sm:$0xf] %vm156, %v3835
  %3886 = vst.msk [vmem:[#allocation2 + $0xb8] sm:$0xf] %vm156, %v3836
  %3887 = vst.msk [vmem:[#allocation2 + $0xc0] sm:$0xf] %vm156, %v3837
  %v3888 = vld [vmem:[%s2 + $0x64] sm:$0xff]
  %v3889 = vld [vmem:[%s2 + $0x6c] sm:$0xff]
  %v3890 = vld [vmem:[%s2 + $0x74] sm:$0xff]
  %v3891 = vld [vmem:[%s2 + $0x7c] sm:$0xff]
  %v3892 = vld [vmem:[%s2 + $0x84] sm:$0xff]
  %v3893 = vld [vmem:[%s2 + $0x8c] sm:$0xff]
  %v3894 = vld [vmem:[%s2 + $0x94] sm:$0xff]
  %v3895 = vld [vmem:[%s2 + $0x9c] sm:$0xff]
  %v3896 = vld [vmem:[%s2 + $0xa4] sm:$0xff]
  %v3897 = vld [vmem:[%s2 + $0xac] sm:$0xff]
  %v3898 = vld [vmem:[%s2 + $0xb4] sm:$0xff]
  %v3899 = vld [vmem:[%s2 + $0xbc] sm:$0xff]
  %v3900 = vld [vmem:[%s2 + $0xc4] sm:$0xff]
  %v3901 = vld [vmem:[%s2 + $0xcc] sm:$0xff]
  %v3902 = vld [vmem:[%s2 + $0xd4] sm:$0xff]
  %v3903 = vld [vmem:[%s2 + $0xdc] sm:$0xff]
  %v3904 = vld [vmem:[%s2 + $0xe4] sm:$0xff]
  %v3905 = vld [vmem:[%s2 + $0xec] sm:$0xff]
  %v3906 = vld [vmem:[%s2 + $0xf4] sm:$0xff]
  %v3907 = vld [vmem:[%s2 + $0xfc] sm:$0xff]
  %v3908 = vld [vmem:[%s2 + $0x104] sm:$0xff]
  %v3909 = vld [vmem:[%s2 + $0x10c] sm:$0xff]
  %v3910 = vld [vmem:[%s2 + $0x114] sm:$0xff]
  %v3911 = vld [vmem:[%s2 + $0x11c] sm:$0xff]
  %v3912 = vld [vmem:[%s2 + $0x124] sm:$0xff]
  %v3913 = vpack.c.bf16 %v3889, %v3888
  %v3914 = vpack.c.bf16 %v3891, %v3890
  %v3915 = vpack.c.bf16 %v3893, %v3892
  %v3916 = vpack.c.bf16 %v3895, %v3894
  %v3917 = vpack.c.bf16 %v3897, %v3896
  %v3918 = vpack.c.bf16 %v3899, %v3898
  %v3919 = vpack.c.bf16 %v3901, %v3900
  %v3920 = vpack.c.bf16 %v3903, %v3902
  %v3921 = vpack.c.bf16 %v3905, %v3904
  %v3922 = vpack.c.bf16 %v3907, %v3906
  %v3923 = vpack.c.bf16 %v3909, %v3908
  %v3924 = vpack.c.bf16 %v3911, %v3910
  %v3925 = vpack.c.bf16 %v3912, %v3912
  %v3939 = vunpack.c.l.b16 %v3913
  %v3940 = vunpack.c.h.b16 %v3913
  %v3941 = vunpack.c.l.b16 %v3914
  %v3942 = vunpack.c.h.b16 %v3914
  %v3943 = vunpack.c.l.b16 %v3915
  %v3944 = vunpack.c.h.b16 %v3915
  %v3945 = vunpack.c.l.b16 %v3916
  %v3946 = vunpack.c.h.b16 %v3916
  %v3947 = vunpack.c.l.b16 %v3917
  %v3948 = vunpack.c.h.b16 %v3917
  %v3949 = vunpack.c.l.b16 %v3918
  %v3950 = vunpack.c.h.b16 %v3918
  %v3951 = vunpack.c.l.b16 %v3919
  %v3952 = vunpack.c.h.b16 %v3919
  %v3953 = vunpack.c.l.b16 %v3920
  %v3954 = vunpack.c.h.b16 %v3920
  %v3955 = vunpack.c.l.b16 %v3921
  %v3956 = vunpack.c.h.b16 %v3921
  %v3957 = vunpack.c.l.b16 %v3922
  %v3958 = vunpack.c.h.b16 %v3922
  %v3959 = vunpack.c.l.b16 %v3923
  %v3960 = vunpack.c.h.b16 %v3923
  %v3961 = vunpack.c.l.b16 %v3924
  %v3962 = vunpack.c.h.b16 %v3924
  %v3963 = vunpack.c.l.b16 %v3925
  %v3964 = vpack.c.b16 %v3939, %v3939
  %v3965 = vpack.c.b16 %v3940, %v3940
  %v3966 = vpack.c.b16 %v3941, %v3941
  %v3967 = vpack.c.b16 %v3942, %v3942
  %v3968 = vpack.c.b16 %v3943, %v3943
  %v3969 = vpack.c.b16 %v3944, %v3944
  %v3970 = vpack.c.b16 %v3945, %v3945
  %v3971 = vpack.c.b16 %v3946, %v3946
  %v3972 = vpack.c.b16 %v3947, %v3947
  %v3973 = vpack.c.b16 %v3948, %v3948
  %v3974 = vpack.c.b16 %v3949, %v3949
  %v3975 = vpack.c.b16 %v3950, %v3950
  %v3976 = vpack.c.b16 %v3951, %v3951
  %v3977 = vpack.c.b16 %v3952, %v3952
  %v3978 = vpack.c.b16 %v3953, %v3953
  %v3979 = vpack.c.b16 %v3954, %v3954
  %v3980 = vpack.c.b16 %v3955, %v3955
  %v3981 = vpack.c.b16 %v3956, %v3956
  %v3982 = vpack.c.b16 %v3957, %v3957
  %v3983 = vpack.c.b16 %v3958, %v3958
  %v3984 = vpack.c.b16 %v3959, %v3959
  %v3985 = vpack.c.b16 %v3960, %v3960
  %v3986 = vpack.c.b16 %v3961, %v3961
  %v3987 = vpack.c.b16 %v3962, %v3962
  %v3988 = vpack.c.b16 %v3963, %v3963
  %3989 = vrot.lane.b32.xlu0 %v3964, 64
  %v3990 = vpop.permute.xlu0 %3989
  %3991 = vrot.lane.b32.xlu0 %v3965, 64
  %v3992 = vpop.permute.xlu0 %3991
  %3993 = vrot.lane.b32.xlu0 %v3966, 64
  %v3994 = vpop.permute.xlu0 %3993
  %3995 = vrot.lane.b32.xlu0 %v3967, 64
  %v3996 = vpop.permute.xlu0 %3995
  %3997 = vrot.lane.b32.xlu0 %v3968, 64
  %v3998 = vpop.permute.xlu0 %3997
  %3999 = vrot.lane.b32.xlu0 %v3969, 64
  %v4000 = vpop.permute.xlu0 %3999
  %4001 = vrot.lane.b32.xlu0 %v3970, 64
  %v4002 = vpop.permute.xlu0 %4001
  %4003 = vrot.lane.b32.xlu0 %v3971, 64
  %v4004 = vpop.permute.xlu0 %4003
  %4005 = vrot.lane.b32.xlu0 %v3972, 64
  %v4006 = vpop.permute.xlu0 %4005
  %4007 = vrot.lane.b32.xlu0 %v3973, 64
  %v4008 = vpop.permute.xlu0 %4007
  %4009 = vrot.lane.b32.xlu0 %v3974, 64
  %v4010 = vpop.permute.xlu0 %4009
  %4011 = vrot.lane.b32.xlu0 %v3975, 64
  %v4012 = vpop.permute.xlu0 %4011
  %4013 = vrot.lane.b32.xlu0 %v3976, 64
  %v4014 = vpop.permute.xlu0 %4013
  %4015 = vrot.lane.b32.xlu0 %v3977, 64
  %v4016 = vpop.permute.xlu0 %4015
  %4017 = vrot.lane.b32.xlu0 %v3978, 64
  %v4018 = vpop.permute.xlu0 %4017
  %4019 = vrot.lane.b32.xlu0 %v3979, 64
  %v4020 = vpop.permute.xlu0 %4019
  %4021 = vrot.lane.b32.xlu0 %v3980, 64
  %v4022 = vpop.permute.xlu0 %4021
  %4023 = vrot.lane.b32.xlu0 %v3981, 64
  %v4024 = vpop.permute.xlu0 %4023
  %4025 = vrot.lane.b32.xlu0 %v3982, 64
  %v4026 = vpop.permute.xlu0 %4025
  %4027 = vrot.lane.b32.xlu0 %v3983, 64
  %v4028 = vpop.permute.xlu0 %4027
  %4029 = vrot.lane.b32.xlu0 %v3984, 64
  %v4030 = vpop.permute.xlu0 %4029
  %4031 = vrot.lane.b32.xlu0 %v3985, 64
  %v4032 = vpop.permute.xlu0 %4031
  %4033 = vrot.lane.b32.xlu0 %v3986, 64
  %v4034 = vpop.permute.xlu0 %4033
  %4035 = vrot.lane.b32.xlu0 %v3987, 64
  %v4036 = vpop.permute.xlu0 %4035
  %4037 = vrot.lane.b32.xlu0 %v3988, 64
  %v4038 = vpop.permute.xlu0 %4037
  %4064 = vst.msk [vmem:[#allocation2] sm:$0xf] %vm358, %v3990
  %4065 = vst.msk [vmem:[#allocation2 + $0x8] sm:$0xf] %vm358, %v3992
  %4066 = vst.msk [vmem:[#allocation2 + $0x10] sm:$0xf] %vm358, %v3994
  %4067 = vst.msk [vmem:[#allocation2 + $0x18] sm:$0xf] %vm358, %v3996
  %4068 = vst.msk [vmem:[#allocation2 + $0x20] sm:$0xf] %vm358, %v3998
  %4069 = vst.msk [vmem:[#allocation2 + $0x28] sm:$0xf] %vm358, %v4000
  %4070 = vst.msk [vmem:[#allocation2 + $0x30] sm:$0xf] %vm358, %v4002
  %4071 = vst.msk [vmem:[#allocation2 + $0x38] sm:$0xf] %vm358, %v4004
  %4072 = vst.msk [vmem:[#allocation2 + $0x40] sm:$0xf] %vm358, %v4006
  %4073 = vst.msk [vmem:[#allocation2 + $0x48] sm:$0xf] %vm358, %v4008
  %4074 = vst.msk [vmem:[#allocation2 + $0x50] sm:$0xf] %vm358, %v4010
  %4075 = vst.msk [vmem:[#allocation2 + $0x58] sm:$0xf] %vm358, %v4012
  %4076 = vst.msk [vmem:[#allocation2 + $0x60] sm:$0xf] %vm358, %v4014
  %4077 = vst.msk [vmem:[#allocation2 + $0x68] sm:$0xf] %vm358, %v4016
  %4078 = vst.msk [vmem:[#allocation2 + $0x70] sm:$0xf] %vm358, %v4018
  %4079 = vst.msk [vmem:[#allocation2 + $0x78] sm:$0xf] %vm358, %v4020
  %4080 = vst.msk [vmem:[#allocation2 + $0x80] sm:$0xf] %vm358, %v4022
  %4081 = vst.msk [vmem:[#allocation2 + $0x88] sm:$0xf] %vm358, %v4024
  %4082 = vst.msk [vmem:[#allocation2 + $0x90] sm:$0xf] %vm358, %v4026
  %4083 = vst.msk [vmem:[#allocation2 + $0x98] sm:$0xf] %vm358, %v4028
  %4084 = vst.msk [vmem:[#allocation2 + $0xa0] sm:$0xf] %vm358, %v4030
  %4085 = vst.msk [vmem:[#allocation2 + $0xa8] sm:$0xf] %vm358, %v4032
  %4086 = vst.msk [vmem:[#allocation2 + $0xb0] sm:$0xf] %vm358, %v4034
  %4087 = vst.msk [vmem:[#allocation2 + $0xb8] sm:$0xf] %vm358, %v4036
  %4088 = vst.msk [vmem:[#allocation2 + $0xc0] sm:$0xf] %vm358, %v4038
  %v4089 = vld [vmem:[%s2 + $0x65] sm:$0xff]
  %v4090 = vld [vmem:[%s2 + $0x6d] sm:$0xff]
  %v4091 = vld [vmem:[%s2 + $0x75] sm:$0xff]
  %v4092 = vld [vmem:[%s2 + $0x7d] sm:$0xff]
  %v4093 = vld [vmem:[%s2 + $0x85] sm:$0xff]
  %v4094 = vld [vmem:[%s2 + $0x8d] sm:$0xff]
  %v4095 = vld [vmem:[%s2 + $0x95] sm:$0xff]
  %v4096 = vld [vmem:[%s2 + $0x9d] sm:$0xff]
  %v4097 = vld [vmem:[%s2 + $0xa5] sm:$0xff]
  %v4098 = vld [vmem:[%s2 + $0xad] sm:$0xff]
  %v4099 = vld [vmem:[%s2 + $0xb5] sm:$0xff]
  %v4100 = vld [vmem:[%s2 + $0xbd] sm:$0xff]
  %v4101 = vld [vmem:[%s2 + $0xc5] sm:$0xff]
  %v4102 = vld [vmem:[%s2 + $0xcd] sm:$0xff]
  %v4103 = vld [vmem:[%s2 + $0xd5] sm:$0xff]
  %v4104 = vld [vmem:[%s2 + $0xdd] sm:$0xff]
  %v4105 = vld [vmem:[%s2 + $0xe5] sm:$0xff]
  %v4106 = vld [vmem:[%s2 + $0xed] sm:$0xff]
  %v4107 = vld [vmem:[%s2 + $0xf5] sm:$0xff]
  %v4108 = vld [vmem:[%s2 + $0xfd] sm:$0xff]
  %v4109 = vld [vmem:[%s2 + $0x105] sm:$0xff]
  %v4110 = vld [vmem:[%s2 + $0x10d] sm:$0xff]
  %v4111 = vld [vmem:[%s2 + $0x115] sm:$0xff]
  %v4112 = vld [vmem:[%s2 + $0x11d] sm:$0xff]
  %v4113 = vld [vmem:[%s2 + $0x125] sm:$0xff]
  %v4114 = vpack.c.bf16 %v4090, %v4089
  %v4115 = vpack.c.bf16 %v4092, %v4091
  %v4116 = vpack.c.bf16 %v4094, %v4093
  %v4117 = vpack.c.bf16 %v4096, %v4095
  %v4118 = vpack.c.bf16 %v4098, %v4097
  %v4119 = vpack.c.bf16 %v4100, %v4099
  %v4120 = vpack.c.bf16 %v4102, %v4101
  %v4121 = vpack.c.bf16 %v4104, %v4103
  %v4122 = vpack.c.bf16 %v4106, %v4105
  %v4123 = vpack.c.bf16 %v4108, %v4107
  %v4124 = vpack.c.bf16 %v4110, %v4109
  %v4125 = vpack.c.bf16 %v4112, %v4111
  %v4126 = vpack.c.bf16 %v4113, %v4113
  %v4140 = vunpack.c.l.b16 %v4114
  %v4141 = vunpack.c.h.b16 %v4114
  %v4142 = vunpack.c.l.b16 %v4115
  %v4143 = vunpack.c.h.b16 %v4115
  %v4144 = vunpack.c.l.b16 %v4116
  %v4145 = vunpack.c.h.b16 %v4116
  %v4146 = vunpack.c.l.b16 %v4117
  %v4147 = vunpack.c.h.b16 %v4117
  %v4148 = vunpack.c.l.b16 %v4118
  %v4149 = vunpack.c.h.b16 %v4118
  %v4150 = vunpack.c.l.b16 %v4119
  %v4151 = vunpack.c.h.b16 %v4119
  %v4152 = vunpack.c.l.b16 %v4120
  %v4153 = vunpack.c.h.b16 %v4120
  %v4154 = vunpack.c.l.b16 %v4121
  %v4155 = vunpack.c.h.b16 %v4121
  %v4156 = vunpack.c.l.b16 %v4122
  %v4157 = vunpack.c.h.b16 %v4122
  %v4158 = vunpack.c.l.b16 %v4123
  %v4159 = vunpack.c.h.b16 %v4123
  %v4160 = vunpack.c.l.b16 %v4124
  %v4161 = vunpack.c.h.b16 %v4124
  %v4162 = vunpack.c.l.b16 %v4125
  %v4163 = vunpack.c.h.b16 %v4125
  %v4164 = vunpack.c.l.b16 %v4126
  %v4165 = vpack.c.b16 %v4140, %v4140
  %v4166 = vpack.c.b16 %v4141, %v4141
  %v4167 = vpack.c.b16 %v4142, %v4142
  %v4168 = vpack.c.b16 %v4143, %v4143
  %v4169 = vpack.c.b16 %v4144, %v4144
  %v4170 = vpack.c.b16 %v4145, %v4145
  %v4171 = vpack.c.b16 %v4146, %v4146
  %v4172 = vpack.c.b16 %v4147, %v4147
  %v4173 = vpack.c.b16 %v4148, %v4148
  %v4174 = vpack.c.b16 %v4149, %v4149
  %v4175 = vpack.c.b16 %v4150, %v4150
  %v4176 = vpack.c.b16 %v4151, %v4151
  %v4177 = vpack.c.b16 %v4152, %v4152
  %v4178 = vpack.c.b16 %v4153, %v4153
  %v4179 = vpack.c.b16 %v4154, %v4154
  %v4180 = vpack.c.b16 %v4155, %v4155
  %v4181 = vpack.c.b16 %v4156, %v4156
  %v4182 = vpack.c.b16 %v4157, %v4157
  %v4183 = vpack.c.b16 %v4158, %v4158
  %v4184 = vpack.c.b16 %v4159, %v4159
  %v4185 = vpack.c.b16 %v4160, %v4160
  %v4186 = vpack.c.b16 %v4161, %v4161
  %v4187 = vpack.c.b16 %v4162, %v4162
  %v4188 = vpack.c.b16 %v4163, %v4163
  %v4189 = vpack.c.b16 %v4164, %v4164
  %4215 = vst.msk [vmem:[#allocation2 + $0x4] sm:$0xf] %vm156, %v4165
  %4216 = vst.msk [vmem:[#allocation2 + $0xc] sm:$0xf] %vm156, %v4166
  %4217 = vst.msk [vmem:[#allocation2 + $0x14] sm:$0xf] %vm156, %v4167
  %4218 = vst.msk [vmem:[#allocation2 + $0x1c] sm:$0xf] %vm156, %v4168
  %4219 = vst.msk [vmem:[#allocation2 + $0x24] sm:$0xf] %vm156, %v4169
  %4220 = vst.msk [vmem:[#allocation2 + $0x2c] sm:$0xf] %vm156, %v4170
  %4221 = vst.msk [vmem:[#allocation2 + $0x34] sm:$0xf] %vm156, %v4171
  %4222 = vst.msk [vmem:[#allocation2 + $0x3c] sm:$0xf] %vm156, %v4172
  %4223 = vst.msk [vmem:[#allocation2 + $0x44] sm:$0xf] %vm156, %v4173
  %4224 = vst.msk [vmem:[#allocation2 + $0x4c] sm:$0xf] %vm156, %v4174
  %4225 = vst.msk [vmem:[#allocation2 + $0x54] sm:$0xf] %vm156, %v4175
  %4226 = vst.msk [vmem:[#allocation2 + $0x5c] sm:$0xf] %vm156, %v4176
  %4227 = vst.msk [vmem:[#allocation2 + $0x64] sm:$0xf] %vm156, %v4177
  %4228 = vst.msk [vmem:[#allocation2 + $0x6c] sm:$0xf] %vm156, %v4178
  %4229 = vst.msk [vmem:[#allocation2 + $0x74] sm:$0xf] %vm156, %v4179
  %4230 = vst.msk [vmem:[#allocation2 + $0x7c] sm:$0xf] %vm156, %v4180
  %4231 = vst.msk [vmem:[#allocation2 + $0x84] sm:$0xf] %vm156, %v4181
  %4232 = vst.msk [vmem:[#allocation2 + $0x8c] sm:$0xf] %vm156, %v4182
  %4233 = vst.msk [vmem:[#allocation2 + $0x94] sm:$0xf] %vm156, %v4183
  %4234 = vst.msk [vmem:[#allocation2 + $0x9c] sm:$0xf] %vm156, %v4184
  %4235 = vst.msk [vmem:[#allocation2 + $0xa4] sm:$0xf] %vm156, %v4185
  %4236 = vst.msk [vmem:[#allocation2 + $0xac] sm:$0xf] %vm156, %v4186
  %4237 = vst.msk [vmem:[#allocation2 + $0xb4] sm:$0xf] %vm156, %v4187
  %4238 = vst.msk [vmem:[#allocation2 + $0xbc] sm:$0xf] %vm156, %v4188
  %4239 = vst.msk [vmem:[#allocation2 + $0xc4] sm:$0xf] %vm156, %v4189
  %v4240 = vld [vmem:[#allocation2] sm:$0xff]
  %v4241 = vld [vmem:[#allocation2 + $0x8] sm:$0xff]
  %v4242 = vld [vmem:[#allocation2 + $0x10] sm:$0xff]
  %v4243 = vld [vmem:[#allocation2 + $0x18] sm:$0xff]
  %v4244 = vld [vmem:[#allocation2 + $0x20] sm:$0xff]
  %v4245 = vld [vmem:[#allocation2 + $0x28] sm:$0xff]
  %v4246 = vld [vmem:[#allocation2 + $0x30] sm:$0xff]
  %v4247 = vld [vmem:[#allocation2 + $0x38] sm:$0xff]
  %v4248 = vld [vmem:[#allocation2 + $0x40] sm:$0xff]
  %v4249 = vld [vmem:[#allocation2 + $0x48] sm:$0xff]
  %v4250 = vld [vmem:[#allocation2 + $0x50] sm:$0xff]
  %v4251 = vld [vmem:[#allocation2 + $0x58] sm:$0xff]
  %v4252 = vld [vmem:[#allocation2 + $0x60] sm:$0xff]
  %v4253 = vld [vmem:[#allocation2 + $0x68] sm:$0xff]
  %v4254 = vld [vmem:[#allocation2 + $0x70] sm:$0xff]
  %v4255 = vld [vmem:[#allocation2 + $0x78] sm:$0xff]
  %v4256 = vld [vmem:[#allocation2 + $0x80] sm:$0xff]
  %v4257 = vld [vmem:[#allocation2 + $0x88] sm:$0xff]
  %v4258 = vld [vmem:[#allocation2 + $0x90] sm:$0xff]
  %v4259 = vld [vmem:[#allocation2 + $0x98] sm:$0xff]
  %v4260 = vld [vmem:[#allocation2 + $0xa0] sm:$0xff]
  %v4261 = vld [vmem:[#allocation2 + $0xa8] sm:$0xff]
  %v4262 = vld [vmem:[#allocation2 + $0xb0] sm:$0xff]
  %v4263 = vld [vmem:[#allocation2 + $0xb8] sm:$0xff]
  %v4264 = vld [vmem:[#allocation2 + $0xc0] sm:$0xff]
  %s4265 = scalar_lea.vmem %s4, 96
  %v4266 = vld [vmem:[%s4265] sm:$0xf]
  %v4267 = vld [vmem:[%s4265 + $0x4] sm:$0xf]
  %v4268 = vld [vmem:[%s4265 + $0x8] sm:$0xf]
  %v4269 = vld [vmem:[%s4265 + $0xc] sm:$0xf]
  %v4270 = vld [vmem:[%s4265 + $0x10] sm:$0xf]
  %v4271 = vld [vmem:[%s4265 + $0x14] sm:$0xf]
  %v4272 = vld [vmem:[%s4265 + $0x18] sm:$0xf]
  %v4273 = vld [vmem:[%s4265 + $0x1c] sm:$0xf]
  %v4274 = vld [vmem:[%s4265 + $0x20] sm:$0xf]
  %v4275 = vld [vmem:[%s4265 + $0x24] sm:$0xf]
  %v4276 = vld [vmem:[%s4265 + $0x28] sm:$0xf]
  %v4277 = vld [vmem:[%s4265 + $0x2c] sm:$0xf]
  %v4278 = vld [vmem:[%s4265 + $0x30] sm:$0xf]
  %v4279 = vld [vmem:[%s4265 + $0x34] sm:$0xf]
  %v4280 = vld [vmem:[%s4265 + $0x38] sm:$0xf]
  %v4281 = vld [vmem:[%s4265 + $0x3c] sm:$0xf]
  %v4282 = vld [vmem:[%s4265 + $0x40] sm:$0xf]
  %v4283 = vld [vmem:[%s4265 + $0x44] sm:$0xf]
  %v4284 = vld [vmem:[%s4265 + $0x48] sm:$0xf]
  %v4285 = vld [vmem:[%s4265 + $0x4c] sm:$0xf]
  %v4286 = vld [vmem:[%s4265 + $0x50] sm:$0xf]
  %v4287 = vld [vmem:[%s4265 + $0x54] sm:$0xf]
  %v4288 = vld [vmem:[%s4265 + $0x58] sm:$0xf]
  %v4289 = vld [vmem:[%s4265 + $0x5c] sm:$0xf]
  %v4315 = vunpack.c.l.b16 %v4240
  %v4316 = vunpack.c.h.b16 %v4240
  %v4317 = vunpack.c.l.b16 %v4241
  %v4318 = vunpack.c.h.b16 %v4241
  %v4319 = vunpack.c.l.b16 %v4242
  %v4320 = vunpack.c.h.b16 %v4242
  %v4321 = vunpack.c.l.b16 %v4243
  %v4322 = vunpack.c.h.b16 %v4243
  %v4323 = vunpack.c.l.b16 %v4244
  %v4324 = vunpack.c.h.b16 %v4244
  %v4325 = vunpack.c.l.b16 %v4245
  %v4326 = vunpack.c.h.b16 %v4245
  %v4327 = vunpack.c.l.b16 %v4246
  %v4328 = vunpack.c.h.b16 %v4246
  %v4329 = vunpack.c.l.b16 %v4247
  %v4330 = vunpack.c.h.b16 %v4247
  %v4331 = vunpack.c.l.b16 %v4248
  %v4332 = vunpack.c.h.b16 %v4248
  %v4333 = vunpack.c.l.b16 %v4249
  %v4334 = vunpack.c.h.b16 %v4249
  %v4335 = vunpack.c.l.b16 %v4250
  %v4336 = vunpack.c.h.b16 %v4250
  %v4337 = vunpack.c.l.b16 %v4251
  %v4338 = vunpack.c.h.b16 %v4251
  %v4339 = vunpack.c.l.b16 %v4252
  %v4340 = vunpack.c.h.b16 %v4252
  %v4341 = vunpack.c.l.b16 %v4253
  %v4342 = vunpack.c.h.b16 %v4253
  %v4343 = vunpack.c.l.b16 %v4254
  %v4344 = vunpack.c.h.b16 %v4254
  %v4345 = vunpack.c.l.b16 %v4255
  %v4346 = vunpack.c.h.b16 %v4255
  %v4347 = vunpack.c.l.b16 %v4256
  %v4348 = vunpack.c.h.b16 %v4256
  %v4349 = vunpack.c.l.b16 %v4257
  %v4350 = vunpack.c.h.b16 %v4257
  %v4351 = vunpack.c.l.b16 %v4258
  %v4352 = vunpack.c.h.b16 %v4258
  %v4353 = vunpack.c.l.b16 %v4259
  %v4354 = vunpack.c.h.b16 %v4259
  %v4355 = vunpack.c.l.b16 %v4260
  %v4356 = vunpack.c.h.b16 %v4260
  %v4357 = vunpack.c.l.b16 %v4261
  %v4358 = vunpack.c.h.b16 %v4261
  %v4359 = vunpack.c.l.b16 %v4262
  %v4360 = vunpack.c.h.b16 %v4262
  %v4361 = vunpack.c.l.b16 %v4263
  %v4362 = vunpack.c.h.b16 %v4263
  %v4363 = vunpack.c.l.b16 %v4264
  %v4364 = vunpack.c.h.b16 %v4264
  %v4365 = vpack.c.b16 %v4317, %v4315
  %v4366 = vpack.c.b16 %v4318, %v4316
  %v4367 = vpack.c.b16 %v4321, %v4319
  %v4368 = vpack.c.b16 %v4322, %v4320
  %v4369 = vpack.c.b16 %v4325, %v4323
  %v4370 = vpack.c.b16 %v4326, %v4324
  %v4371 = vpack.c.b16 %v4329, %v4327
  %v4372 = vpack.c.b16 %v4330, %v4328
  %v4373 = vpack.c.b16 %v4333, %v4331
  %v4374 = vpack.c.b16 %v4334, %v4332
  %v4375 = vpack.c.b16 %v4337, %v4335
  %v4376 = vpack.c.b16 %v4338, %v4336
  %v4377 = vpack.c.b16 %v4341, %v4339
  %v4378 = vpack.c.b16 %v4342, %v4340
  %v4379 = vpack.c.b16 %v4345, %v4343
  %v4380 = vpack.c.b16 %v4346, %v4344
  %v4381 = vpack.c.b16 %v4349, %v4347
  %v4382 = vpack.c.b16 %v4350, %v4348
  %v4383 = vpack.c.b16 %v4353, %v4351
  %v4384 = vpack.c.b16 %v4354, %v4352
  %v4385 = vpack.c.b16 %v4357, %v4355
  %v4386 = vpack.c.b16 %v4358, %v4356
  %v4387 = vpack.c.b16 %v4361, %v4359
  %v4388 = vpack.c.b16 %v4362, %v4360
  %v4389 = vpack.c.b16 %v4363, %v4363
  %v4390 = vpack.c.b16 %v4364, %v4364
  %v4428 = vunpack.c.l.b16 %v4266
  %v4429 = vunpack.c.l.b16 %v4267
  %v4430 = vunpack.c.l.b16 %v4268
  %v4431 = vunpack.c.l.b16 %v4269
  %v4432 = vunpack.c.l.b16 %v4270
  %v4433 = vunpack.c.l.b16 %v4271
  %v4434 = vunpack.c.l.b16 %v4272
  %v4435 = vunpack.c.l.b16 %v4273
  %v4436 = vunpack.c.l.b16 %v4274
  %v4437 = vunpack.c.l.b16 %v4275
  %v4438 = vunpack.c.l.b16 %v4276
  %v4439 = vunpack.c.l.b16 %v4277
  %v4440 = vunpack.c.l.b16 %v4278
  %v4441 = vunpack.c.l.b16 %v4279
  %v4442 = vunpack.c.l.b16 %v4280
  %v4443 = vunpack.c.l.b16 %v4281
  %v4444 = vunpack.c.l.b16 %v4282
  %v4445 = vunpack.c.l.b16 %v4283
  %v4446 = vunpack.c.l.b16 %v4284
  %v4447 = vunpack.c.l.b16 %v4285
  %v4448 = vunpack.c.l.b16 %v4286
  %v4449 = vunpack.c.l.b16 %v4287
  %v4450 = vunpack.c.l.b16 %v4288
  %v4451 = vunpack.c.l.b16 %v4289
  %v4452 = vpack.c.b16 %v4429, %v4428
  %v4453 = vpack.c.b16 %v4431, %v4430
  %v4454 = vpack.c.b16 %v4433, %v4432
  %v4455 = vpack.c.b16 %v4435, %v4434
  %v4456 = vpack.c.b16 %v4437, %v4436
  %v4457 = vpack.c.b16 %v4439, %v4438
  %v4458 = vpack.c.b16 %v4441, %v4440
  %v4459 = vpack.c.b16 %v4443, %v4442
  %v4460 = vpack.c.b16 %v4445, %v4444
  %v4461 = vpack.c.b16 %v4447, %v4446
  %v4462 = vpack.c.b16 %v4449, %v4448
  %v4463 = vpack.c.b16 %v4451, %v4450
  %v4477 = vsel %vm1323, %v4366, 0
  %v4480 = vsel %vm1323, %v4368, 0
  %v4483 = vsel %vm1323, %v4370, 0
  %v4486 = vsel %vm1323, %v4372, 0
  %v4489 = vsel %vm1323, %v4374, 0
  %v4492 = vsel %vm1323, %v4376, 0
  %v4495 = vsel %vm1323, %v4378, 0
  %v4498 = vsel %vm1323, %v4380, 0
  %v4501 = vsel %vm1323, %v4382, 0
  %v4504 = vsel %vm1323, %v4384, 0
  %v4507 = vsel %vm1323, %v4386, 0
  %v4510 = vsel %vm1323, %v4388, 0
  %v4513 = vsel %vm1323, %v4390, 0
  %4515 = vmatprep.subr.bf16.mxu0 0
  %4516 = vmatpush1.bf16.msra.mxu0 %v4459
  %4517 = vmatprep.subr.bf16.mxu0 0
  %4518 = vmatpush1.bf16.msra.mxu0 %v4458
  %4519 = vmatprep.subr.bf16.mxu0 0
  %4520 = vmatpush1.bf16.msra.mxu0 %v4457
  %4521 = vmatprep.subr.bf16.mxu0 0
  %4522 = vmatpush1.bf16.msra.mxu0 %v4456
  %4523 = vmatprep.subr.bf16.mxu0 0
  %4524 = vmatpush1.bf16.msra.mxu0 %v4455
  %4525 = vmatprep.subr.bf16.mxu0 0
  %4526 = vmatpush1.bf16.msra.mxu0 %v4454
  %4527 = vmatprep.subr.bf16.mxu0 0
  %4528 = vmatpush1.bf16.msra.mxu0 %v4453
  %4529 = vmatprep.subr.bf16.mxu0 0
  %4530 = vmatpush1.bf16.msra.mxu0 %v4452
  %4531 = vmatprep.subr.bf16.mxu0 0
  %4532 = vmatpush2.bf16.msra.mxu0 0
  %4533 = vmatprep.subr.bf16.mxu0 0
  %4534 = vmatpush2.bf16.msra.mxu0 0
  %4535 = vmatprep.subr.bf16.mxu0 0
  %4536 = vmatpush2.bf16.msra.mxu0 0
  %4537 = vmatprep.subr.bf16.mxu0 0
  %4538 = vmatpush2.bf16.msra.mxu0 0
  %4539 = vmatprep.subr.bf16.mxu0 0
  %4540 = vmatpush2.bf16.msra.mxu0 %v4463
  %4541 = vmatprep.subr.bf16.mxu0 0
  %4542 = vmatpush2.bf16.msra.mxu0 %v4462
  %4543 = vmatprep.subr.bf16.mxu0 0
  %4544 = vmatpush2.bf16.msra.mxu0 %v4461
  %4545 = vmatprep.subr.bf16.mxu0 0
  %4546 = vmatpush2.bf16.msra.mxu0 %v4460
  %4547 = vmatprep.mubr.bf16.mxu0 %v4477
  %4548 = vmatmul.mubr.bf16.gmra.mxu0 %v4365
  %v4549 = vpop.f32.mrf.mxu0
  %v4550 = vadd.f32 0.0, %v4549
  %v4551 = vpop.f32.mrf.mxu0
  %v4552 = vpop.f32.mrf.mxu0
  %v4553 = vadd.f32 0.0, %v4552
  %v4554 = vpop.f32.mrf.mxu0
  %4555 = vmatprep.mubr.bf16.mxu0 %v4480
  %4556 = vmatmul.mubr.bf16.gmra.mxu0 %v4367
  %v4557 = vpop.f32.mrf.mxu0
  %v4558 = vadd.f32 0.0, %v4557
  %v4559 = vpop.f32.mrf.mxu0
  %v4560 = vpop.f32.mrf.mxu0
  %v4561 = vadd.f32 0.0, %v4560
  %v4562 = vpop.f32.mrf.mxu0
  %4563 = vmatprep.mubr.bf16.mxu0 %v4483
  %4564 = vmatmul.mubr.bf16.gmra.mxu0 %v4369
  %v4565 = vpop.f32.mrf.mxu0
  %v4566 = vadd.f32 0.0, %v4565
  %v4567 = vpop.f32.mrf.mxu0
  %v4568 = vpop.f32.mrf.mxu0
  %v4569 = vadd.f32 0.0, %v4568
  %v4570 = vpop.f32.mrf.mxu0
  %4571 = vmatprep.mubr.bf16.mxu0 %v4486
  %4572 = vmatmul.mubr.bf16.gmra.mxu0 %v4371
  %v4573 = vpop.f32.mrf.mxu0
  %v4574 = vadd.f32 0.0, %v4573
  %v4575 = vpop.f32.mrf.mxu0
  %v4576 = vpop.f32.mrf.mxu0
  %v4577 = vadd.f32 0.0, %v4576
  %v4578 = vpop.f32.mrf.mxu0
  %4579 = vmatprep.mubr.bf16.mxu0 %v4489
  %4580 = vmatmul.mubr.bf16.gmra.mxu0 %v4373
  %v4581 = vpop.f32.mrf.mxu0
  %v4582 = vadd.f32 0.0, %v4581
  %v4583 = vpop.f32.mrf.mxu0
  %v4584 = vpop.f32.mrf.mxu0
  %v4585 = vadd.f32 0.0, %v4584
  %v4586 = vpop.f32.mrf.mxu0
  %4587 = vmatprep.mubr.bf16.mxu0 %v4492
  %4588 = vmatmul.mubr.bf16.gmra.mxu0 %v4375
  %v4589 = vpop.f32.mrf.mxu0
  %v4590 = vadd.f32 0.0, %v4589
  %v4591 = vpop.f32.mrf.mxu0
  %v4592 = vpop.f32.mrf.mxu0
  %v4593 = vadd.f32 0.0, %v4592
  %v4594 = vpop.f32.mrf.mxu0
  %4595 = vmatprep.mubr.bf16.mxu0 %v4495
  %4596 = vmatmul.mubr.bf16.gmra.mxu0 %v4377
  %v4597 = vpop.f32.mrf.mxu0
  %v4598 = vadd.f32 0.0, %v4597
  %v4599 = vpop.f32.mrf.mxu0
  %v4600 = vpop.f32.mrf.mxu0
  %v4601 = vadd.f32 0.0, %v4600
  %v4602 = vpop.f32.mrf.mxu0
  %4603 = vmatprep.mubr.bf16.mxu0 %v4498
  %4604 = vmatmul.mubr.bf16.gmra.mxu0 %v4379
  %v4605 = vpop.f32.mrf.mxu0
  %v4606 = vadd.f32 0.0, %v4605
  %v4607 = vpop.f32.mrf.mxu0
  %v4608 = vpop.f32.mrf.mxu0
  %v4609 = vadd.f32 0.0, %v4608
  %v4610 = vpop.f32.mrf.mxu0
  %4611 = vmatprep.mubr.bf16.mxu0 %v4501
  %4612 = vmatmul.mubr.bf16.gmra.mxu0 %v4381
  %v4613 = vpop.f32.mrf.mxu0
  %v4614 = vadd.f32 0.0, %v4613
  %v4615 = vpop.f32.mrf.mxu0
  %v4616 = vpop.f32.mrf.mxu0
  %v4617 = vadd.f32 0.0, %v4616
  %v4618 = vpop.f32.mrf.mxu0
  %4619 = vmatprep.mubr.bf16.mxu0 %v4504
  %4620 = vmatmul.mubr.bf16.gmra.mxu0 %v4383
  %v4621 = vpop.f32.mrf.mxu0
  %v4622 = vadd.f32 0.0, %v4621
  %v4623 = vpop.f32.mrf.mxu0
  %v4624 = vpop.f32.mrf.mxu0
  %v4625 = vadd.f32 0.0, %v4624
  %v4626 = vpop.f32.mrf.mxu0
  %4627 = vmatprep.mubr.bf16.mxu0 %v4507
  %4628 = vmatmul.mubr.bf16.gmra.mxu0 %v4385
  %v4629 = vpop.f32.mrf.mxu0
  %v4630 = vadd.f32 0.0, %v4629
  %v4631 = vpop.f32.mrf.mxu0
  %v4632 = vpop.f32.mrf.mxu0
  %v4633 = vadd.f32 0.0, %v4632
  %v4634 = vpop.f32.mrf.mxu0
  %4635 = vmatprep.mubr.bf16.mxu0 %v4510
  %4636 = vmatmul.mubr.bf16.gmra.mxu0 %v4387
  %v4637 = vpop.f32.mrf.mxu0
  %v4638 = vadd.f32 0.0, %v4637
  %v4639 = vpop.f32.mrf.mxu0
  %v4640 = vpop.f32.mrf.mxu0
  %v4641 = vadd.f32 0.0, %v4640
  %v4642 = vpop.f32.mrf.mxu0
  %4643 = vmatprep.mubr.bf16.mxu0 %v4513
  %4644 = vmatmul.mubr.bf16.gmra.mxu0 %v4389
  %v4645 = vpop.f32.mrf.mxu0
  %v4646 = vadd.f32 0.0, %v4645
  %v4647 = vpop.f32.mrf.mxu0
  %v4648 = vpop.f32.mrf.mxu0
  %v4649 = vpop.f32.mrf.mxu0
  %4650 = vdwg.mxu0
  %v4651 = vadd.f32 %v3712, %v4550
  %v4652 = vadd.f32 %v3713, %v4553
  %v4653 = vadd.f32 %v3714, %v4558
  %v4654 = vadd.f32 %v3715, %v4561
  %v4655 = vadd.f32 %v3716, %v4566
  %v4656 = vadd.f32 %v3717, %v4569
  %v4657 = vadd.f32 %v3718, %v4574
  %v4658 = vadd.f32 %v3719, %v4577
  %v4659 = vadd.f32 %v3720, %v4582
  %v4660 = vadd.f32 %v3721, %v4585
  %v4661 = vadd.f32 %v3722, %v4590
  %v4662 = vadd.f32 %v3723, %v4593
  %v4663 = vadd.f32 %v3724, %v4598
  %v4664 = vadd.f32 %v3725, %v4601
  %v4665 = vadd.f32 %v3726, %v4606
  %v4666 = vadd.f32 %v3727, %v4609
  %v4667 = vadd.f32 %v3728, %v4614
  %v4668 = vadd.f32 %v3729, %v4617
  %v4669 = vadd.f32 %v3730, %v4622
  %v4670 = vadd.f32 %v3731, %v4625
  %v4671 = vadd.f32 %v3732, %v4630
  %v4672 = vadd.f32 %v3733, %v4633
  %v4673 = vadd.f32 %v3734, %v4638
  %v4674 = vadd.f32 %v3735, %v4641
  %v4675 = vadd.f32 %v3736, %v4646
  %v4676 = vld [vmem:[%s2 + $0x6d] sm:$0xff]
  %v4677 = vld [vmem:[%s2 + $0x75] sm:$0xff]
  %v4678 = vld [vmem:[%s2 + $0x7d] sm:$0xff]
  %v4679 = vld [vmem:[%s2 + $0x85] sm:$0xff]
  %v4680 = vld [vmem:[%s2 + $0x8d] sm:$0xff]
  %v4681 = vld [vmem:[%s2 + $0x95] sm:$0xff]
  %v4682 = vld [vmem:[%s2 + $0x9d] sm:$0xff]
  %v4683 = vld [vmem:[%s2 + $0xa5] sm:$0xff]
  %v4684 = vld [vmem:[%s2 + $0xad] sm:$0xff]
  %v4685 = vld [vmem:[%s2 + $0xb5] sm:$0xff]
  %v4686 = vld [vmem:[%s2 + $0xbd] sm:$0xff]
  %v4687 = vld [vmem:[%s2 + $0xc5] sm:$0xff]
  %v4688 = vld [vmem:[%s2 + $0xcd] sm:$0xff]
  %v4689 = vld [vmem:[%s2 + $0xd5] sm:$0xff]
  %v4690 = vld [vmem:[%s2 + $0xdd] sm:$0xff]
  %v4691 = vld [vmem:[%s2 + $0xe5] sm:$0xff]
  %v4692 = vld [vmem:[%s2 + $0xed] sm:$0xff]
  %v4693 = vld [vmem:[%s2 + $0xf5] sm:$0xff]
  %v4694 = vld [vmem:[%s2 + $0xfd] sm:$0xff]
  %v4695 = vld [vmem:[%s2 + $0x105] sm:$0xff]
  %v4696 = vld [vmem:[%s2 + $0x10d] sm:$0xff]
  %v4697 = vld [vmem:[%s2 + $0x115] sm:$0xff]
  %v4698 = vld [vmem:[%s2 + $0x11d] sm:$0xff]
  %v4699 = vld [vmem:[%s2 + $0x125] sm:$0xff]
  %v4700 = vld [vmem:[%s2 + $0x12d] sm:$0xff]
  %v4701 = vpack.c.bf16 %v4677, %v4676
  %v4702 = vpack.c.bf16 %v4679, %v4678
  %v4703 = vpack.c.bf16 %v4681, %v4680
  %v4704 = vpack.c.bf16 %v4683, %v4682
  %v4705 = vpack.c.bf16 %v4685, %v4684
  %v4706 = vpack.c.bf16 %v4687, %v4686
  %v4707 = vpack.c.bf16 %v4689, %v4688
  %v4708 = vpack.c.bf16 %v4691, %v4690
  %v4709 = vpack.c.bf16 %v4693, %v4692
  %v4710 = vpack.c.bf16 %v4695, %v4694
  %v4711 = vpack.c.bf16 %v4697, %v4696
  %v4712 = vpack.c.bf16 %v4699, %v4698
  %v4713 = vpack.c.bf16 %v4700, %v4700
  %v4727 = vunpack.c.l.b16 %v4701
  %v4728 = vunpack.c.h.b16 %v4701
  %v4729 = vunpack.c.l.b16 %v4702
  %v4730 = vunpack.c.h.b16 %v4702
  %v4731 = vunpack.c.l.b16 %v4703
  %v4732 = vunpack.c.h.b16 %v4703
  %v4733 = vunpack.c.l.b16 %v4704
  %v4734 = vunpack.c.h.b16 %v4704
  %v4735 = vunpack.c.l.b16 %v4705
  %v4736 = vunpack.c.h.b16 %v4705
  %v4737 = vunpack.c.l.b16 %v4706
  %v4738 = vunpack.c.h.b16 %v4706
  %v4739 = vunpack.c.l.b16 %v4707
  %v4740 = vunpack.c.h.b16 %v4707
  %v4741 = vunpack.c.l.b16 %v4708
  %v4742 = vunpack.c.h.b16 %v4708
  %v4743 = vunpack.c.l.b16 %v4709
  %v4744 = vunpack.c.h.b16 %v4709
  %v4745 = vunpack.c.l.b16 %v4710
  %v4746 = vunpack.c.h.b16 %v4710
  %v4747 = vunpack.c.l.b16 %v4711
  %v4748 = vunpack.c.h.b16 %v4711
  %v4749 = vunpack.c.l.b16 %v4712
  %v4750 = vunpack.c.h.b16 %v4712
  %v4751 = vunpack.c.l.b16 %v4713
  %v4752 = vpack.c.b16 %v4727, %v4727
  %v4753 = vpack.c.b16 %v4728, %v4728
  %v4754 = vpack.c.b16 %v4729, %v4729
  %v4755 = vpack.c.b16 %v4730, %v4730
  %v4756 = vpack.c.b16 %v4731, %v4731
  %v4757 = vpack.c.b16 %v4732, %v4732
  %v4758 = vpack.c.b16 %v4733, %v4733
  %v4759 = vpack.c.b16 %v4734, %v4734
  %v4760 = vpack.c.b16 %v4735, %v4735
  %v4761 = vpack.c.b16 %v4736, %v4736
  %v4762 = vpack.c.b16 %v4737, %v4737
  %v4763 = vpack.c.b16 %v4738, %v4738
  %v4764 = vpack.c.b16 %v4739, %v4739
  %v4765 = vpack.c.b16 %v4740, %v4740
  %v4766 = vpack.c.b16 %v4741, %v4741
  %v4767 = vpack.c.b16 %v4742, %v4742
  %v4768 = vpack.c.b16 %v4743, %v4743
  %v4769 = vpack.c.b16 %v4744, %v4744
  %v4770 = vpack.c.b16 %v4745, %v4745
  %v4771 = vpack.c.b16 %v4746, %v4746
  %v4772 = vpack.c.b16 %v4747, %v4747
  %v4773 = vpack.c.b16 %v4748, %v4748
  %v4774 = vpack.c.b16 %v4749, %v4749
  %v4775 = vpack.c.b16 %v4750, %v4750
  %v4776 = vpack.c.b16 %v4751, %v4751
  %4802 = vst.msk [vmem:[#allocation2] sm:$0xf] %vm156, %v4752
  %4803 = vst.msk [vmem:[#allocation2 + $0x8] sm:$0xf] %vm156, %v4753
  %4804 = vst.msk [vmem:[#allocation2 + $0x10] sm:$0xf] %vm156, %v4754
  %4805 = vst.msk [vmem:[#allocation2 + $0x18] sm:$0xf] %vm156, %v4755
  %4806 = vst.msk [vmem:[#allocation2 + $0x20] sm:$0xf] %vm156, %v4756
  %4807 = vst.msk [vmem:[#allocation2 + $0x28] sm:$0xf] %vm156, %v4757
  %4808 = vst.msk [vmem:[#allocation2 + $0x30] sm:$0xf] %vm156, %v4758
  %4809 = vst.msk [vmem:[#allocation2 + $0x38] sm:$0xf] %vm156, %v4759
  %4810 = vst.msk [vmem:[#allocation2 + $0x40] sm:$0xf] %vm156, %v4760
  %4811 = vst.msk [vmem:[#allocation2 + $0x48] sm:$0xf] %vm156, %v4761
  %4812 = vst.msk [vmem:[#allocation2 + $0x50] sm:$0xf] %vm156, %v4762
  %4813 = vst.msk [vmem:[#allocation2 + $0x58] sm:$0xf] %vm156, %v4763
  %4814 = vst.msk [vmem:[#allocation2 + $0x60] sm:$0xf] %vm156, %v4764
  %4815 = vst.msk [vmem:[#allocation2 + $0x68] sm:$0xf] %vm156, %v4765
  %4816 = vst.msk [vmem:[#allocation2 + $0x70] sm:$0xf] %vm156, %v4766
  %4817 = vst.msk [vmem:[#allocation2 + $0x78] sm:$0xf] %vm156, %v4767
  %4818 = vst.msk [vmem:[#allocation2 + $0x80] sm:$0xf] %vm156, %v4768
  %4819 = vst.msk [vmem:[#allocation2 + $0x88] sm:$0xf] %vm156, %v4769
  %4820 = vst.msk [vmem:[#allocation2 + $0x90] sm:$0xf] %vm156, %v4770
  %4821 = vst.msk [vmem:[#allocation2 + $0x98] sm:$0xf] %vm156, %v4771
  %4822 = vst.msk [vmem:[#allocation2 + $0xa0] sm:$0xf] %vm156, %v4772
  %4823 = vst.msk [vmem:[#allocation2 + $0xa8] sm:$0xf] %vm156, %v4773
  %4824 = vst.msk [vmem:[#allocation2 + $0xb0] sm:$0xf] %vm156, %v4774
  %4825 = vst.msk [vmem:[#allocation2 + $0xb8] sm:$0xf] %vm156, %v4775
  %4826 = vst.msk [vmem:[#allocation2 + $0xc0] sm:$0xf] %vm156, %v4776
  %v4827 = vld [vmem:[%s2 + $0x6e] sm:$0xff]
  %v4828 = vld [vmem:[%s2 + $0x76] sm:$0xff]
  %v4829 = vld [vmem:[%s2 + $0x7e] sm:$0xff]
  %v4830 = vld [vmem:[%s2 + $0x86] sm:$0xff]
  %v4831 = vld [vmem:[%s2 + $0x8e] sm:$0xff]
  %v4832 = vld [vmem:[%s2 + $0x96] sm:$0xff]
  %v4833 = vld [vmem:[%s2 + $0x9e] sm:$0xff]
  %v4834 = vld [vmem:[%s2 + $0xa6] sm:$0xff]
  %v4835 = vld [vmem:[%s2 + $0xae] sm:$0xff]
  %v4836 = vld [vmem:[%s2 + $0xb6] sm:$0xff]
  %v4837 = vld [vmem:[%s2 + $0xbe] sm:$0xff]
  %v4838 = vld [vmem:[%s2 + $0xc6] sm:$0xff]
  %v4839 = vld [vmem:[%s2 + $0xce] sm:$0xff]
  %v4840 = vld [vmem:[%s2 + $0xd6] sm:$0xff]
  %v4841 = vld [vmem:[%s2 + $0xde] sm:$0xff]
  %v4842 = vld [vmem:[%s2 + $0xe6] sm:$0xff]
  %v4843 = vld [vmem:[%s2 + $0xee] sm:$0xff]
  %v4844 = vld [vmem:[%s2 + $0xf6] sm:$0xff]
  %v4845 = vld [vmem:[%s2 + $0xfe] sm:$0xff]
  %v4846 = vld [vmem:[%s2 + $0x106] sm:$0xff]
  %v4847 = vld [vmem:[%s2 + $0x10e] sm:$0xff]
  %v4848 = vld [vmem:[%s2 + $0x116] sm:$0xff]
  %v4849 = vld [vmem:[%s2 + $0x11e] sm:$0xff]
  %v4850 = vld [vmem:[%s2 + $0x126] sm:$0xff]
  %v4851 = vld [vmem:[%s2 + $0x12e] sm:$0xff]
  %v4852 = vpack.c.bf16 %v4828, %v4827
  %v4853 = vpack.c.bf16 %v4830, %v4829
  %v4854 = vpack.c.bf16 %v4832, %v4831
  %v4855 = vpack.c.bf16 %v4834, %v4833
  %v4856 = vpack.c.bf16 %v4836, %v4835
  %v4857 = vpack.c.bf16 %v4838, %v4837
  %v4858 = vpack.c.bf16 %v4840, %v4839
  %v4859 = vpack.c.bf16 %v4842, %v4841
  %v4860 = vpack.c.bf16 %v4844, %v4843
  %v4861 = vpack.c.bf16 %v4846, %v4845
  %v4862 = vpack.c.bf16 %v4848, %v4847
  %v4863 = vpack.c.bf16 %v4850, %v4849
  %v4864 = vpack.c.bf16 %v4851, %v4851
  %v4878 = vunpack.c.l.b16 %v4852
  %v4879 = vunpack.c.h.b16 %v4852
  %v4880 = vunpack.c.l.b16 %v4853
  %v4881 = vunpack.c.h.b16 %v4853
  %v4882 = vunpack.c.l.b16 %v4854
  %v4883 = vunpack.c.h.b16 %v4854
  %v4884 = vunpack.c.l.b16 %v4855
  %v4885 = vunpack.c.h.b16 %v4855
  %v4886 = vunpack.c.l.b16 %v4856
  %v4887 = vunpack.c.h.b16 %v4856
  %v4888 = vunpack.c.l.b16 %v4857
  %v4889 = vunpack.c.h.b16 %v4857
  %v4890 = vunpack.c.l.b16 %v4858
  %v4891 = vunpack.c.h.b16 %v4858
  %v4892 = vunpack.c.l.b16 %v4859
  %v4893 = vunpack.c.h.b16 %v4859
  %v4894 = vunpack.c.l.b16 %v4860
  %v4895 = vunpack.c.h.b16 %v4860
  %v4896 = vunpack.c.l.b16 %v4861
  %v4897 = vunpack.c.h.b16 %v4861
  %v4898 = vunpack.c.l.b16 %v4862
  %v4899 = vunpack.c.h.b16 %v4862
  %v4900 = vunpack.c.l.b16 %v4863
  %v4901 = vunpack.c.h.b16 %v4863
  %v4902 = vunpack.c.l.b16 %v4864
  %v4903 = vpack.c.b16 %v4878, %v4878
  %v4904 = vpack.c.b16 %v4879, %v4879
  %v4905 = vpack.c.b16 %v4880, %v4880
  %v4906 = vpack.c.b16 %v4881, %v4881
  %v4907 = vpack.c.b16 %v4882, %v4882
  %v4908 = vpack.c.b16 %v4883, %v4883
  %v4909 = vpack.c.b16 %v4884, %v4884
  %v4910 = vpack.c.b16 %v4885, %v4885
  %v4911 = vpack.c.b16 %v4886, %v4886
  %v4912 = vpack.c.b16 %v4887, %v4887
  %v4913 = vpack.c.b16 %v4888, %v4888
  %v4914 = vpack.c.b16 %v4889, %v4889
  %v4915 = vpack.c.b16 %v4890, %v4890
  %v4916 = vpack.c.b16 %v4891, %v4891
  %v4917 = vpack.c.b16 %v4892, %v4892
  %v4918 = vpack.c.b16 %v4893, %v4893
  %v4919 = vpack.c.b16 %v4894, %v4894
  %v4920 = vpack.c.b16 %v4895, %v4895
  %v4921 = vpack.c.b16 %v4896, %v4896
  %v4922 = vpack.c.b16 %v4897, %v4897
  %v4923 = vpack.c.b16 %v4898, %v4898
  %v4924 = vpack.c.b16 %v4899, %v4899
  %v4925 = vpack.c.b16 %v4900, %v4900
  %v4926 = vpack.c.b16 %v4901, %v4901
  %v4927 = vpack.c.b16 %v4902, %v4902
  %4928 = vrot.lane.b32.xlu0 %v4903, 64
  %v4929 = vpop.permute.xlu0 %4928
  %4930 = vrot.lane.b32.xlu0 %v4904, 64
  %v4931 = vpop.permute.xlu0 %4930
  %4932 = vrot.lane.b32.xlu0 %v4905, 64
  %v4933 = vpop.permute.xlu0 %4932
  %4934 = vrot.lane.b32.xlu0 %v4906, 64
  %v4935 = vpop.permute.xlu0 %4934
  %4936 = vrot.lane.b32.xlu0 %v4907, 64
  %v4937 = vpop.permute.xlu0 %4936
  %4938 = vrot.lane.b32.xlu0 %v4908, 64
  %v4939 = vpop.permute.xlu0 %4938
  %4940 = vrot.lane.b32.xlu0 %v4909, 64
  %v4941 = vpop.permute.xlu0 %4940
  %4942 = vrot.lane.b32.xlu0 %v4910, 64
  %v4943 = vpop.permute.xlu0 %4942
  %4944 = vrot.lane.b32.xlu0 %v4911, 64
  %v4945 = vpop.permute.xlu0 %4944
  %4946 = vrot.lane.b32.xlu0 %v4912, 64
  %v4947 = vpop.permute.xlu0 %4946
  %4948 = vrot.lane.b32.xlu0 %v4913, 64
  %v4949 = vpop.permute.xlu0 %4948
  %4950 = vrot.lane.b32.xlu0 %v4914, 64
  %v4951 = vpop.permute.xlu0 %4950
  %4952 = vrot.lane.b32.xlu0 %v4915, 64
  %v4953 = vpop.permute.xlu0 %4952
  %4954 = vrot.lane.b32.xlu0 %v4916, 64
  %v4955 = vpop.permute.xlu0 %4954
  %4956 = vrot.lane.b32.xlu0 %v4917, 64
  %v4957 = vpop.permute.xlu0 %4956
  %4958 = vrot.lane.b32.xlu0 %v4918, 64
  %v4959 = vpop.permute.xlu0 %4958
  %4960 = vrot.lane.b32.xlu0 %v4919, 64
  %v4961 = vpop.permute.xlu0 %4960
  %4962 = vrot.lane.b32.xlu0 %v4920, 64
  %v4963 = vpop.permute.xlu0 %4962
  %4964 = vrot.lane.b32.xlu0 %v4921, 64
  %v4965 = vpop.permute.xlu0 %4964
  %4966 = vrot.lane.b32.xlu0 %v4922, 64
  %v4967 = vpop.permute.xlu0 %4966
  %4968 = vrot.lane.b32.xlu0 %v4923, 64
  %v4969 = vpop.permute.xlu0 %4968
  %4970 = vrot.lane.b32.xlu0 %v4924, 64
  %v4971 = vpop.permute.xlu0 %4970
  %4972 = vrot.lane.b32.xlu0 %v4925, 64
  %v4973 = vpop.permute.xlu0 %4972
  %4974 = vrot.lane.b32.xlu0 %v4926, 64
  %v4975 = vpop.permute.xlu0 %4974
  %4976 = vrot.lane.b32.xlu0 %v4927, 64
  %v4977 = vpop.permute.xlu0 %4976
  %5003 = vst.msk [vmem:[#allocation2] sm:$0xf] %vm358, %v4929
  %5004 = vst.msk [vmem:[#allocation2 + $0x8] sm:$0xf] %vm358, %v4931
  %5005 = vst.msk [vmem:[#allocation2 + $0x10] sm:$0xf] %vm358, %v4933
  %5006 = vst.msk [vmem:[#allocation2 + $0x18] sm:$0xf] %vm358, %v4935
  %5007 = vst.msk [vmem:[#allocation2 + $0x20] sm:$0xf] %vm358, %v4937
  %5008 = vst.msk [vmem:[#allocation2 + $0x28] sm:$0xf] %vm358, %v4939
  %5009 = vst.msk [vmem:[#allocation2 + $0x30] sm:$0xf] %vm358, %v4941
  %5010 = vst.msk [vmem:[#allocation2 + $0x38] sm:$0xf] %vm358, %v4943
  %5011 = vst.msk [vmem:[#allocation2 + $0x40] sm:$0xf] %vm358, %v4945
  %5012 = vst.msk [vmem:[#allocation2 + $0x48] sm:$0xf] %vm358, %v4947
  %5013 = vst.msk [vmem:[#allocation2 + $0x50] sm:$0xf] %vm358, %v4949
  %5014 = vst.msk [vmem:[#allocation2 + $0x58] sm:$0xf] %vm358, %v4951
  %5015 = vst.msk [vmem:[#allocation2 + $0x60] sm:$0xf] %vm358, %v4953
  %5016 = vst.msk [vmem:[#allocation2 + $0x68] sm:$0xf] %vm358, %v4955
  %5017 = vst.msk [vmem:[#allocation2 + $0x70] sm:$0xf] %vm358, %v4957
  %5018 = vst.msk [vmem:[#allocation2 + $0x78] sm:$0xf] %vm358, %v4959
  %5019 = vst.msk [vmem:[#allocation2 + $0x80] sm:$0xf] %vm358, %v4961
  %5020 = vst.msk [vmem:[#allocation2 + $0x88] sm:$0xf] %vm358, %v4963
  %5021 = vst.msk [vmem:[#allocation2 + $0x90] sm:$0xf] %vm358, %v4965
  %5022 = vst.msk [vmem:[#allocation2 + $0x98] sm:$0xf] %vm358, %v4967
  %5023 = vst.msk [vmem:[#allocation2 + $0xa0] sm:$0xf] %vm358, %v4969
  %5024 = vst.msk [vmem:[#allocation2 + $0xa8] sm:$0xf] %vm358, %v4971
  %5025 = vst.msk [vmem:[#allocation2 + $0xb0] sm:$0xf] %vm358, %v4973
  %5026 = vst.msk [vmem:[#allocation2 + $0xb8] sm:$0xf] %vm358, %v4975
  %5027 = vst.msk [vmem:[#allocation2 + $0xc0] sm:$0xf] %vm358, %v4977
  %v5028 = vld [vmem:[%s2 + $0x6f] sm:$0xff]
  %v5029 = vld [vmem:[%s2 + $0x77] sm:$0xff]
  %v5030 = vld [vmem:[%s2 + $0x7f] sm:$0xff]
  %v5031 = vld [vmem:[%s2 + $0x87] sm:$0xff]
  %v5032 = vld [vmem:[%s2 + $0x8f] sm:$0xff]
  %v5033 = vld [vmem:[%s2 + $0x97] sm:$0xff]
  %v5034 = vld [vmem:[%s2 + $0x9f] sm:$0xff]
  %v5035 = vld [vmem:[%s2 + $0xa7] sm:$0xff]
  %v5036 = vld [vmem:[%s2 + $0xaf] sm:$0xff]
  %v5037 = vld [vmem:[%s2 + $0xb7] sm:$0xff]
  %v5038 = vld [vmem:[%s2 + $0xbf] sm:$0xff]
  %v5039 = vld [vmem:[%s2 + $0xc7] sm:$0xff]
  %v5040 = vld [vmem:[%s2 + $0xcf] sm:$0xff]
  %v5041 = vld [vmem:[%s2 + $0xd7] sm:$0xff]
  %v5042 = vld [vmem:[%s2 + $0xdf] sm:$0xff]
  %v5043 = vld [vmem:[%s2 + $0xe7] sm:$0xff]
  %v5044 = vld [vmem:[%s2 + $0xef] sm:$0xff]
  %v5045 = vld [vmem:[%s2 + $0xf7] sm:$0xff]
  %v5046 = vld [vmem:[%s2 + $0xff] sm:$0xff]
  %v5047 = vld [vmem:[%s2 + $0x107] sm:$0xff]
  %v5048 = vld [vmem:[%s2 + $0x10f] sm:$0xff]
  %v5049 = vld [vmem:[%s2 + $0x117] sm:$0xff]
  %v5050 = vld [vmem:[%s2 + $0x11f] sm:$0xff]
  %v5051 = vld [vmem:[%s2 + $0x127] sm:$0xff]
  %v5052 = vld [vmem:[%s2 + $0x12f] sm:$0xff]
  %v5053 = vpack.c.bf16 %v5029, %v5028
  %v5054 = vpack.c.bf16 %v5031, %v5030
  %v5055 = vpack.c.bf16 %v5033, %v5032
  %v5056 = vpack.c.bf16 %v5035, %v5034
  %v5057 = vpack.c.bf16 %v5037, %v5036
  %v5058 = vpack.c.bf16 %v5039, %v5038
  %v5059 = vpack.c.bf16 %v5041, %v5040
  %v5060 = vpack.c.bf16 %v5043, %v5042
  %v5061 = vpack.c.bf16 %v5045, %v5044
  %v5062 = vpack.c.bf16 %v5047, %v5046
  %v5063 = vpack.c.bf16 %v5049, %v5048
  %v5064 = vpack.c.bf16 %v5051, %v5050
  %v5065 = vpack.c.bf16 %v5052, %v5052
  %v5079 = vunpack.c.l.b16 %v5053
  %v5080 = vunpack.c.h.b16 %v5053
  %v5081 = vunpack.c.l.b16 %v5054
  %v5082 = vunpack.c.h.b16 %v5054
  %v5083 = vunpack.c.l.b16 %v5055
  %v5084 = vunpack.c.h.b16 %v5055
  %v5085 = vunpack.c.l.b16 %v5056
  %v5086 = vunpack.c.h.b16 %v5056
  %v5087 = vunpack.c.l.b16 %v5057
  %v5088 = vunpack.c.h.b16 %v5057
  %v5089 = vunpack.c.l.b16 %v5058
  %v5090 = vunpack.c.h.b16 %v5058
  %v5091 = vunpack.c.l.b16 %v5059
  %v5092 = vunpack.c.h.b16 %v5059
  %v5093 = vunpack.c.l.b16 %v5060
  %v5094 = vunpack.c.h.b16 %v5060
  %v5095 = vunpack.c.l.b16 %v5061
  %v5096 = vunpack.c.h.b16 %v5061
  %v5097 = vunpack.c.l.b16 %v5062
  %v5098 = vunpack.c.h.b16 %v5062
  %v5099 = vunpack.c.l.b16 %v5063
  %v5100 = vunpack.c.h.b16 %v5063
  %v5101 = vunpack.c.l.b16 %v5064
  %v5102 = vunpack.c.h.b16 %v5064
  %v5103 = vunpack.c.l.b16 %v5065
  %v5104 = vpack.c.b16 %v5079, %v5079
  %v5105 = vpack.c.b16 %v5080, %v5080
  %v5106 = vpack.c.b16 %v5081, %v5081
  %v5107 = vpack.c.b16 %v5082, %v5082
  %v5108 = vpack.c.b16 %v5083, %v5083
  %v5109 = vpack.c.b16 %v5084, %v5084
  %v5110 = vpack.c.b16 %v5085, %v5085
  %v5111 = vpack.c.b16 %v5086, %v5086
  %v5112 = vpack.c.b16 %v5087, %v5087
  %v5113 = vpack.c.b16 %v5088, %v5088
  %v5114 = vpack.c.b16 %v5089, %v5089
  %v5115 = vpack.c.b16 %v5090, %v5090
  %v5116 = vpack.c.b16 %v5091, %v5091
  %v5117 = vpack.c.b16 %v5092, %v5092
  %v5118 = vpack.c.b16 %v5093, %v5093
  %v5119 = vpack.c.b16 %v5094, %v5094
  %v5120 = vpack.c.b16 %v5095, %v5095
  %v5121 = vpack.c.b16 %v5096, %v5096
  %v5122 = vpack.c.b16 %v5097, %v5097
  %v5123 = vpack.c.b16 %v5098, %v5098
  %v5124 = vpack.c.b16 %v5099, %v5099
  %v5125 = vpack.c.b16 %v5100, %v5100
  %v5126 = vpack.c.b16 %v5101, %v5101
  %v5127 = vpack.c.b16 %v5102, %v5102
  %v5128 = vpack.c.b16 %v5103, %v5103
  %5154 = vst.msk [vmem:[#allocation2 + $0x4] sm:$0xf] %vm156, %v5104
  %5155 = vst.msk [vmem:[#allocation2 + $0xc] sm:$0xf] %vm156, %v5105
  %5156 = vst.msk [vmem:[#allocation2 + $0x14] sm:$0xf] %vm156, %v5106
  %5157 = vst.msk [vmem:[#allocation2 + $0x1c] sm:$0xf] %vm156, %v5107
  %5158 = vst.msk [vmem:[#allocation2 + $0x24] sm:$0xf] %vm156, %v5108
  %5159 = vst.msk [vmem:[#allocation2 + $0x2c] sm:$0xf] %vm156, %v5109
  %5160 = vst.msk [vmem:[#allocation2 + $0x34] sm:$0xf] %vm156, %v5110
  %5161 = vst.msk [vmem:[#allocation2 + $0x3c] sm:$0xf] %vm156, %v5111
  %5162 = vst.msk [vmem:[#allocation2 + $0x44] sm:$0xf] %vm156, %v5112
  %5163 = vst.msk [vmem:[#allocation2 + $0x4c] sm:$0xf] %vm156, %v5113
  %5164 = vst.msk [vmem:[#allocation2 + $0x54] sm:$0xf] %vm156, %v5114
  %5165 = vst.msk [vmem:[#allocation2 + $0x5c] sm:$0xf] %vm156, %v5115
  %5166 = vst.msk [vmem:[#allocation2 + $0x64] sm:$0xf] %vm156, %v5116
  %5167 = vst.msk [vmem:[#allocation2 + $0x6c] sm:$0xf] %vm156, %v5117
  %5168 = vst.msk [vmem:[#allocation2 + $0x74] sm:$0xf] %vm156, %v5118
  %5169 = vst.msk [vmem:[#allocation2 + $0x7c] sm:$0xf] %vm156, %v5119
  %5170 = vst.msk [vmem:[#allocation2 + $0x84] sm:$0xf] %vm156, %v5120
  %5171 = vst.msk [vmem:[#allocation2 + $0x8c] sm:$0xf] %vm156, %v5121
  %5172 = vst.msk [vmem:[#allocation2 + $0x94] sm:$0xf] %vm156, %v5122
  %5173 = vst.msk [vmem:[#allocation2 + $0x9c] sm:$0xf] %vm156, %v5123
  %5174 = vst.msk [vmem:[#allocation2 + $0xa4] sm:$0xf] %vm156, %v5124
  %5175 = vst.msk [vmem:[#allocation2 + $0xac] sm:$0xf] %vm156, %v5125
  %5176 = vst.msk [vmem:[#allocation2 + $0xb4] sm:$0xf] %vm156, %v5126
  %5177 = vst.msk [vmem:[#allocation2 + $0xbc] sm:$0xf] %vm156, %v5127
  %5178 = vst.msk [vmem:[#allocation2 + $0xc4] sm:$0xf] %vm156, %v5128
  %v5179 = vld [vmem:[#allocation2] sm:$0xff]
  %v5180 = vld [vmem:[#allocation2 + $0x8] sm:$0xff]
  %v5181 = vld [vmem:[#allocation2 + $0x10] sm:$0xff]
  %v5182 = vld [vmem:[#allocation2 + $0x18] sm:$0xff]
  %v5183 = vld [vmem:[#allocation2 + $0x20] sm:$0xff]
  %v5184 = vld [vmem:[#allocation2 + $0x28] sm:$0xff]
  %v5185 = vld [vmem:[#allocation2 + $0x30] sm:$0xff]
  %v5186 = vld [vmem:[#allocation2 + $0x38] sm:$0xff]
  %v5187 = vld [vmem:[#allocation2 + $0x40] sm:$0xff]
  %v5188 = vld [vmem:[#allocation2 + $0x48] sm:$0xff]
  %v5189 = vld [vmem:[#allocation2 + $0x50] sm:$0xff]
  %v5190 = vld [vmem:[#allocation2 + $0x58] sm:$0xff]
  %v5191 = vld [vmem:[#allocation2 + $0x60] sm:$0xff]
  %v5192 = vld [vmem:[#allocation2 + $0x68] sm:$0xff]
  %v5193 = vld [vmem:[#allocation2 + $0x70] sm:$0xff]
  %v5194 = vld [vmem:[#allocation2 + $0x78] sm:$0xff]
  %v5195 = vld [vmem:[#allocation2 + $0x80] sm:$0xff]
  %v5196 = vld [vmem:[#allocation2 + $0x88] sm:$0xff]
  %v5197 = vld [vmem:[#allocation2 + $0x90] sm:$0xff]
  %v5198 = vld [vmem:[#allocation2 + $0x98] sm:$0xff]
  %v5199 = vld [vmem:[#allocation2 + $0xa0] sm:$0xff]
  %v5200 = vld [vmem:[#allocation2 + $0xa8] sm:$0xff]
  %v5201 = vld [vmem:[#allocation2 + $0xb0] sm:$0xff]
  %v5202 = vld [vmem:[#allocation2 + $0xb8] sm:$0xff]
  %v5203 = vld [vmem:[#allocation2 + $0xc0] sm:$0xff]
  %s5204 = scalar_lea.vmem %s4, 192
  %v5205 = vld [vmem:[%s5204] sm:$0xf]
  %v5206 = vld [vmem:[%s5204 + $0x4] sm:$0xf]
  %v5207 = vld [vmem:[%s5204 + $0x8] sm:$0xf]
  %v5208 = vld [vmem:[%s5204 + $0xc] sm:$0xf]
  %v5209 = vld [vmem:[%s5204 + $0x10] sm:$0xf]
  %v5210 = vld [vmem:[%s5204 + $0x14] sm:$0xf]
  %v5211 = vld [vmem:[%s5204 + $0x18] sm:$0xf]
  %v5212 = vld [vmem:[%s5204 + $0x1c] sm:$0xf]
  %v5213 = vld [vmem:[%s5204 + $0x20] sm:$0xf]
  %v5214 = vld [vmem:[%s5204 + $0x24] sm:$0xf]
  %v5215 = vld [vmem:[%s5204 + $0x28] sm:$0xf]
  %v5216 = vld [vmem:[%s5204 + $0x2c] sm:$0xf]
  %v5217 = vld [vmem:[%s5204 + $0x30] sm:$0xf]
  %v5218 = vld [vmem:[%s5204 + $0x34] sm:$0xf]
  %v5219 = vld [vmem:[%s5204 + $0x38] sm:$0xf]
  %v5220 = vld [vmem:[%s5204 + $0x3c] sm:$0xf]
  %v5221 = vld [vmem:[%s5204 + $0x40] sm:$0xf]
  %v5222 = vld [vmem:[%s5204 + $0x44] sm:$0xf]
  %v5223 = vld [vmem:[%s5204 + $0x48] sm:$0xf]
  %v5224 = vld [vmem:[%s5204 + $0x4c] sm:$0xf]
  %v5225 = vld [vmem:[%s5204 + $0x50] sm:$0xf]
  %v5226 = vld [vmem:[%s5204 + $0x54] sm:$0xf]
  %v5227 = vld [vmem:[%s5204 + $0x58] sm:$0xf]
  %v5228 = vld [vmem:[%s5204 + $0x5c] sm:$0xf]
  %v5254 = vunpack.c.l.b16 %v5179
  %v5255 = vunpack.c.h.b16 %v5179
  %v5256 = vunpack.c.l.b16 %v5180
  %v5257 = vunpack.c.h.b16 %v5180
  %v5258 = vunpack.c.l.b16 %v5181
  %v5259 = vunpack.c.h.b16 %v5181
  %v5260 = vunpack.c.l.b16 %v5182
  %v5261 = vunpack.c.h.b16 %v5182
  %v5262 = vunpack.c.l.b16 %v5183
  %v5263 = vunpack.c.h.b16 %v5183
  %v5264 = vunpack.c.l.b16 %v5184
  %v5265 = vunpack.c.h.b16 %v5184
  %v5266 = vunpack.c.l.b16 %v5185
  %v5267 = vunpack.c.h.b16 %v5185
  %v5268 = vunpack.c.l.b16 %v5186
  %v5269 = vunpack.c.h.b16 %v5186
  %v5270 = vunpack.c.l.b16 %v5187
  %v5271 = vunpack.c.h.b16 %v5187
  %v5272 = vunpack.c.l.b16 %v5188
  %v5273 = vunpack.c.h.b16 %v5188
  %v5274 = vunpack.c.l.b16 %v5189
  %v5275 = vunpack.c.h.b16 %v5189
  %v5276 = vunpack.c.l.b16 %v5190
  %v5277 = vunpack.c.h.b16 %v5190
  %v5278 = vunpack.c.l.b16 %v5191
  %v5279 = vunpack.c.h.b16 %v5191
  %v5280 = vunpack.c.l.b16 %v5192
  %v5281 = vunpack.c.h.b16 %v5192
  %v5282 = vunpack.c.l.b16 %v5193
  %v5283 = vunpack.c.h.b16 %v5193
  %v5284 = vunpack.c.l.b16 %v5194
  %v5285 = vunpack.c.h.b16 %v5194
  %v5286 = vunpack.c.l.b16 %v5195
  %v5287 = vunpack.c.h.b16 %v5195
  %v5288 = vunpack.c.l.b16 %v5196
  %v5289 = vunpack.c.h.b16 %v5196
  %v5290 = vunpack.c.l.b16 %v5197
  %v5291 = vunpack.c.h.b16 %v5197
  %v5292 = vunpack.c.l.b16 %v5198
  %v5293 = vunpack.c.h.b16 %v5198
  %v5294 = vunpack.c.l.b16 %v5199
  %v5295 = vunpack.c.h.b16 %v5199
  %v5296 = vunpack.c.l.b16 %v5200
  %v5297 = vunpack.c.h.b16 %v5200
  %v5298 = vunpack.c.l.b16 %v5201
  %v5299 = vunpack.c.h.b16 %v5201
  %v5300 = vunpack.c.l.b16 %v5202
  %v5301 = vunpack.c.h.b16 %v5202
  %v5302 = vunpack.c.l.b16 %v5203
  %v5303 = vunpack.c.h.b16 %v5203
  %v5304 = vpack.c.b16 %v5256, %v5254
  %v5305 = vpack.c.b16 %v5257, %v5255
  %v5306 = vpack.c.b16 %v5260, %v5258
  %v5307 = vpack.c.b16 %v5261, %v5259
  %v5308 = vpack.c.b16 %v5264, %v5262
  %v5309 = vpack.c.b16 %v5265, %v5263
  %v5310 = vpack.c.b16 %v5268, %v5266
  %v5311 = vpack.c.b16 %v5269, %v5267
  %v5312 = vpack.c.b16 %v5272, %v5270
  %v5313 = vpack.c.b16 %v5273, %v5271
  %v5314 = vpack.c.b16 %v5276, %v5274
  %v5315 = vpack.c.b16 %v5277, %v5275
  %v5316 = vpack.c.b16 %v5280, %v5278
  %v5317 = vpack.c.b16 %v5281, %v5279
  %v5318 = vpack.c.b16 %v5284, %v5282
  %v5319 = vpack.c.b16 %v5285, %v5283
  %v5320 = vpack.c.b16 %v5288, %v5286
  %v5321 = vpack.c.b16 %v5289, %v5287
  %v5322 = vpack.c.b16 %v5292, %v5290
  %v5323 = vpack.c.b16 %v5293, %v5291
  %v5324 = vpack.c.b16 %v5296, %v5294
  %v5325 = vpack.c.b16 %v5297, %v5295
  %v5326 = vpack.c.b16 %v5300, %v5298
  %v5327 = vpack.c.b16 %v5301, %v5299
  %v5328 = vpack.c.b16 %v5302, %v5302
  %v5329 = vpack.c.b16 %v5303, %v5303
  %v5367 = vunpack.c.l.b16 %v5205
  %v5368 = vunpack.c.l.b16 %v5206
  %v5369 = vunpack.c.l.b16 %v5207
  %v5370 = vunpack.c.l.b16 %v5208
  %v5371 = vunpack.c.l.b16 %v5209
  %v5372 = vunpack.c.l.b16 %v5210
  %v5373 = vunpack.c.l.b16 %v5211
  %v5374 = vunpack.c.l.b16 %v5212
  %v5375 = vunpack.c.l.b16 %v5213
  %v5376 = vunpack.c.l.b16 %v5214
  %v5377 = vunpack.c.l.b16 %v5215
  %v5378 = vunpack.c.l.b16 %v5216
  %v5379 = vunpack.c.l.b16 %v5217
  %v5380 = vunpack.c.l.b16 %v5218
  %v5381 = vunpack.c.l.b16 %v5219
  %v5382 = vunpack.c.l.b16 %v5220
  %v5383 = vunpack.c.l.b16 %v5221
  %v5384 = vunpack.c.l.b16 %v5222
  %v5385 = vunpack.c.l.b16 %v5223
  %v5386 = vunpack.c.l.b16 %v5224
  %v5387 = vunpack.c.l.b16 %v5225
  %v5388 = vunpack.c.l.b16 %v5226
  %v5389 = vunpack.c.l.b16 %v5227
  %v5390 = vunpack.c.l.b16 %v5228
  %v5391 = vpack.c.b16 %v5368, %v5367
  %v5392 = vpack.c.b16 %v5370, %v5369
  %v5393 = vpack.c.b16 %v5372, %v5371
  %v5394 = vpack.c.b16 %v5374, %v5373
  %v5395 = vpack.c.b16 %v5376, %v5375
  %v5396 = vpack.c.b16 %v5378, %v5377
  %v5397 = vpack.c.b16 %v5380, %v5379
  %v5398 = vpack.c.b16 %v5382, %v5381
  %v5399 = vpack.c.b16 %v5384, %v5383
  %v5400 = vpack.c.b16 %v5386, %v5385
  %v5401 = vpack.c.b16 %v5388, %v5387
  %v5402 = vpack.c.b16 %v5390, %v5389
  %v5416 = vsel %vm1323, %v5305, 0
  %v5419 = vsel %vm1323, %v5307, 0
  %v5422 = vsel %vm1323, %v5309, 0
  %v5425 = vsel %vm1323, %v5311, 0
  %v5428 = vsel %vm1323, %v5313, 0
  %v5431 = vsel %vm1323, %v5315, 0
  %v5434 = vsel %vm1323, %v5317, 0
  %v5437 = vsel %vm1323, %v5319, 0
  %v5440 = vsel %vm1323, %v5321, 0
  %v5443 = vsel %vm1323, %v5323, 0
  %v5446 = vsel %vm1323, %v5325, 0
  %v5449 = vsel %vm1323, %v5327, 0
  %v5452 = vsel %vm1323, %v5329, 0
  %5454 = vmatprep.subr.bf16.mxu0 0
  %5455 = vmatpush1.bf16.msra.mxu0 %v5398
  %5456 = vmatprep.subr.bf16.mxu0 0
  %5457 = vmatpush1.bf16.msra.mxu0 %v5397
  %5458 = vmatprep.subr.bf16.mxu0 0
  %5459 = vmatpush1.bf16.msra.mxu0 %v5396
  %5460 = vmatprep.subr.bf16.mxu0 0
  %5461 = vmatpush1.bf16.msra.mxu0 %v5395
  %5462 = vmatprep.subr.bf16.mxu0 0
  %5463 = vmatpush1.bf16.msra.mxu0 %v5394
  %5464 = vmatprep.subr.bf16.mxu0 0
  %5465 = vmatpush1.bf16.msra.mxu0 %v5393
  %5466 = vmatprep.subr.bf16.mxu0 0
  %5467 = vmatpush1.bf16.msra.mxu0 %v5392
  %5468 = vmatprep.subr.bf16.mxu0 0
  %5469 = vmatpush1.bf16.msra.mxu0 %v5391
  %5470 = vmatprep.subr.bf16.mxu0 0
  %5471 = vmatpush2.bf16.msra.mxu0 0
  %5472 = vmatprep.subr.bf16.mxu0 0
  %5473 = vmatpush2.bf16.msra.mxu0 0
  %5474 = vmatprep.subr.bf16.mxu0 0
  %5475 = vmatpush2.bf16.msra.mxu0 0
  %5476 = vmatprep.subr.bf16.mxu0 0
  %5477 = vmatpush2.bf16.msra.mxu0 0
  %5478 = vmatprep.subr.bf16.mxu0 0
  %5479 = vmatpush2.bf16.msra.mxu0 %v5402
  %5480 = vmatprep.subr.bf16.mxu0 0
  %5481 = vmatpush2.bf16.msra.mxu0 %v5401
  %5482 = vmatprep.subr.bf16.mxu0 0
  %5483 = vmatpush2.bf16.msra.mxu0 %v5400
  %5484 = vmatprep.subr.bf16.mxu0 0
  %5485 = vmatpush2.bf16.msra.mxu0 %v5399
  %5486 = vmatprep.mubr.bf16.mxu0 %v5416
  %5487 = vmatmul.mubr.bf16.gmra.mxu0 %v5304
  %v5488 = vpop.f32.mrf.mxu0
  %v5489 = vadd.f32 0.0, %v5488
  %v5490 = vpop.f32.mrf.mxu0
  %v5491 = vpop.f32.mrf.mxu0
  %v5492 = vadd.f32 0.0, %v5491
  %v5493 = vpop.f32.mrf.mxu0
  %5494 = vmatprep.mubr.bf16.mxu0 %v5419
  %5495 = vmatmul.mubr.bf16.gmra.mxu0 %v5306
  %v5496 = vpop.f32.mrf.mxu0
  %v5497 = vadd.f32 0.0, %v5496
  %v5498 = vpop.f32.mrf.mxu0
  %v5499 = vpop.f32.mrf.mxu0
  %v5500 = vadd.f32 0.0, %v5499
  %v5501 = vpop.f32.mrf.mxu0
  %5502 = vmatprep.mubr.bf16.mxu0 %v5422
  %5503 = vmatmul.mubr.bf16.gmra.mxu0 %v5308
  %v5504 = vpop.f32.mrf.mxu0
  %v5505 = vadd.f32 0.0, %v5504
  %v5506 = vpop.f32.mrf.mxu0
  %v5507 = vpop.f32.mrf.mxu0
  %v5508 = vadd.f32 0.0, %v5507
  %v5509 = vpop.f32.mrf.mxu0
  %5510 = vmatprep.mubr.bf16.mxu0 %v5425
  %5511 = vmatmul.mubr.bf16.gmra.mxu0 %v5310
  %v5512 = vpop.f32.mrf.mxu0
  %v5513 = vadd.f32 0.0, %v5512
  %v5514 = vpop.f32.mrf.mxu0
  %v5515 = vpop.f32.mrf.mxu0
  %v5516 = vadd.f32 0.0, %v5515
  %v5517 = vpop.f32.mrf.mxu0
  %5518 = vmatprep.mubr.bf16.mxu0 %v5428
  %5519 = vmatmul.mubr.bf16.gmra.mxu0 %v5312
  %v5520 = vpop.f32.mrf.mxu0
  %v5521 = vadd.f32 0.0, %v5520
  %v5522 = vpop.f32.mrf.mxu0
  %v5523 = vpop.f32.mrf.mxu0
  %v5524 = vadd.f32 0.0, %v5523
  %v5525 = vpop.f32.mrf.mxu0
  %5526 = vmatprep.mubr.bf16.mxu0 %v5431
  %5527 = vmatmul.mubr.bf16.gmra.mxu0 %v5314
  %v5528 = vpop.f32.mrf.mxu0
  %v5529 = vadd.f32 0.0, %v5528
  %v5530 = vpop.f32.mrf.mxu0
  %v5531 = vpop.f32.mrf.mxu0
  %v5532 = vadd.f32 0.0, %v5531
  %v5533 = vpop.f32.mrf.mxu0
  %5534 = vmatprep.mubr.bf16.mxu0 %v5434
  %5535 = vmatmul.mubr.bf16.gmra.mxu0 %v5316
  %v5536 = vpop.f32.mrf.mxu0
  %v5537 = vadd.f32 0.0, %v5536
  %v5538 = vpop.f32.mrf.mxu0
  %v5539 = vpop.f32.mrf.mxu0
  %v5540 = vadd.f32 0.0, %v5539
  %v5541 = vpop.f32.mrf.mxu0
  %5542 = vmatprep.mubr.bf16.mxu0 %v5437
  %5543 = vmatmul.mubr.bf16.gmra.mxu0 %v5318
  %v5544 = vpop.f32.mrf.mxu0
  %v5545 = vadd.f32 0.0, %v5544
  %v5546 = vpop.f32.mrf.mxu0
  %v5547 = vpop.f32.mrf.mxu0
  %v5548 = vadd.f32 0.0, %v5547
  %v5549 = vpop.f32.mrf.mxu0
  %5550 = vmatprep.mubr.bf16.mxu0 %v5440
  %5551 = vmatmul.mubr.bf16.gmra.mxu0 %v5320
  %v5552 = vpop.f32.mrf.mxu0
  %v5553 = vadd.f32 0.0, %v5552
  %v5554 = vpop.f32.mrf.mxu0
  %v5555 = vpop.f32.mrf.mxu0
  %v5556 = vadd.f32 0.0, %v5555
  %v5557 = vpop.f32.mrf.mxu0
  %5558 = vmatprep.mubr.bf16.mxu0 %v5443
  %5559 = vmatmul.mubr.bf16.gmra.mxu0 %v5322
  %v5560 = vpop.f32.mrf.mxu0
  %v5561 = vadd.f32 0.0, %v5560
  %v5562 = vpop.f32.mrf.mxu0
  %v5563 = vpop.f32.mrf.mxu0
  %v5564 = vadd.f32 0.0, %v5563
  %v5565 = vpop.f32.mrf.mxu0
  %5566 = vmatprep.mubr.bf16.mxu0 %v5446
  %5567 = vmatmul.mubr.bf16.gmra.mxu0 %v5324
  %v5568 = vpop.f32.mrf.mxu0
  %v5569 = vadd.f32 0.0, %v5568
  %v5570 = vpop.f32.mrf.mxu0
  %v5571 = vpop.f32.mrf.mxu0
  %v5572 = vadd.f32 0.0, %v5571
  %v5573 = vpop.f32.mrf.mxu0
  %5574 = vmatprep.mubr.bf16.mxu0 %v5449
  %5575 = vmatmul.mubr.bf16.gmra.mxu0 %v5326
  %v5576 = vpop.f32.mrf.mxu0
  %v5577 = vadd.f32 0.0, %v5576
  %v5578 = vpop.f32.mrf.mxu0
  %v5579 = vpop.f32.mrf.mxu0
  %v5580 = vadd.f32 0.0, %v5579
  %v5581 = vpop.f32.mrf.mxu0
  %5582 = vmatprep.mubr.bf16.mxu0 %v5452
  %5583 = vmatmul.mubr.bf16.gmra.mxu0 %v5328
  %v5584 = vpop.f32.mrf.mxu0
  %v5585 = vadd.f32 0.0, %v5584
  %v5586 = vpop.f32.mrf.mxu0
  %v5587 = vpop.f32.mrf.mxu0
  %v5588 = vpop.f32.mrf.mxu0
  %5589 = vdwg.mxu0
  %v5590 = vadd.f32 %v4651, %v5489
  %v5591 = vadd.f32 %v4652, %v5492
  %v5592 = vadd.f32 %v4653, %v5497
  %v5593 = vadd.f32 %v4654, %v5500
  %v5594 = vadd.f32 %v4655, %v5505
  %v5595 = vadd.f32 %v4656, %v5508
  %v5596 = vadd.f32 %v4657, %v5513
  %v5597 = vadd.f32 %v4658, %v5516
  %v5598 = vadd.f32 %v4659, %v5521
  %v5599 = vadd.f32 %v4660, %v5524
  %v5600 = vadd.f32 %v4661, %v5529
  %v5601 = vadd.f32 %v4662, %v5532
  %v5602 = vadd.f32 %v4663, %v5537
  %v5603 = vadd.f32 %v4664, %v5540
  %v5604 = vadd.f32 %v4665, %v5545
  %v5605 = vadd.f32 %v4666, %v5548
  %v5606 = vadd.f32 %v4667, %v5553
  %v5607 = vadd.f32 %v4668, %v5556
  %v5608 = vadd.f32 %v4669, %v5561
  %v5609 = vadd.f32 %v4670, %v5564
  %v5610 = vadd.f32 %v4671, %v5569
  %v5611 = vadd.f32 %v4672, %v5572
  %v5612 = vadd.f32 %v4673, %v5577
  %v5613 = vadd.f32 %v4674, %v5580
  %v5614 = vadd.f32 %v4675, %v5585
  %v5615 = vld [vmem:[%s0] sm:$0xff]
  %v5616 = vld [vmem:[%s0 + $0x8] sm:$0xff]
  %v5617 = vld [vmem:[%s0 + $0x10] sm:$0xff]
  %v5618 = vld [vmem:[%s0 + $0x18] sm:$0xff]
  %v5619 = vld [vmem:[%s0 + $0x20] sm:$0xff]
  %v5620 = vld [vmem:[%s0 + $0x28] sm:$0xff]
  %v5621 = vld [vmem:[%s0 + $0x30] sm:$0xff]
  %v5622 = vld [vmem:[%s0 + $0x38] sm:$0xff]
  %v5623 = vld [vmem:[%s0 + $0x40] sm:$0xff]
  %v5624 = vld [vmem:[%s0 + $0x48] sm:$0xff]
  %v5625 = vld [vmem:[%s0 + $0x50] sm:$0xff]
  %v5626 = vld [vmem:[%s0 + $0x58] sm:$0xff]
  %v5627 = vld [vmem:[%s0 + $0x60] sm:$0xff]
  %v5628 = vld [vmem:[%s0 + $0x68] sm:$0xff]
  %v5629 = vld [vmem:[%s0 + $0x70] sm:$0xff]
  %v5630 = vld [vmem:[%s0 + $0x78] sm:$0xff]
  %v5631 = vld [vmem:[%s0 + $0x80] sm:$0xff]
  %v5632 = vld [vmem:[%s0 + $0x88] sm:$0xff]
  %v5633 = vld [vmem:[%s0 + $0x90] sm:$0xff]
  %v5634 = vld [vmem:[%s0 + $0x98] sm:$0xff]
  %v5635 = vld [vmem:[%s0 + $0xa0] sm:$0xff]
  %v5636 = vld [vmem:[%s0 + $0xa8] sm:$0xff]
  %v5637 = vld [vmem:[%s0 + $0xb0] sm:$0xff]
  %v5638 = vld [vmem:[%s0 + $0xb8] sm:$0xff]
  %v5639 = vld [vmem:[%s0 + $0xc0] sm:$0xff]
  %v5640 = vld [vmem:[%s5] sm:$0x1]
  %v5642 = vlaneseq
  %v5643 = vshrl.u32 %v5642, 7
  %v5644 = vsub.s32 0, %v5643
  %v5645 = vrot.slane %v5640, %v5644
  %v5647 = vadd.f32 %v5590, %v5645
  %v5648 = vadd.f32 %v5591, %v5645
  %v5649 = vadd.f32 %v5592, %v5645
  %v5650 = vadd.f32 %v5593, %v5645
  %v5651 = vadd.f32 %v5594, %v5645
  %v5652 = vadd.f32 %v5595, %v5645
  %v5653 = vadd.f32 %v5596, %v5645
  %v5654 = vadd.f32 %v5597, %v5645
  %v5655 = vadd.f32 %v5598, %v5645
  %v5656 = vadd.f32 %v5599, %v5645
  %v5657 = vadd.f32 %v5600, %v5645
  %v5658 = vadd.f32 %v5601, %v5645
  %v5659 = vadd.f32 %v5602, %v5645
  %v5660 = vadd.f32 %v5603, %v5645
  %v5661 = vadd.f32 %v5604, %v5645
  %v5662 = vadd.f32 %v5605, %v5645
  %v5663 = vadd.f32 %v5606, %v5645
  %v5664 = vadd.f32 %v5607, %v5645
  %v5665 = vadd.f32 %v5608, %v5645
  %v5666 = vadd.f32 %v5609, %v5645
  %v5667 = vadd.f32 %v5610, %v5645
  %v5668 = vadd.f32 %v5611, %v5645
  %v5669 = vadd.f32 %v5612, %v5645
  %v5670 = vadd.f32 %v5613, %v5645
  %v5671 = vadd.f32 %v5614, %v5645
  %5673 = vset.pattern.permute.xlu0 0
  %5674 = vperm.xlu0 %5673, %v5615
  %v5675 = vpop.permute.xlu0 %5674
  %5678 = vset.pattern.permute.xlu0 0
  %5679 = vperm.xlu0 %5678, %v5616
  %v5680 = vpop.permute.xlu0 %5679
  %5683 = vset.pattern.permute.xlu0 0
  %5684 = vperm.xlu0 %5683, %v5617
  %v5685 = vpop.permute.xlu0 %5684
  %5688 = vset.pattern.permute.xlu0 0
  %5689 = vperm.xlu0 %5688, %v5618
  %v5690 = vpop.permute.xlu0 %5689
  %5693 = vset.pattern.permute.xlu0 0
  %5694 = vperm.xlu0 %5693, %v5619
  %v5695 = vpop.permute.xlu0 %5694
  %5698 = vset.pattern.permute.xlu0 0
  %5699 = vperm.xlu0 %5698, %v5620
  %v5700 = vpop.permute.xlu0 %5699
  %5703 = vset.pattern.permute.xlu0 0
  %5704 = vperm.xlu0 %5703, %v5621
  %v5705 = vpop.permute.xlu0 %5704
  %5708 = vset.pattern.permute.xlu0 0
  %5709 = vperm.xlu0 %5708, %v5622
  %v5710 = vpop.permute.xlu0 %5709
  %5713 = vset.pattern.permute.xlu0 0
  %5714 = vperm.xlu0 %5713, %v5623
  %v5715 = vpop.permute.xlu0 %5714
  %5718 = vset.pattern.permute.xlu0 0
  %5719 = vperm.xlu0 %5718, %v5624
  %v5720 = vpop.permute.xlu0 %5719
  %5723 = vset.pattern.permute.xlu0 0
  %5724 = vperm.xlu0 %5723, %v5625
  %v5725 = vpop.permute.xlu0 %5724
  %5728 = vset.pattern.permute.xlu0 0
  %5729 = vperm.xlu0 %5728, %v5626
  %v5730 = vpop.permute.xlu0 %5729
  %5733 = vset.pattern.permute.xlu0 0
  %5734 = vperm.xlu0 %5733, %v5627
  %v5735 = vpop.permute.xlu0 %5734
  %5738 = vset.pattern.permute.xlu0 0
  %5739 = vperm.xlu0 %5738, %v5628
  %v5740 = vpop.permute.xlu0 %5739
  %5743 = vset.pattern.permute.xlu0 0
  %5744 = vperm.xlu0 %5743, %v5629
  %v5745 = vpop.permute.xlu0 %5744
  %5748 = vset.pattern.permute.xlu0 0
  %5749 = vperm.xlu0 %5748, %v5630
  %v5750 = vpop.permute.xlu0 %5749
  %5753 = vset.pattern.permute.xlu0 0
  %5754 = vperm.xlu0 %5753, %v5631
  %v5755 = vpop.permute.xlu0 %5754
  %5758 = vset.pattern.permute.xlu0 0
  %5759 = vperm.xlu0 %5758, %v5632
  %v5760 = vpop.permute.xlu0 %5759
  %5763 = vset.pattern.permute.xlu0 0
  %5764 = vperm.xlu0 %5763, %v5633
  %v5765 = vpop.permute.xlu0 %5764
  %5768 = vset.pattern.permute.xlu0 0
  %5769 = vperm.xlu0 %5768, %v5634
  %v5770 = vpop.permute.xlu0 %5769
  %5773 = vset.pattern.permute.xlu0 0
  %5774 = vperm.xlu0 %5773, %v5635
  %v5775 = vpop.permute.xlu0 %5774
  %5778 = vset.pattern.permute.xlu0 0
  %5779 = vperm.xlu0 %5778, %v5636
  %v5780 = vpop.permute.xlu0 %5779
  %5783 = vset.pattern.permute.xlu0 0
  %5784 = vperm.xlu0 %5783, %v5637
  %v5785 = vpop.permute.xlu0 %5784
  %5788 = vset.pattern.permute.xlu0 0
  %5789 = vperm.xlu0 %5788, %v5638
  %v5790 = vpop.permute.xlu0 %5789
  %5793 = vset.pattern.permute.xlu0 0
  %5794 = vperm.xlu0 %5793, %v5639
  %v5795 = vpop.permute.xlu0 %5794
  %v5797 = vmul.f32 %v5647, %v5675
  %v5798 = vmul.f32 %v5648, %v5680
  %v5799 = vmul.f32 %v5649, %v5685
  %v5800 = vmul.f32 %v5650, %v5690
  %v5801 = vmul.f32 %v5651, %v5695
  %v5802 = vmul.f32 %v5652, %v5700
  %v5803 = vmul.f32 %v5653, %v5705
  %v5804 = vmul.f32 %v5654, %v5710
  %v5805 = vmul.f32 %v5655, %v5715
  %v5806 = vmul.f32 %v5656, %v5720
  %v5807 = vmul.f32 %v5657, %v5725
  %v5808 = vmul.f32 %v5658, %v5730
  %v5809 = vmul.f32 %v5659, %v5735
  %v5810 = vmul.f32 %v5660, %v5740
  %v5811 = vmul.f32 %v5661, %v5745
  %v5812 = vmul.f32 %v5662, %v5750
  %v5813 = vmul.f32 %v5663, %v5755
  %v5814 = vmul.f32 %v5664, %v5760
  %v5815 = vmul.f32 %v5665, %v5765
  %v5816 = vmul.f32 %v5666, %v5770
  %v5817 = vmul.f32 %v5667, %v5775
  %v5818 = vmul.f32 %v5668, %v5780
  %v5819 = vmul.f32 %v5669, %v5785
  %v5820 = vmul.f32 %v5670, %v5790
  %v5821 = vmul.f32 %v5671, %v5795
  %vm5822 = vcmask 261120
  %v5823 = vsel %vm5822, %v5797, 0.0
  %v5824 = vsel %vm5822, %v5798, 0.0
  %v5825 = vadd.f32 %v5823, %v5824
  %v5826 = vsel %vm5822, %v5799, 0.0
  %v5827 = vadd.f32 %v5825, %v5826
  %v5828 = vsel %vm5822, %v5800, 0.0
  %v5829 = vadd.f32 %v5827, %v5828
  %v5830 = vsel %vm5822, %v5801, 0.0
  %v5831 = vadd.f32 %v5829, %v5830
  %v5832 = vsel %vm5822, %v5802, 0.0
  %v5833 = vadd.f32 %v5831, %v5832
  %v5834 = vsel %vm5822, %v5803, 0.0
  %v5835 = vadd.f32 %v5833, %v5834
  %v5836 = vsel %vm5822, %v5804, 0.0
  %v5837 = vadd.f32 %v5835, %v5836
  %v5838 = vsel %vm5822, %v5805, 0.0
  %v5839 = vadd.f32 %v5837, %v5838
  %v5840 = vsel %vm5822, %v5806, 0.0
  %v5841 = vadd.f32 %v5839, %v5840
  %v5842 = vsel %vm5822, %v5807, 0.0
  %v5843 = vadd.f32 %v5841, %v5842
  %v5844 = vsel %vm5822, %v5808, 0.0
  %v5845 = vadd.f32 %v5843, %v5844
  %v5846 = vsel %vm5822, %v5809, 0.0
  %v5847 = vadd.f32 %v5845, %v5846
  %v5848 = vsel %vm5822, %v5810, 0.0
  %v5849 = vadd.f32 %v5847, %v5848
  %v5850 = vsel %vm5822, %v5811, 0.0
  %v5851 = vadd.f32 %v5849, %v5850
  %v5852 = vsel %vm5822, %v5812, 0.0
  %v5853 = vadd.f32 %v5851, %v5852
  %v5854 = vsel %vm5822, %v5813, 0.0
  %v5855 = vadd.f32 %v5853, %v5854
  %v5856 = vsel %vm5822, %v5814, 0.0
  %v5857 = vadd.f32 %v5855, %v5856
  %v5858 = vsel %vm5822, %v5815, 0.0
  %v5859 = vadd.f32 %v5857, %v5858
  %v5860 = vsel %vm5822, %v5816, 0.0
  %v5861 = vadd.f32 %v5859, %v5860
  %v5862 = vsel %vm5822, %v5817, 0.0
  %v5863 = vadd.f32 %v5861, %v5862
  %v5864 = vsel %vm5822, %v5818, 0.0
  %v5865 = vadd.f32 %v5863, %v5864
  %v5866 = vsel %vm5822, %v5819, 0.0
  %v5867 = vadd.f32 %v5865, %v5866
  %v5868 = vsel %vm5822, %v5820, 0.0
  %v5869 = vadd.f32 %v5867, %v5868
  %v5870 = vsel %vm5822, %v5821, 0.0
  %v5871 = vadd.f32 %v5869, %v5870
  %v5872 = vrot.slane %v5871, 4
  %v5873 = vadd.f32 %v5871, %v5872
  %v5874 = vrot.slane %v5873, 2
  %v5875 = vadd.f32 %v5873, %v5874
  %v5876 = vrot.slane %v5875, 1
  %v5877 = vadd.f32 %v5875, %v5876
  %v5878 = vmul.f32 %v5877, 0.0078125
  %v5879 = vsub.f32 %v5647, %v5878
  %v5880 = vsub.f32 %v5648, %v5878
  %v5881 = vsub.f32 %v5649, %v5878
  %v5882 = vsub.f32 %v5650, %v5878
  %v5883 = vsub.f32 %v5651, %v5878
  %v5884 = vsub.f32 %v5652, %v5878
  %v5885 = vsub.f32 %v5653, %v5878
  %v5886 = vsub.f32 %v5654, %v5878
  %v5887 = vsub.f32 %v5655, %v5878
  %v5888 = vsub.f32 %v5656, %v5878
  %v5889 = vsub.f32 %v5657, %v5878
  %v5890 = vsub.f32 %v5658, %v5878
  %v5891 = vsub.f32 %v5659, %v5878
  %v5892 = vsub.f32 %v5660, %v5878
  %v5893 = vsub.f32 %v5661, %v5878
  %v5894 = vsub.f32 %v5662, %v5878
  %v5895 = vsub.f32 %v5663, %v5878
  %v5896 = vsub.f32 %v5664, %v5878
  %v5897 = vsub.f32 %v5665, %v5878
  %v5898 = vsub.f32 %v5666, %v5878
  %v5899 = vsub.f32 %v5667, %v5878
  %v5900 = vsub.f32 %v5668, %v5878
  %v5901 = vsub.f32 %v5669, %v5878
  %v5902 = vsub.f32 %v5670, %v5878
  %v5903 = vsub.f32 %v5671, %v5878
  %v5904 = vmul.f32 %v5879, %v5675
  %v5905 = vmul.f32 %v5880, %v5680
  %v5906 = vmul.f32 %v5881, %v5685
  %v5907 = vmul.f32 %v5882, %v5690
  %v5908 = vmul.f32 %v5883, %v5695
  %v5909 = vmul.f32 %v5884, %v5700
  %v5910 = vmul.f32 %v5885, %v5705
  %v5911 = vmul.f32 %v5886, %v5710
  %v5912 = vmul.f32 %v5887, %v5715
  %v5913 = vmul.f32 %v5888, %v5720
  %v5914 = vmul.f32 %v5889, %v5725
  %v5915 = vmul.f32 %v5890, %v5730
  %v5916 = vmul.f32 %v5891, %v5735
  %v5917 = vmul.f32 %v5892, %v5740
  %v5918 = vmul.f32 %v5893, %v5745
  %v5919 = vmul.f32 %v5894, %v5750
  %v5920 = vmul.f32 %v5895, %v5755
  %v5921 = vmul.f32 %v5896, %v5760
  %v5922 = vmul.f32 %v5897, %v5765
  %v5923 = vmul.f32 %v5898, %v5770
  %v5924 = vmul.f32 %v5899, %v5775
  %v5925 = vmul.f32 %v5900, %v5780
  %v5926 = vmul.f32 %v5901, %v5785
  %v5927 = vmul.f32 %v5902, %v5790
  %v5928 = vmul.f32 %v5903, %v5795
  %v5929 = vmul.f32 %v5904, %v5904
  %v5930 = vmul.f32 %v5905, %v5905
  %v5931 = vmul.f32 %v5906, %v5906
  %v5932 = vmul.f32 %v5907, %v5907
  %v5933 = vmul.f32 %v5908, %v5908
  %v5934 = vmul.f32 %v5909, %v5909
  %v5935 = vmul.f32 %v5910, %v5910
  %v5936 = vmul.f32 %v5911, %v5911
  %v5937 = vmul.f32 %v5912, %v5912
  %v5938 = vmul.f32 %v5913, %v5913
  %v5939 = vmul.f32 %v5914, %v5914
  %v5940 = vmul.f32 %v5915, %v5915
  %v5941 = vmul.f32 %v5916, %v5916
  %v5942 = vmul.f32 %v5917, %v5917
  %v5943 = vmul.f32 %v5918, %v5918
  %v5944 = vmul.f32 %v5919, %v5919
  %v5945 = vmul.f32 %v5920, %v5920
  %v5946 = vmul.f32 %v5921, %v5921
  %v5947 = vmul.f32 %v5922, %v5922
  %v5948 = vmul.f32 %v5923, %v5923
  %v5949 = vmul.f32 %v5924, %v5924
  %v5950 = vmul.f32 %v5925, %v5925
  %v5951 = vmul.f32 %v5926, %v5926
  %v5952 = vmul.f32 %v5927, %v5927
  %v5953 = vmul.f32 %v5928, %v5928
  %v5954 = vsel %vm5822, %v5929, 0.0
  %v5955 = vsel %vm5822, %v5930, 0.0
  %v5956 = vadd.f32 %v5954, %v5955
  %v5957 = vsel %vm5822, %v5931, 0.0
  %v5958 = vadd.f32 %v5956, %v5957
  %v5959 = vsel %vm5822, %v5932, 0.0
  %v5960 = vadd.f32 %v5958, %v5959
  %v5961 = vsel %vm5822, %v5933, 0.0
  %v5962 = vadd.f32 %v5960, %v5961
  %v5963 = vsel %vm5822, %v5934, 0.0
  %v5964 = vadd.f32 %v5962, %v5963
  %v5965 = vsel %vm5822, %v5935, 0.0
  %v5966 = vadd.f32 %v5964, %v5965
  %v5967 = vsel %vm5822, %v5936, 0.0
  %v5968 = vadd.f32 %v5966, %v5967
  %v5969 = vsel %vm5822, %v5937, 0.0
  %v5970 = vadd.f32 %v5968, %v5969
  %v5971 = vsel %vm5822, %v5938, 0.0
  %v5972 = vadd.f32 %v5970, %v5971
  %v5973 = vsel %vm5822, %v5939, 0.0
  %v5974 = vadd.f32 %v5972, %v5973
  %v5975 = vsel %vm5822, %v5940, 0.0
  %v5976 = vadd.f32 %v5974, %v5975
  %v5977 = vsel %vm5822, %v5941, 0.0
  %v5978 = vadd.f32 %v5976, %v5977
  %v5979 = vsel %vm5822, %v5942, 0.0
  %v5980 = vadd.f32 %v5978, %v5979
  %v5981 = vsel %vm5822, %v5943, 0.0
  %v5982 = vadd.f32 %v5980, %v5981
  %v5983 = vsel %vm5822, %v5944, 0.0
  %v5984 = vadd.f32 %v5982, %v5983
  %v5985 = vsel %vm5822, %v5945, 0.0
  %v5986 = vadd.f32 %v5984, %v5985
  %v5987 = vsel %vm5822, %v5946, 0.0
  %v5988 = vadd.f32 %v5986, %v5987
  %v5989 = vsel %vm5822, %v5947, 0.0
  %v5990 = vadd.f32 %v5988, %v5989
  %v5991 = vsel %vm5822, %v5948, 0.0
  %v5992 = vadd.f32 %v5990, %v5991
  %v5993 = vsel %vm5822, %v5949, 0.0
  %v5994 = vadd.f32 %v5992, %v5993
  %v5995 = vsel %vm5822, %v5950, 0.0
  %v5996 = vadd.f32 %v5994, %v5995
  %v5997 = vsel %vm5822, %v5951, 0.0
  %v5998 = vadd.f32 %v5996, %v5997
  %v5999 = vsel %vm5822, %v5952, 0.0
  %v6000 = vadd.f32 %v5998, %v5999
  %v6001 = vsel %vm5822, %v5953, 0.0
  %v6002 = vadd.f32 %v6000, %v6001
  %v6003 = vrot.slane %v6002, 4
  %v6004 = vadd.f32 %v6002, %v6003
  %v6005 = vrot.slane %v6004, 2
  %v6006 = vadd.f32 %v6004, %v6005
  %v6007 = vrot.slane %v6006, 1
  %v6008 = vadd.f32 %v6006, %v6007
  %v6009 = vmul.f32 %v6008, 0.0078125
  %v6010 = vadd.f32 %v6009, 1e-05
  %v6011 = vrsqrt.pop %v6010
  %v6012 = vmul.f32 %v5879, %v6011
  %v6013 = vmul.f32 %v5880, %v6011
  %v6014 = vmul.f32 %v5881, %v6011
  %v6015 = vmul.f32 %v5882, %v6011
  %v6016 = vmul.f32 %v5883, %v6011
  %v6017 = vmul.f32 %v5884, %v6011
  %v6018 = vmul.f32 %v5885, %v6011
  %v6019 = vmul.f32 %v5886, %v6011
  %v6020 = vmul.f32 %v5887, %v6011
  %v6021 = vmul.f32 %v5888, %v6011
  %v6022 = vmul.f32 %v5889, %v6011
  %v6023 = vmul.f32 %v5890, %v6011
  %v6024 = vmul.f32 %v5891, %v6011
  %v6025 = vmul.f32 %v5892, %v6011
  %v6026 = vmul.f32 %v5893, %v6011
  %v6027 = vmul.f32 %v5894, %v6011
  %v6028 = vmul.f32 %v5895, %v6011
  %v6029 = vmul.f32 %v5896, %v6011
  %v6030 = vmul.f32 %v5897, %v6011
  %v6031 = vmul.f32 %v5898, %v6011
  %v6032 = vmul.f32 %v5899, %v6011
  %v6033 = vmul.f32 %v5900, %v6011
  %v6034 = vmul.f32 %v5901, %v6011
  %v6035 = vmul.f32 %v5902, %v6011
  %v6036 = vmul.f32 %v5903, %v6011
  %v6037 = vld [vmem:[%s6] sm:$0x1]
  %v6039 = vlaneseq
  %v6040 = vshrl.u32 %v6039, 7
  %v6041 = vsub.s32 0, %v6040
  %v6042 = vrot.slane %v6037, %v6041
  %v6044 = vmul.f32 %v6012, %v6042
  %v6045 = vmul.f32 %v6013, %v6042
  %v6046 = vmul.f32 %v6014, %v6042
  %v6047 = vmul.f32 %v6015, %v6042
  %v6048 = vmul.f32 %v6016, %v6042
  %v6049 = vmul.f32 %v6017, %v6042
  %v6050 = vmul.f32 %v6018, %v6042
  %v6051 = vmul.f32 %v6019, %v6042
  %v6052 = vmul.f32 %v6020, %v6042
  %v6053 = vmul.f32 %v6021, %v6042
  %v6054 = vmul.f32 %v6022, %v6042
  %v6055 = vmul.f32 %v6023, %v6042
  %v6056 = vmul.f32 %v6024, %v6042
  %v6057 = vmul.f32 %v6025, %v6042
  %v6058 = vmul.f32 %v6026, %v6042
  %v6059 = vmul.f32 %v6027, %v6042
  %v6060 = vmul.f32 %v6028, %v6042
  %v6061 = vmul.f32 %v6029, %v6042
  %v6062 = vmul.f32 %v6030, %v6042
  %v6063 = vmul.f32 %v6031, %v6042
  %v6064 = vmul.f32 %v6032, %v6042
  %v6065 = vmul.f32 %v6033, %v6042
  %v6066 = vmul.f32 %v6034, %v6042
  %v6067 = vmul.f32 %v6035, %v6042
  %v6068 = vmul.f32 %v6036, %v6042
  %v6069 = vld [vmem:[%s7] sm:$0x1]
  %v6071 = vlaneseq
  %v6072 = vshrl.u32 %v6071, 7
  %v6073 = vsub.s32 0, %v6072
  %v6074 = vrot.slane %v6069, %v6073
  %v6076 = vadd.f32 %v6044, %v6074
  %v6077 = vadd.f32 %v6045, %v6074
  %v6078 = vadd.f32 %v6046, %v6074
  %v6079 = vadd.f32 %v6047, %v6074
  %v6080 = vadd.f32 %v6048, %v6074
  %v6081 = vadd.f32 %v6049, %v6074
  %v6082 = vadd.f32 %v6050, %v6074
  %v6083 = vadd.f32 %v6051, %v6074
  %v6084 = vadd.f32 %v6052, %v6074
  %v6085 = vadd.f32 %v6053, %v6074
  %v6086 = vadd.f32 %v6054, %v6074
  %v6087 = vadd.f32 %v6055, %v6074
  %v6088 = vadd.f32 %v6056, %v6074
  %v6089 = vadd.f32 %v6057, %v6074
  %v6090 = vadd.f32 %v6058, %v6074
  %v6091 = vadd.f32 %v6059, %v6074
  %v6092 = vadd.f32 %v6060, %v6074
  %v6093 = vadd.f32 %v6061, %v6074
  %v6094 = vadd.f32 %v6062, %v6074
  %v6095 = vadd.f32 %v6063, %v6074
  %v6096 = vadd.f32 %v6064, %v6074
  %v6097 = vadd.f32 %v6065, %v6074
  %v6098 = vadd.f32 %v6066, %v6074
  %v6099 = vadd.f32 %v6067, %v6074
  %v6100 = vadd.f32 %v6068, %v6074
  %v6101 = vmax.f32 %v6076, 0.0
  %v6102 = vmax.f32 %v6077, 0.0
  %v6103 = vmax.f32 %v6078, 0.0
  %v6104 = vmax.f32 %v6079, 0.0
  %v6105 = vmax.f32 %v6080, 0.0
  %v6106 = vmax.f32 %v6081, 0.0
  %v6107 = vmax.f32 %v6082, 0.0
  %v6108 = vmax.f32 %v6083, 0.0
  %v6109 = vmax.f32 %v6084, 0.0
  %v6110 = vmax.f32 %v6085, 0.0
  %v6111 = vmax.f32 %v6086, 0.0
  %v6112 = vmax.f32 %v6087, 0.0
  %v6113 = vmax.f32 %v6088, 0.0
  %v6114 = vmax.f32 %v6089, 0.0
  %v6115 = vmax.f32 %v6090, 0.0
  %v6116 = vmax.f32 %v6091, 0.0
  %v6117 = vmax.f32 %v6092, 0.0
  %v6118 = vmax.f32 %v6093, 0.0
  %v6119 = vmax.f32 %v6094, 0.0
  %v6120 = vmax.f32 %v6095, 0.0
  %v6121 = vmax.f32 %v6096, 0.0
  %v6122 = vmax.f32 %v6097, 0.0
  %v6123 = vmax.f32 %v6098, 0.0
  %v6124 = vmax.f32 %v6099, 0.0
  %v6125 = vmax.f32 %v6100, 0.0
  %v6126 = vmul.f32 %v6101, %v5675
  %v6127 = vmul.f32 %v6102, %v5680
  %v6128 = vmul.f32 %v6103, %v5685
  %v6129 = vmul.f32 %v6104, %v5690
  %v6130 = vmul.f32 %v6105, %v5695
  %v6131 = vmul.f32 %v6106, %v5700
  %v6132 = vmul.f32 %v6107, %v5705
  %v6133 = vmul.f32 %v6108, %v5710
  %v6134 = vmul.f32 %v6109, %v5715
  %v6135 = vmul.f32 %v6110, %v5720
  %v6136 = vmul.f32 %v6111, %v5725
  %v6137 = vmul.f32 %v6112, %v5730
  %v6138 = vmul.f32 %v6113, %v5735
  %v6139 = vmul.f32 %v6114, %v5740
  %v6140 = vmul.f32 %v6115, %v5745
  %v6141 = vmul.f32 %v6116, %v5750
  %v6142 = vmul.f32 %v6117, %v5755
  %v6143 = vmul.f32 %v6118, %v5760
  %v6144 = vmul.f32 %v6119, %v5765
  %v6145 = vmul.f32 %v6120, %v5770
  %v6146 = vmul.f32 %v6121, %v5775
  %v6147 = vmul.f32 %v6122, %v5780
  %v6148 = vmul.f32 %v6123, %v5785
  %v6149 = vmul.f32 %v6124, %v5790
  %v6150 = vmul.f32 %v6125, %v5795
  %6151 = vst.msk [vmem:[%s8 + $0x50] sm:$0xff] %vm5822, 0.0
  %6152 = vst.msk [vmem:[%s8 + $0x58] sm:$0xff] %vm5822, 0.0
  %vm6153 = vcmask 257024
  %6154 = vst.msk [vmem:[%s8 + $0x60] sm:$0xf] %vm6153, 0.0
  %6155 = vst.msk [vmem:[%s8 + $0x12c] sm:$0xff] %vm5822, 0.0
  %6156 = vst.msk [vmem:[%s8 + $0x134] sm:$0xff] %vm5822, 0.0
  %6157 = vst.msk [vmem:[%s8 + $0x13c] sm:$0xf] %vm6153, 0.0
  %6158 = vst.msk [vmem:[%s8 + $0x64] sm:$0xff] %vm5822, %v6126
  %6159 = vst.msk [vmem:[%s8 + $0x6c] sm:$0xff] %vm5822, %v6127
  %6160 = vst.msk [vmem:[%s8 + $0x74] sm:$0xff] %vm5822, %v6128
  %6161 = vst.msk [vmem:[%s8 + $0x7c] sm:$0xff] %vm5822, %v6129
  %6162 = vst.msk [vmem:[%s8 + $0x84] sm:$0xff] %vm5822, %v6130
  %6163 = vst.msk [vmem:[%s8 + $0x8c] sm:$0xff] %vm5822, %v6131
  %6164 = vst.msk [vmem:[%s8 + $0x94] sm:$0xff] %vm5822, %v6132
  %6165 = vst.msk [vmem:[%s8 + $0x9c] sm:$0xff] %vm5822, %v6133
  %6166 = vst.msk [vmem:[%s8 + $0xa4] sm:$0xff] %vm5822, %v6134
  %6167 = vst.msk [vmem:[%s8 + $0xac] sm:$0xff] %vm5822, %v6135
  %6168 = vst.msk [vmem:[%s8 + $0xb4] sm:$0xff] %vm5822, %v6136
  %6169 = vst.msk [vmem:[%s8 + $0xbc] sm:$0xff] %vm5822, %v6137
  %6170 = vst.msk [vmem:[%s8 + $0xc4] sm:$0xff] %vm5822, %v6138
  %6171 = vst.msk [vmem:[%s8 + $0xcc] sm:$0xff] %vm5822, %v6139
  %6172 = vst.msk [vmem:[%s8 + $0xd4] sm:$0xff] %vm5822, %v6140
  %6173 = vst.msk [vmem:[%s8 + $0xdc] sm:$0xff] %vm5822, %v6141
  %6174 = vst.msk [vmem:[%s8 + $0xe4] sm:$0xff] %vm5822, %v6142
  %6175 = vst.msk [vmem:[%s8 + $0xec] sm:$0xff] %vm5822, %v6143
  %6176 = vst.msk [vmem:[%s8 + $0xf4] sm:$0xff] %vm5822, %v6144
  %6177 = vst.msk [vmem:[%s8 + $0xfc] sm:$0xff] %vm5822, %v6145
  %6178 = vst.msk [vmem:[%s8 + $0x104] sm:$0xff] %vm5822, %v6146
  %6179 = vst.msk [vmem:[%s8 + $0x10c] sm:$0xff] %vm5822, %v6147
  %6180 = vst.msk [vmem:[%s8 + $0x114] sm:$0xff] %vm5822, %v6148
  %6181 = vst.msk [vmem:[%s8 + $0x11c] sm:$0xff] %vm5822, %v6149
  %6182 = vst.msk [vmem:[%s8 + $0x124] sm:$0xff] %vm5822, %v6150
  // Predicated region
  $region34: #{tpu_custom_call.1} parent=0 // pred_check
    _
  $region35: #{tpu_custom_call.1} parent=0 // pred_check_branch
    %6184 = sbr.rel (0) target = $region37
  $region36: #{tpu_custom_call.1} parent=0 // pred_region
    _
  $region37: #{tpu_custom_call.1} parent=0 // pred_fallthru
    _
  // Predicated region
  $region38: #{tpu_custom_call.1} parent=0 // pred_check
    _
  $region39: #{tpu_custom_call.1} parent=0 // pred_check_branch
    %6186 = sbr.rel (0) target = $region41
  $region40: #{tpu_custom_call.1} parent=0 // pred_region
    _
  $region41: #{tpu_custom_call.1} parent=0 // pred_fallthru
    _

</llo_original>
